<compile_context>
chip_gen: v7x
topology: tpu7x:2x2x1
jax: 0.10.0
libtpu: 0.0.40
codegen_flags: <defaults>
</compile_context>

<pallas_src>
import jax
import jax.numpy as jnp
from jax.experimental import pallas as pl
from jax.experimental.pallas import tpu as pltpu

_EPS = 1e-6
# Tile presets (bf16): (tm,tk)+(tk,tn)+(tm,tn) double-buffered stays well under the
# v7x ~32 MiB scoped VMEM budget.  Bump on v5e/v6e (128 MiB physical VMEM).
_TM, _TN, _TK = 256, 256, 512
_TV = 512                 # vocab-chunk width for fused head + cross-entropy
_TQ, _TKV = 256, 256      # flash-attention q / kv tile lengths
_VMEM_LIMIT = 32 * 1024 * 1024


def _pick_tile(dim, pref):
    """Largest tile <= pref that divides dim (falls back to full dim)."""
    if dim <= pref:
        return dim
    t = pref
    while t > 8 and dim % t:
        t //= 2
    return t if dim % t == 0 else dim


def _cparams(sem):
    return pltpu.CompilerParams(dimension_semantics=sem, vmem_limit_bytes=_VMEM_LIMIT)


# ----------------------------------------------------------------------------- #
# Kernel factories
# ----------------------------------------------------------------------------- #
def _rms(x_f32, nw_f32):
    var = jnp.mean(x_f32 * x_f32, axis=-1, keepdims=True)
    return x_f32 * jax.lax.rsqrt(var + _EPS) * nw_f32


def _make_norm_matmul_kernel(has_bias):
    # out = rmsnorm(x) @ W (+ bias); grid (M//tm, N//tn), K (=E) kept whole.
    def kernel(*refs):
        x_ref, nw_ref, w_ref = refs[0], refs[1], refs[2]
        idx = 3
        b_ref = refs[idx] if has_bias else None
        idx += int(has_bias)
        o_ref = refs[idx]
        xn = _rms(x_ref[...].astype(jnp.float32), nw_ref[...]).astype(jnp.bfloat16)
        acc = jnp.dot(xn, w_ref[...], preferred_element_type=jnp.float32)
        if has_bias:
            acc = acc + b_ref[...].astype(jnp.float32)
        o_ref[...] = acc.astype(o_ref.dtype)
    return kernel


def _make_norm_swiglu_kernel():
    # h = silu(rmsnorm(x) @ Wg) * (rmsnorm(x) @ Wu); grid (M//tm, F//tn).
    def kernel(x_ref, nw_ref, wg_ref, wu_ref, o_ref):
        xn = _rms(x_ref[...].astype(jnp.float32), nw_ref[...]).astype(jnp.bfloat16)
        g = jnp.dot(xn, wg_ref[...], preferred_element_type=jnp.float32)
        u = jnp.dot(xn, wu_ref[...], preferred_element_type=jnp.float32)
        o_ref[...] = (jax.nn.silu(g) * u).astype(o_ref.dtype)
    return kernel


def _make_matmul_kernel(has_bias, has_res):
    # K-tiled matmul: grid (M//tm, N//tn, K//tk), f32 acc scratch, epilogue fuses
    # optional bias and residual add.
    def kernel(*refs):
        x_ref, w_ref = refs[0], refs[1]
        idx = 2
        b_ref = refs[idx] if has_bias else None
        idx += int(has_bias)
        r_ref = refs[idx] if has_res else None
        idx += int(has_res)
        o_ref, acc_ref = refs[idx], refs[idx + 1]

        k = pl.program_id(2)

        @pl.when(k == 0)
        def _():
            acc_ref[...] = jnp.zeros_like(acc_ref)

        acc_ref[...] += jnp.dot(x_ref[...], w_ref[...],
                                preferred_element_type=jnp.float32)

        @pl.when(k == pl.num_programs(2) - 1)
        def _():
            out = acc_ref[...]
            if has_bias:
                out = out + b_ref[...].astype(jnp.float32)
            if has_res:
                out = out + r_ref[...].astype(jnp.float32)
            o_ref[...] = out.astype(o_ref.dtype)
    return kernel


def _make_mtp_fuse_kernel(e_dim):
    # MTP input fusion: down_proj(cat(rms_input(emb), rms_h_prev(h_prev))) + bias
    # without materializing the (M, 2E) concat.
    def kernel(a_ref, b_ref, nwa_ref, nwb_ref, w_ref, bias_ref, o_ref):
        na = _rms(a_ref[...].astype(jnp.float32), nwa_ref[...]).astype(jnp.bfloat16)
        nb = _rms(b_ref[...].astype(jnp.float32), nwb_ref[...]).astype(jnp.bfloat16)
        w = w_ref[...]
        acc = jnp.dot(na, w[:e_dim, :], preferred_element_type=jnp.float32)
        acc = acc + jnp.dot(nb, w[e_dim:, :], preferred_element_type=jnp.float32)
        o_ref[...] = (acc + bias_ref[...].astype(jnp.float32)).astype(o_ref.dtype)
    return kernel


def _make_flash_attn_kernel(scale, tq, tk, half, use_roll):
    # Flash attention with in-kernel RoPE and causal mask; online softmax scratch.
    def kernel(q_ref, k_ref, v_ref, cq_ref, sq_ref, ck_ref, sk_ref,
               o_ref, m_sc, l_sc, acc_sc):
        ki = pl.program_id(2)
        nk = pl.num_programs(2)
        q_start = pl.program_id(1) * tq
        k_start = ki * tk

        @pl.when(ki == 0)
        def _():
            m_sc[...] = jnp.full_like(m_sc, -1e30)
            l_sc[...] = jnp.zeros_like(l_sc)
            acc_sc[...] = jnp.zeros_like(acc_sc)

        def rope(t, cos, sin_fold):
            # rot = [t2, t1]; sign is pre-folded into sin_fold (first half negated).
            if use_roll:
                rot = pltpu.roll(t, shift=half, axis=-1)       # XLU slot, lane-aligned Dh
            else:
                rot = jnp.concatenate([t[:, half:], t[:, :half]], axis=-1)
            return t * cos + rot * sin_fold

        # Skip kv tiles that are entirely in the future for this q tile.
        @pl.when(k_start <= q_start + tq - 1)
        def _():
            q = rope(q_ref[0].astype(jnp.float32), cq_ref[...], sq_ref[...])
            k = rope(k_ref[0].astype(jnp.float32), ck_ref[...], sk_ref[...])
            s = jax.lax.dot_general(
                q.astype(jnp.bfloat16), k.astype(jnp.bfloat16),
                (((1,), (1,)), ((), ())),
                preferred_element_type=jnp.float32) * scale          # (tq, tk)
            q_pos = q_start + jax.lax.broadcasted_iota(jnp.int32, s.shape, 0)
            k_pos = k_start + jax.lax.broadcasted_iota(jnp.int32, s.shape, 1)
            keep = q_pos >= k_pos
            s = jnp.where(keep, s, -1e30)                            # finite, no NaN rows
            m_prev = m_sc[...]
            m_new = jnp.maximum(m_prev, jnp.max(s, axis=-1, keepdims=True))
            alpha = jnp.exp(m_prev - m_new)
            p = jnp.where(keep, jnp.exp(s - m_new), 0.0)
            l_sc[...] = alpha * l_sc[...] + jnp.sum(p, axis=-1, keepdims=True)
            acc_sc[...] = alpha * acc_sc[...] + jnp.dot(
                p.astype(jnp.bfloat16), v_ref[0], preferred_element_type=jnp.float32)
            m_sc[...] = m_new

        @pl.when(ki == nk - 1)
        def _():
            o_ref[0] = (acc_sc[...] *
                        pl.reciprocal(l_sc[...], approx=True)).astype(o_ref.dtype)
    return kernel


def _make_head_ce_kernel(has_norm, tv):
    # Fused (optional final RMSNorm) + output head + cross-entropy NLL over vocab
    # chunks: logits never leave VMEM.
    def kernel(*refs):
        x_ref = refs[0]
        idx = 1
        nw_ref = refs[idx] if has_norm else None
        idx += int(has_norm)
        w_ref, lab_ref = refs[idx], refs[idx + 1]
        nll_ref = refs[idx + 2]
        m_sc, l_sc, p_sc = refs[idx + 3], refs[idx + 4], refs[idx + 5]

        j = pl.program_id(1)

        @pl.when(j == 0)
        def _():
            m_sc[...] = jnp.full_like(m_sc, -1e30)
            l_sc[...] = jnp.zeros_like(l_sc)
            p_sc[...] = jnp.zeros_like(p_sc)

        x = x_ref[...].astype(jnp.float32)
        if has_norm:
            x = _rms(x, nw_ref[...])
        logits = jnp.dot(x.astype(jnp.bfloat16), w_ref[...],
                         preferred_element_type=jnp.float32)          # (tm, tv)
        labels = lab_ref[...]                                          # (tm, 1)
        col = j * tv + jax.lax.broadcasted_iota(jnp.int32, logits.shape, 1)
        p_sc[...] += jnp.sum(jnp.where(col == labels, logits, 0.0),
                             axis=-1, keepdims=True)
        m_prev = m_sc[...]
        m_new = jnp.maximum(m_prev, jnp.max(logits, axis=-1, keepdims=True))
        l_sc[...] = (l_sc[...] * jnp.exp(m_prev - m_new) +
                     jnp.sum(jnp.exp(logits - m_new), axis=-1, keepdims=True))
        m_sc[...] = m_new

        @pl.when(j == pl.num_programs(1) - 1)
        def _():
            nll_ref[...] = (m_sc[...] + jnp.log(l_sc[...]) - p_sc[...]
                            ).astype(nll_ref.dtype)
    return kernel


# ----------------------------------------------------------------------------- #
# pallas_call wrappers
# ----------------------------------------------------------------------------- #
def norm_matmul(x, norm_w, w, bias=None):
    M, E = x.shape
    N = w.shape[1]
    tm, tn = _pick_tile(M, _TM), _pick_tile(N, _TN)
    grid = (M // tm, N // tn)
    in_specs = [pl.BlockSpec((tm, E), lambda i, j: (i, 0)),
                pl.BlockSpec((1, E), lambda i, j: (0, 0)),
                pl.BlockSpec((E, tn), lambda i, j: (0, j))]
    args = [x, norm_w, w]
    if bias is not None:
        in_specs.append(pl.BlockSpec((1, tn), lambda i, j: (0, j)))
        args.append(bias.reshape(1, N).astype(jnp.float32))
    ce = pl.CostEstimate(flops=2 * M * N * E, transcendentals=0,
                         bytes_accessed=int(x.size * 2 + w.size * 2 + M * N * 2))
    return pl.pallas_call(
        _make_norm_matmul_kernel(bias is not None),
        out_shape=jax.ShapeDtypeStruct((M, N), jnp.bfloat16),
        grid=grid, in_specs=in_specs,
        out_specs=pl.BlockSpec((tm, tn), lambda i, j: (i, j)),
        compiler_params=_cparams(("parallel", "parallel")),
        cost_estimate=ce,
    )(*args)


def norm_swiglu(x, norm_w, wg, wu):
    M, E = x.shape
    F = wg.shape[1]
    tm, tn = _pick_tile(M, _TM), _pick_tile(F, _TN)
    grid = (M // tm, F // tn)
    ce = pl.CostEstimate(flops=4 * M * F * E, transcendentals=M * F,
                         bytes_accessed=int(x.size * 2 + wg.size * 2 + wu.size * 2 + M * F * 2))
    return pl.pallas_call(
        _make_norm_swiglu_kernel(),
        out_shape=jax.ShapeDtypeStruct((M, F), jnp.bfloat16),
        grid=grid,
        in_specs=[pl.BlockSpec((tm, E), lambda i, j: (i, 0)),
                  pl.BlockSpec((1, E), lambda i, j: (0, 0)),
                  pl.BlockSpec((E, tn), lambda i, j: (0, j)),
                  pl.BlockSpec((E, tn), lambda i, j: (0, j))],
        out_specs=pl.BlockSpec((tm, tn), lambda i, j: (i, j)),
        compiler_params=_cparams(("parallel", "parallel")),
        cost_estimate=ce,
    )(x, norm_w, wg, wu)


def matmul(x, w, bias=None, residual=None, out_dtype=jnp.bfloat16):
    M, K = x.shape
    N = w.shape[1]
    tm, tn, tk = _pick_tile(M, _TM), _pick_tile(N, _TN), _pick_tile(K, _TK)
    grid = (M // tm, N // tn, K // tk)
    in_specs = [pl.BlockSpec((tm, tk), lambda i, j, k: (i, k)),
                pl.BlockSpec((tk, tn), lambda i, j, k: (k, j))]
    args = [x, w]
    if bias is not None:
        in_specs.append(pl.BlockSpec((1, tn), lambda i, j, k: (0, j)))
        args.append(bias.reshape(1, N).astype(jnp.float32))
    if residual is not None:
        in_specs.append(pl.BlockSpec((tm, tn), lambda i, j, k: (i, j)))
        args.append(residual)
    ce = pl.CostEstimate(flops=2 * M * N * K, transcendentals=0,
                         bytes_accessed=int(x.size * 2 + w.size * 2 + M * N * 2))
    return pl.pallas_call(
        _make_matmul_kernel(bias is not None, residual is not None),
        out_shape=jax.ShapeDtypeStruct((M, N), out_dtype),
        grid=grid, in_specs=in_specs,
        out_specs=pl.BlockSpec((tm, tn), lambda i, j, k: (i, j)),
        scratch_shapes=[pltpu.VMEM((tm, tn), jnp.float32)],
        compiler_params=_cparams(("parallel", "parallel", "arbitrary")),
        cost_estimate=ce,
    )(*args)


def mtp_fuse(a, b, nwa, nwb, w, bias):
    M, E = a.shape
    N = w.shape[1]
    tm, tn = _pick_tile(M, _TM), _pick_tile(N, _TN)
    grid = (M // tm, N // tn)
    ce = pl.CostEstimate(flops=4 * M * N * E, transcendentals=0,
                         bytes_accessed=int(a.size * 2 + b.size * 2 + w.size * 2 + M * N * 2))
    return pl.pallas_call(
        _make_mtp_fuse_kernel(E),
        out_shape=jax.ShapeDtypeStruct((M, N), jnp.bfloat16),
        grid=grid,
        in_specs=[pl.BlockSpec((tm, E), lambda i, j: (i, 0)),
                  pl.BlockSpec((tm, E), lambda i, j: (i, 0)),
                  pl.BlockSpec((1, E), lambda i, j: (0, 0)),
                  pl.BlockSpec((1, E), lambda i, j: (0, 0)),
                  pl.BlockSpec((2 * E, tn), lambda i, j: (0, j)),
                  pl.BlockSpec((1, tn), lambda i, j: (0, j))],
        out_specs=pl.BlockSpec((tm, tn), lambda i, j: (i, j)),
        compiler_params=_cparams(("parallel", "parallel")),
        cost_estimate=ce,
    )(a, b, nwa, nwb, w, bias.reshape(1, N).astype(jnp.float32))


def flash_attention(q, k, v, cos, sin_fold):
    BH, S, Dh = q.shape
    tq, tk = _pick_tile(S, _TQ), _pick_tile(S, _TKV)
    grid = (BH, S // tq, S // tk)
    kernel = _make_flash_attn_kernel(scale=Dh ** -0.5, tq=tq, tk=tk, half=Dh // 2,
                                     use_roll=(Dh % 128 == 0))
    ce = pl.CostEstimate(flops=4 * BH * S * S * Dh, transcendentals=BH * S * S,
                         bytes_accessed=int(4 * BH * S * Dh * 2))
    return pl.pallas_call(
        kernel,
        out_shape=jax.ShapeDtypeStruct((BH, S, Dh), jnp.bfloat16),
        grid=grid,
        in_specs=[pl.BlockSpec((1, tq, Dh), lambda b, i, j: (b, i, 0)),   # q
                  pl.BlockSpec((1, tk, Dh), lambda b, i, j: (b, j, 0)),   # k
                  pl.BlockSpec((1, tk, Dh), lambda b, i, j: (b, j, 0)),   # v
                  pl.BlockSpec((tq, Dh), lambda b, i, j: (i, 0)),         # cos (q rows)
                  pl.BlockSpec((tq, Dh), lambda b, i, j: (i, 0)),         # sin_fold (q rows)
                  pl.BlockSpec((tk, Dh), lambda b, i, j: (j, 0)),         # cos (k rows)
                  pl.BlockSpec((tk, Dh), lambda b, i, j: (j, 0))],        # sin_fold (k rows)
        out_specs=pl.BlockSpec((1, tq, Dh), lambda b, i, j: (b, i, 0)),
        scratch_shapes=[pltpu.VMEM((tq, 1), jnp.float32),
                        pltpu.VMEM((tq, 1), jnp.float32),
                        pltpu.VMEM((tq, Dh), jnp.float32)],
        compiler_params=_cparams(("parallel", "parallel", "arbitrary")),
        cost_estimate=ce,
    )(q, k, v, cos, sin_fold, cos, sin_fold)


def head_ce_nll(x, out_w, labels, norm_w=None):
    """Per-token NLL of the (optionally final-normed) output head, vocab-chunked."""
    M, E = x.shape
    V = out_w.shape[1]
    tm, tv = _pick_tile(M, _TM), _pick_tile(V, _TV)
    grid = (M // tm, V // tv)
    has_norm = norm_w is not None
    in_specs = [pl.BlockSpec((tm, E), lambda i, j: (i, 0))]
    args = [x]
    if has_norm:
        in_specs.append(pl.BlockSpec((1, E), lambda i, j: (0, 0)))
        args.append(norm_w)
    in_specs += [pl.BlockSpec((E, tv), lambda i, j: (0, j)),
                 pl.BlockSpec((tm, 1), lambda i, j: (i, 0))]
    args += [out_w, labels.reshape(M, 1).astype(jnp.int32)]
    ce = pl.CostEstimate(flops=2 * M * V * E, transcendentals=M * V,
                         bytes_accessed=int(x.size * 2 + out_w.size * 2 + M * 8))
    nll = pl.pallas_call(
        _make_head_ce_kernel(has_norm, tv),
        out_shape=jax.ShapeDtypeStruct((M, 1), jnp.float32),
        grid=grid, in_specs=in_specs,
        out_specs=pl.BlockSpec((tm, 1), lambda i, j: (i, 0)),
        scratch_shapes=[pltpu.VMEM((tm, 1), jnp.float32)] * 3,
        compiler_params=_cparams(("parallel", "arbitrary")),
        cost_estimate=ce,
    )(*args)
    # TODO(synk): global_loss may add a MoE load-balancing aux term; only token CE here.
    return nll


# ----------------------------------------------------------------------------- #
# Model glue (embedding gather, head reshapes, layer loop stay in XLA)
# ----------------------------------------------------------------------------- #
def transformer_block(x2, p, cos, sin_fold, cfg, B, S):
    M, E = x2.shape
    H = cfg['n_heads']
    Dh = E // H
    # fused pre-norm + QKV projection (single (E, 3E) matmul)
    qkv = norm_matmul(x2, p['attn_norm'], p['wqkv'])              # (M, 3E) bf16
    q, k, v = qkv[:, :E], qkv[:, E:2 * E], qkv[:, 2 * E:]

    def heads(t):
        return t.reshape(B, S, H, Dh).transpose(0, 2, 1, 3).reshape(B * H, S, Dh)

    attn = flash_attention(heads(q), heads(k), heads(v), cos, sin_fold)
    attn2 = attn.reshape(B, H, S, Dh).transpose(0, 2, 1, 3).reshape(M, E)
    x2 = matmul(attn2, p['wo'], residual=x2)                      # residual fused
    h = norm_swiglu(x2, p['ffn_norm'], p['wg'], p['wu'])          # fused norm+gate+up
    x2 = matmul(h, p['wd'], residual=x2)                          # residual fused
    return x2


def main_model_forward(params, cfg, tokens, labels, cos, sin_fold):
    B, S = tokens.shape
    E = cfg['emb_dim']
    x = jnp.take(params['emb'], tokens, axis=0).reshape(B * S, E)   # embedding gather
    for p in params['blocks']:
        x = transformer_block(x, p, cos, sin_fold, cfg, B, S)
    h_curr = x
    # fused final_ln + output head + cross-entropy (no (B*S, V) logits in HBM)
    nll = head_ce_nll(x, params['out_w'], labels.reshape(-1), norm_w=params['final_ln'])
    return jnp.mean(nll), h_curr


def mtp_forward(mp, params, cfg, tokens, labels, h_prev, cos, sin_fold):
    B, S = tokens.shape
    E = cfg['emb_dim']
    x = jnp.take(params['emb'], tokens, axis=0).reshape(B * S, E)   # shared embedding
    # fused rms_input / rms_h_prev / concat / down_proj
    x2 = mtp_fuse(x, h_prev, mp['rms_input'], mp['rms_h_prev'], mp['down_w'], mp['down_b'])
    h_curr = transformer_block(x2, mp['block'], cos, sin_fold, cfg, B, S)
    # reference applies the shared head to the down_proj output (no final norm)
    nll = head_ce_nll(x2, params['out_w'], labels.reshape(-1), norm_w=None)
    return jnp.mean(nll), h_curr


def deepseekv3_forward(params, cfg, x, y, shifted_x, shifted_y, cos, sin_fold, training=True):
    main_loss, h_prev = main_model_forward(params, cfg, x, y, cos, sin_fold)
    if not training:
        return main_loss
    mtp_losses = 0.0
    for k, mp in enumerate(params['mtp']):
        mtp_loss, h_curr = mtp_forward(mp, params, cfg, shifted_x[k], shifted_y[k],
                                       h_prev, cos, sin_fold)
        mtp_losses = mtp_losses + mtp_loss
        h_prev = h_curr
    return main_loss + cfg['mtp_loss_coeff'] / cfg['mtp_depth'] * mtp_losses


# ----------------------------------------------------------------------------- #
# Deterministic parameters / buffers
# ----------------------------------------------------------------------------- #
def init_params(cfg, key):
    V, E, F = cfg['vocab_size'], cfg['emb_dim'], cfg['ffn_hidden']
    keys = iter(jax.random.split(key, 256))

    def nrm(shape):
        return (jax.random.normal(next(keys), shape, jnp.float32) * 0.02).astype(jnp.bfloat16)

    def block_params():
        return dict(
            attn_norm=jnp.ones((1, E), jnp.float32),
            wqkv=nrm((E, 3 * E)),
            wo=nrm((E, E)),
            ffn_norm=jnp.ones((1, E), jnp.float32),
            wg=nrm((E, F)), wu=nrm((E, F)), wd=nrm((F, E)),
        )

    return dict(
        emb=nrm((V, E)),
        blocks=[block_params() for _ in range(cfg['n_layers'])],
        final_ln=jnp.ones((1, E), jnp.float32),
        out_w=nrm((E, V)),
        mtp=[dict(
            rms_input=jnp.ones((1, E), jnp.float32),
            rms_h_prev=jnp.ones((1, E), jnp.float32),
            down_w=nrm((2 * E, E)),
            down_b=jnp.zeros((E,), jnp.float32),
            block=block_params(),
        ) for _ in range(cfg['mtp_depth'])],
    )


def get_buffers(ctx_len, rope_base, num_freq):
    inv_freq = 1.0 / (rope_base ** (jnp.arange(num_freq, dtype=jnp.float32) / num_freq))
    pos = jnp.arange(ctx_len, dtype=jnp.float32)
    angles = pos[:, None] * inv_freq[None, :]
    angles = jnp.concatenate([angles, angles], axis=-1)              # (S, Dh)
    cos, sin = jnp.cos(angles), jnp.sin(angles)
    mask = jnp.triu(jnp.ones((ctx_len, ctx_len), jnp.bool_), k=1)    # kept for API parity
    return mask, cos, sin


def fold_rope_sign(sin):
    """Fold the rotate_half sign into sin: rope(t) = t*cos + roll(t, half)*sin_fold."""
    half = sin.shape[-1] // 2
    return jnp.concatenate([-sin[:, :half], sin[:, half:]], axis=-1)


# ----------------------------------------------------------------------------- #
if __name__ == "__main__":
    cfg = dict(
        vocab_size=128, emb_dim=32, n_heads=4, n_layers=2, ffn_hidden=64,
        context_length=8, rope_base=10000.0, mtp_depth=2, mtp_loss_coeff=0.1,
    )
    B, S = 2, cfg['context_length']

    key = jax.random.PRNGKey(0)
    pk, xk, yk, sxk, syk = jax.random.split(key, 5)
    params = init_params(cfg, pk)
    Dh = cfg['emb_dim'] // cfg['n_heads']
    # mask returned for parity with GlobalBuffers; the causal mask is generated in-kernel.
    mask, cos, sin = get_buffers(cfg['context_length'], cfg['rope_base'], Dh // 2)
    sin_fold = fold_rope_sign(sin)

    x = jax.random.randint(xk, (B, S), 0, cfg['vocab_size'], dtype=jnp.int32)
    y = jax.random.randint(yk, (B, S), 0, cfg['vocab_size'], dtype=jnp.int32)
    shifted_x = jax.random.randint(sxk, (cfg['mtp_depth'], B, S), 0, cfg['vocab_size'], dtype=jnp.int32)
    shifted_y = jax.random.randint(syk, (cfg['mtp_depth'], B, S), 0, cfg['vocab_size'], dtype=jnp.int32)

    loss_fn = jax.jit(lambda p, a, b, c, d: deepseekv3_forward(
        p, cfg, a, b, c, d, cos, sin_fold, training=True))
    total_loss = loss_fn(params, x, y, shifted_x, shifted_y)
    jax.block_until_ready(total_loss)
    assert jnp.isfinite(total_loss)
    print("KERNEL_OK")
</pallas_src>

<mosaic_0001>
module attributes {stable_mosaic.version = 11 : i64} {
  func.func @kernel(%arg0: i32, %arg1: i32, %arg2: memref<16x32xbf16, #tpu.memory_space<vmem>>, %arg3: memref<1x32xf32, #tpu.memory_space<vmem>>, %arg4: memref<32x96xbf16, #tpu.memory_space<vmem>>, %arg5: memref<16x96xbf16, #tpu.memory_space<vmem>>) attributes {dimension_semantics = [#tpu.dimension_semantics<parallel>, #tpu.dimension_semantics<parallel>], iteration_bounds = array<i64: 1, 1>, scalar_prefetch = 0 : i64, scratch_operands = 0 : i64, tpu.core_type = #tpu.core_type<tc>, window_params = [{transform_indices = @transform_0, window_bounds = array<i64: 16, 32>}, {pipeline_mode = #tpu.pipeline_mode<synchronous>, transform_indices = @transform_1, window_bounds = array<i64: 1, 32>}, {transform_indices = @transform_2, window_bounds = array<i64: 32, 96>}, {transform_indices = @transform_3, window_bounds = array<i64: 16, 96>}]} {
    %c0 = arith.constant 0 : index
    %c0_0 = arith.constant 0 : index
    %0 = vector.load %arg2[%c0, %c0_0] : memref<16x32xbf16, #tpu.memory_space<vmem>>, vector<16x32xbf16>
    %1 = arith.extf %0 : vector<16x32xbf16> to vector<16x32xf32>
    %c0_1 = arith.constant 0 : index
    %c0_2 = arith.constant 0 : index
    %2 = vector.load %arg3[%c0_1, %c0_2] : memref<1x32xf32, #tpu.memory_space<vmem>>, vector<1x32xf32>
    %3 = arith.mulf %1, %1 : vector<16x32xf32>
    %cst = arith.constant dense<0.000000e+00> : vector<16xf32>
    %4 = vector.multi_reduction <add>, %3, %cst [1] : vector<16x32xf32> to vector<16xf32>
    %5 = vector.shape_cast %4 : vector<16xf32> to vector<16x1xf32>
    %cst_3 = arith.constant 3.200000e+01 : f32
    %6 = vector.broadcast %cst_3 : f32 to vector<16x1xf32>
    %7 = arith.divf %5, %6 : vector<16x1xf32>
    %cst_4 = arith.constant 9.99999997E-7 : f32
    %8 = vector.broadcast %cst_4 : f32 to vector<16x1xf32>
    %9 = arith.addf %7, %8 : vector<16x1xf32>
    %10 = math.rsqrt %9 : vector<16x1xf32>
    %11 = vector.broadcast %10 : vector<16x1xf32> to vector<16x32xf32>
    %12 = arith.mulf %1, %11 : vector<16x32xf32>
    %13 = vector.broadcast %2 : vector<1x32xf32> to vector<16x32xf32>
    %14 = arith.mulf %12, %13 : vector<16x32xf32>
    %15 = arith.truncf %14 : vector<16x32xf32> to vector<16x32xbf16>
    %c0_5 = arith.constant 0 : index
    %c0_6 = arith.constant 0 : index
    %16 = vector.load %arg4[%c0_5, %c0_6] : memref<32x96xbf16, #tpu.memory_space<vmem>>, vector<32x96xbf16>
    %cst_7 = arith.constant dense<0.000000e+00> : vector<16x96xf32>
    %17 = tpu.matmul %15, %16, %cst_7 {dimension_numbers = #tpu.dot_dimension_numbers<[1], [0], [0], [1], [0, 0, 1, 1], [], []>} : vector<16x32xbf16>, vector<32x96xbf16>, vector<16x96xf32> -> vector<16x96xf32>
    %18 = arith.truncf %17 : vector<16x96xf32> to vector<16x96xbf16>
    %c0_8 = arith.constant 0 : index
    %c0_9 = arith.constant 0 : index
    %19 = vector.load %arg5[%c0_8, %c0_9] : memref<16x96xbf16, #tpu.memory_space<vmem>>, vector<16x96xbf16>
    tpu.vector_store %arg5[%c0_8, %c0_9], %18 {strides = array<i32>} : memref<16x96xbf16, #tpu.memory_space<vmem>>, vector<16x96xbf16>,
    return
  }
  func.func @transform_0(%arg0: i32, %arg1: i32) -> (i32, i32) {
    %c0_i32 = arith.constant 0 : i32
    %c0_i32_0 = arith.constant 0 : i32
    return %arg0, %c0_i32 : i32, i32
  }
  func.func @transform_1(%arg0: i32, %arg1: i32) -> (i32, i32) {
    %c0_i32 = arith.constant 0 : i32
    %c0_i32_0 = arith.constant 0 : i32
    %c0_i32_1 = arith.constant 0 : i32
    return %c0_i32, %c0_i32_0 : i32, i32
  }
  func.func @transform_2(%arg0: i32, %arg1: i32) -> (i32, i32) {
    %c0_i32 = arith.constant 0 : i32
    %c0_i32_0 = arith.constant 0 : i32
    return %c0_i32, %arg1 : i32, i32
  }
  func.func @transform_3(%arg0: i32, %arg1: i32) -> (i32, i32) {
    %c0_i32 = arith.constant 0 : i32
    return %arg0, %arg1 : i32, i32
  }
}

module attributes {stable_mosaic.version = 11 : i64} {
  func.func @kernel(%arg0: i32, %arg1: i32, %arg2: i32, %arg3: memref<1x8x8xbf16, #tpu.memory_space<vmem>>, %arg4: memref<1x8x8xbf16, #tpu.memory_space<vmem>>, %arg5: memref<1x8x8xbf16, #tpu.memory_space<vmem>>, %arg6: memref<8x8xf32, #tpu.memory_space<vmem>>, %arg7: memref<8x8xf32, #tpu.memory_space<vmem>>, %arg8: memref<8x8xf32, #tpu.memory_space<vmem>>, %arg9: memref<8x8xf32, #tpu.memory_space<vmem>>, %arg10: memref<1x8x8xbf16, #tpu.memory_space<vmem>>, %arg11: memref<8x1xf32, #tpu.memory_space<vmem>>, %arg12: memref<8x1xf32, #tpu.memory_space<vmem>>, %arg13: memref<8x8xf32, #tpu.memory_space<vmem>>) attributes {dimension_semantics = [#tpu.dimension_semantics<parallel>, #tpu.dimension_semantics<parallel>, #tpu.dimension_semantics<arbitrary>], iteration_bounds = array<i64: 8, 1, 1>, scalar_prefetch = 0 : i64, scratch_operands = 3 : i64, tpu.core_type = #tpu.core_type<tc>, window_params = [{transform_indices = @transform_0, window_bounds = array<i64: 1, 8, 8>}, {transform_indices = @transform_1, window_bounds = array<i64: 1, 8, 8>}, {transform_indices = @transform_2, window_bounds = array<i64: 1, 8, 8>}, {transform_indices = @transform_3, window_bounds = array<i64: 8, 8>}, {transform_indices = @transform_4, window_bounds = array<i64: 8, 8>}, {transform_indices = @transform_5, window_bounds = array<i64: 8, 8>}, {transform_indices = @transform_6, window_bounds = array<i64: 8, 8>}, {transform_indices = @transform_7, window_bounds = array<i64: 1, 8, 8>}]} {
    %c8_i32 = arith.constant 8 : i32
    %0 = arith.muli %arg1, %c8_i32 : i32
    %c8_i32_0 = arith.constant 8 : i32
    %1 = arith.muli %arg2, %c8_i32_0 : i32
    %c0_i32 = arith.constant 0 : i32
    %2 = arith.cmpi eq, %arg2, %c0_i32 : i32
    %3 = arith.extui %2 : i1 to i32
    %c0_i32_1 = arith.constant 0 : i32
    %4 = arith.cmpi ne, %3, %c0_i32_1 : i32
    scf.if %4 {
      %cst = arith.constant -1.000000e+30 : f32
      %13 = vector.broadcast %cst : f32 to vector<8x1xf32>
      %c0 = arith.constant 0 : index
      %c0_6 = arith.constant 0 : index
      %14 = vector.load %arg11[%c0, %c0_6] : memref<8x1xf32, #tpu.memory_space<vmem>>, vector<8x1xf32>
      tpu.vector_store %arg11[%c0, %c0_6], %13 {strides = array<i32>} : memref<8x1xf32, #tpu.memory_space<vmem>>, vector<8x1xf32>,
      %cst_7 = arith.constant 0.000000e+00 : f32
      %15 = vector.broadcast %cst_7 : f32 to vector<8x1xf32>
      %c0_8 = arith.constant 0 : index
      %c0_9 = arith.constant 0 : index
      %16 = vector.load %arg12[%c0_8, %c0_9] : memref<8x1xf32, #tpu.memory_space<vmem>>, vector<8x1xf32>
      tpu.vector_store %arg12[%c0_8, %c0_9], %15 {strides = array<i32>} : memref<8x1xf32, #tpu.memory_space<vmem>>, vector<8x1xf32>,
      %cst_10 = arith.constant 0.000000e+00 : f32
      %17 = vector.broadcast %cst_10 : f32 to vector<8x8xf32>
      %c0_11 = arith.constant 0 : index
      %c0_12 = arith.constant 0 : index
      %18 = vector.load %arg13[%c0_11, %c0_12] : memref<8x8xf32, #tpu.memory_space<vmem>>, vector<8x8xf32>
      tpu.vector_store %arg13[%c0_11, %c0_12], %17 {strides = array<i32>} : memref<8x8xf32, #tpu.memory_space<vmem>>, vector<8x8xf32>,
    } else {
    }
    %c8_i32_2 = arith.constant 8 : i32
    %5 = arith.addi %0, %c8_i32_2 : i32
    %c1_i32 = arith.constant 1 : i32
    %6 = arith.subi %5, %c1_i32 : i32
    %7 = arith.cmpi sle, %1, %6 : i32
    %8 = arith.extui %7 : i1 to i32
    %c0_i32_3 = arith.constant 0 : i32
    %9 = arith.cmpi ne, %8, %c0_i32_3 : i32
    scf.if %9 {
      %c0 = arith.constant 0 : index
      %c0_6 = arith.constant 0 : index
      %c0_7 = arith.constant 0 : index
      %13 = vector.load %arg3[%c0, %c0_6, %c0_7] : memref<1x8x8xbf16, #tpu.memory_space<vmem>>, vector<1x8x8xbf16>
      %14 = vector.shape_cast %13 : vector<1x8x8xbf16> to vector<8x8xbf16>
      %15 = arith.extf %14 : vector<8x8xbf16> to vector<8x8xf32>
      %c0_8 = arith.constant 0 : index
      %c0_9 = arith.constant 0 : index
      %16 = vector.load %arg6[%c0_8, %c0_9] : memref<8x8xf32, #tpu.memory_space<vmem>>, vector<8x8xf32>
      %c0_10 = arith.constant 0 : index
      %c0_11 = arith.constant 0 : index
      %17 = vector.load %arg7[%c0_10, %c0_11] : memref<8x8xf32, #tpu.memory_space<vmem>>, vector<8x8xf32>
      %18 = vector.extract_strided_slice %15 {offsets = [0, 4], sizes = [8, 4], strides = [1, 1]} : vector<8x8xf32> to vector<8x4xf32>
      %19 = vector.extract_strided_slice %15 {offsets = [0, 0], sizes = [8, 4], strides = [1, 1]} : vector<8x8xf32> to vector<8x4xf32>
      %20 = tpu.concatenate %18, %19 in 1 : vector<8x4xf32>, vector<8x4xf32> -> vector<8x8xf32>
      %21 = arith.mulf %15, %16 : vector<8x8xf32>
      %22 = arith.mulf %20, %17 : vector<8x8xf32>
      %23 = arith.addf %21, %22 : vector<8x8xf32>
      %c0_12 = arith.constant 0 : index
      %c0_13 = arith.constant 0 : index
      %c0_14 = arith.constant 0 : index
      %24 = vector.load %arg4[%c0_12, %c0_13, %c0_14] : memref<1x8x8xbf16, #tpu.memory_space<vmem>>, vector<1x8x8xbf16>
      %25 = vector.shape_cast %24 : vector<1x8x8xbf16> to vector<8x8xbf16>
      %26 = arith.extf %25 : vector<8x8xbf16> to vector<8x8xf32>
      %c0_15 = arith.constant 0 : index
      %c0_16 = arith.constant 0 : index
      %27 = vector.load %arg8[%c0_15, %c0_16] : memref<8x8xf32, #tpu.memory_space<vmem>>, vector<8x8xf32>
      %c0_17 = arith.constant 0 : index
      %c0_18 = arith.constant 0 : index
      %28 = vector.load %arg9[%c0_17, %c0_18] : memref<8x8xf32, #tpu.memory_space<vmem>>, vector<8x8xf32>
      %29 = vector.extract_strided_slice %26 {offsets = [0, 4], sizes = [8, 4], strides = [1, 1]} : vector<8x8xf32> to vector<8x4xf32>
      %30 = vector.extract_strided_slice %26 {offsets = [0, 0], sizes = [8, 4], strides = [1, 1]} : vector<8x8xf32> to vector<8x4xf32>
      %31 = tpu.concatenate %29, %30 in 1 : vector<8x4xf32>, vector<8x4xf32> -> vector<8x8xf32>
      %32 = arith.mulf %26, %27 : vector<8x8xf32>
      %33 = arith.mulf %31, %28 : vector<8x8xf32>
      %34 = arith.addf %32, %33 : vector<8x8xf32>
      %35 = arith.truncf %23 : vector<8x8xf32> to vector<8x8xbf16>
      %36 = arith.truncf %34 : vector<8x8xf32> to vector<8x8xbf16>
      %cst = arith.constant dense<0.000000e+00> : vector<8x8xf32>
      %37 = tpu.matmul %35, %36, %cst {dimension_numbers = #tpu.dot_dimension_numbers<[1], [1], [0], [0], [0, 0, 1, 0], [], []>} : vector<8x8xbf16>, vector<8x8xbf16>, vector<8x8xf32> -> vector<8x8xf32>
      %cst_19 = arith.constant 0.353553385 : f32
      %38 = vector.broadcast %cst_19 : f32 to vector<8x8xf32>
      %39 = arith.mulf %37, %38 : vector<8x8xf32>
      %40 = tpu.iota {dimensions = array<i32: 0>} : vector<8x8xi32>
      %41 = vector.broadcast %0 : i32 to vector<8x8xi32>
      %42 = arith.addi %41, %40 : vector<8x8xi32>
      %43 = tpu.iota {dimensions = array<i32: 1>} : vector<8x8xi32>
      %44 = vector.broadcast %1 : i32 to vector<8x8xi32>
      %45 = arith.addi %44, %43 : vector<8x8xi32>
      %46 = arith.cmpi sge, %42, %45 : vector<8x8xi32>
      %cst_20 = arith.constant -1.000000e+30 : f32
      %47 = vector.broadcast %cst_20 : f32 to vector<8x8xf32>
      %48 = arith.select %46, %39, %47 : vector<8x8xi1>, vector<8x8xf32>
      %c0_21 = arith.constant 0 : index
      %c0_22 = arith.constant 0 : index
      %49 = vector.load %arg11[%c0_21, %c0_22] : memref<8x1xf32, #tpu.memory_space<vmem>>, vector<8x1xf32>
      %cst_23 = arith.constant dense<0xFF800000> : vector<8xf32>
      %50 = vector.multi_reduction <maximumf>, %48, %cst_23 [1] : vector<8x8xf32> to vector<8xf32>
      %51 = vector.shape_cast %50 : vector<8xf32> to vector<8x1xf32>
      %52 = arith.maximumf %49, %51 : vector<8x1xf32>
      %53 = arith.subf %49, %52 : vector<8x1xf32>
      %54 = math.exp %53 : vector<8x1xf32>
      %55 = vector.broadcast %52 : vector<8x1xf32> to vector<8x8xf32>
      %56 = arith.subf %48, %55 : vector<8x8xf32>
      %57 = math.exp %56 : vector<8x8xf32>
      %cst_24 = arith.constant 0.000000e+00 : f32
      %58 = vector.broadcast %cst_24 : f32 to vector<8x8xf32>
      %59 = arith.select %46, %57, %58 : vector<8x8xi1>, vector<8x8xf32>
      %c0_25 = arith.constant 0 : index
      %c0_26 = arith.constant 0 : index
      %60 = vector.load %arg12[%c0_25, %c0_26] : memref<8x1xf32, #tpu.memory_space<vmem>>, vector<8x1xf32>
      %61 = arith.mulf %54, %60 : vector<8x1xf32>
      %cst_27 = arith.constant dense<0.000000e+00> : vector<8xf32>
      %62 = vector.multi_reduction <add>, %59, %cst_27 [1] : vector<8x8xf32> to vector<8xf32>
      %63 = vector.shape_cast %62 : vector<8xf32> to vector<8x1xf32>
      %64 = arith.addf %61, %63 : vector<8x1xf32>
      %c0_28 = arith.constant 0 : index
      %c0_29 = arith.constant 0 : index
      %65 = vector.load %arg12[%c0_28, %c0_29] : memref<8x1xf32, #tpu.memory_space<vmem>>, vector<8x1xf32>
      tpu.vector_store %arg12[%c0_28, %c0_29], %64 {strides = array<i32>} : memref<8x1xf32, #tpu.memory_space<vmem>>, vector<8x1xf32>,
      %c0_30 = arith.constant 0 : index
      %c0_31 = arith.constant 0 : index
      %66 = vector.load %arg13[%c0_30, %c0_31] : memref<8x8xf32, #tpu.memory_space<vmem>>, vector<8x8xf32>
      %67 = vector.broadcast %54 : vector<8x1xf32> to vector<8x8xf32>
      %68 = arith.mulf %67, %66 : vector<8x8xf32>
      %69 = arith.truncf %59 : vector<8x8xf32> to vector<8x8xbf16>
      %c0_32 = arith.constant 0 : index
      %c0_33 = arith.constant 0 : index
      %c0_34 = arith.constant 0 : index
      %70 = vector.load %arg5[%c0_32, %c0_33, %c0_34] : memref<1x8x8xbf16, #tpu.memory_space<vmem>>, vector<1x8x8xbf16>
      %71 = vector.shape_cast %70 : vector<1x8x8xbf16> to vector<8x8xbf16>
      %cst_35 = arith.constant dense<0.000000e+00> : vector<8x8xf32>
      %72 = tpu.matmul %69, %71, %cst_35 {dimension_numbers = #tpu.dot_dimension_numbers<[1], [0], [0], [1], [0, 0, 1, 1], [], []>} : vector<8x8xbf16>, vector<8x8xbf16>, vector<8x8xf32> -> vector<8x8xf32>
      %73 = arith.addf %68, %72 : vector<8x8xf32>
      %c0_36 = arith.constant 0 : index
      %c0_37 = arith.constant 0 : index
      %74 = vector.load %arg13[%c0_36, %c0_37] : memref<8x8xf32, #tpu.memory_space<vmem>>, vector<8x8xf32>
      tpu.vector_store %arg13[%c0_36, %c0_37], %73 {strides = array<i32>} : memref<8x8xf32, #tpu.memory_space<vmem>>, vector<8x8xf32>,
      %c0_38 = arith.constant 0 : index
      %c0_39 = arith.constant 0 : index
      %75 = vector.load %arg11[%c0_38, %c0_39] : memref<8x1xf32, #tpu.memory_space<vmem>>, vector<8x1xf32>
      tpu.vector_store %arg11[%c0_38, %c0_39], %52 {strides = array<i32>} : memref<8x1xf32, #tpu.memory_space<vmem>>, vector<8x1xf32>,
    } else {
    }
    %c0_i32_4 = arith.constant 0 : i32
    %10 = arith.cmpi eq, %arg2, %c0_i32_4 : i32
    %11 = arith.extui %10 : i1 to i32
    %c0_i32_5 = arith.constant 0 : i32
    %12 = arith.cmpi ne, %11, %c0_i32_5 : i32
    scf.if %12 {
      %c0 = arith.constant 0 : index
      %c0_6 = arith.constant 0 : index
      %13 = vector.load %arg13[%c0, %c0_6] : memref<8x8xf32, #tpu.memory_space<vmem>>, vector<8x8xf32>
      %c0_7 = arith.constant 0 : index
      %c0_8 = arith.constant 0 : index
      %14 = vector.load %arg12[%c0_7, %c0_8] : memref<8x1xf32, #tpu.memory_space<vmem>>, vector<8x1xf32>
      %15 = tpu.reciprocal %14 {approx = true} : vector<8x1xf32> -> vector<8x1xf32>
      %16 = vector.broadcast %15 : vector<8x1xf32> to vector<8x8xf32>
      %17 = arith.mulf %13, %16 : vector<8x8xf32>
      %18 = arith.truncf %17 : vector<8x8xf32> to vector<8x8xbf16>
      %c0_9 = arith.constant 0 : index
      %c0_10 = arith.constant 0 : index
      %c0_11 = arith.constant 0 : index
      %19 = vector.load %arg10[%c0_9, %c0_10, %c0_11] : memref<1x8x8xbf16, #tpu.memory_space<vmem>>, vector<1x8x8xbf16>
      %20 = vector.shape_cast %19 : vector<1x8x8xbf16> to vector<8x8xbf16>
      %21 = vector.shape_cast %18 : vector<8x8xbf16> to vector<1x8x8xbf16>
      tpu.vector_store %arg10[%c0_9, %c0_10, %c0_11], %21 {strides = array<i32>} : memref<1x8x8xbf16, #tpu.memory_space<vmem>>, vector<1x8x8xbf16>,
    } else {
    }
    return
  }
  func.func @transform_0(%arg0: i32, %arg1: i32, %arg2: i32) -> (i32, i32, i32) {
    %c0_i32 = arith.constant 0 : i32
    %c0_i32_0 = arith.constant 0 : i32
    return %arg0, %arg1, %c0_i32 : i32, i32, i32
  }
  func.func @transform_1(%arg0: i32, %arg1: i32, %arg2: i32) -> (i32, i32, i32) {
    %c0_i32 = arith.constant 0 : i32
    %c0_i32_0 = arith.constant 0 : i32
    return %arg0, %arg2, %c0_i32 : i32, i32, i32
  }
  func.func @transform_2(%arg0: i32, %arg1: i32, %arg2: i32) -> (i32, i32, i32) {
    %c0_i32 = arith.constant 0 : i32
    %c0_i32_0 = arith.constant 0 : i32
    return %arg0, %arg2, %c0_i32 : i32, i32, i32
  }
  func.func @transform_3(%arg0: i32, %arg1: i32, %arg2: i32) -> (i32, i32) {
    %c0_i32 = arith.constant 0 : i32
    %c0_i32_0 = arith.constant 0 : i32
    return %arg1, %c0_i32 : i32, i32
  }
  func.func @transform_4(%arg0: i32, %arg1: i32, %arg2: i32) -> (i32, i32) {
    %c0_i32 = arith.constant 0 : i32
    %c0_i32_0 = arith.constant 0 : i32
    return %arg1, %c0_i32 : i32, i32
  }
  func.func @transform_5(%arg0: i32, %arg1: i32, %arg2: i32) -> (i32, i32) {
    %c0_i32 = arith.constant 0 : i32
    %c0_i32_0 = arith.constant 0 : i32
    return %arg2, %c0_i32 : i32, i32
  }
  func.func @transform_6(%arg0: i32, %arg1: i32, %arg2: i32) -> (i32, i32) {
    %c0_i32 = arith.constant 0 : i32
    %c0_i32_0 = arith.constant 0 : i32
    return %arg2, %c0_i32 : i32, i32
  }
  func.func @transform_7(%arg0: i32, %arg1: i32, %arg2: i32) -> (i32, i32, i32) {
    %c0_i32 = arith.constant 0 : i32
    %c0_i32_0 = arith.constant 0 : i32
    return %arg0, %arg1, %c0_i32 : i32, i32, i32
  }
}

module attributes {stable_mosaic.version = 11 : i64} {
  func.func @kernel(%arg0: i32, %arg1: i32, %arg2: i32, %arg3: memref<16x32xbf16, #tpu.memory_space<vmem>>, %arg4: memref<32x32xbf16, #tpu.memory_space<vmem>>, %arg5: memref<16x32xbf16, #tpu.memory_space<vmem>>, %arg6: memref<16x32xbf16, #tpu.memory_space<vmem>>, %arg7: memref<16x32xf32, #tpu.memory_space<vmem>>) attributes {dimension_semantics = [#tpu.dimension_semantics<parallel>, #tpu.dimension_semantics<parallel>, #tpu.dimension_semantics<arbitrary>], iteration_bounds = array<i64: 1, 1, 1>, scalar_prefetch = 0 : i64, scratch_operands = 1 : i64, tpu.core_type = #tpu.core_type<tc>, window_params = [{transform_indices = @transform_0, window_bounds = array<i64: 16, 32>}, {transform_indices = @transform_1, window_bounds = array<i64: 32, 32>}, {transform_indices = @transform_2, window_bounds = array<i64: 16, 32>}, {transform_indices = @transform_3, window_bounds = array<i64: 16, 32>}]} {
    %c0_i32 = arith.constant 0 : i32
    %0 = arith.cmpi eq, %arg2, %c0_i32 : i32
    %1 = arith.extui %0 : i1 to i32
    %c0_i32_0 = arith.constant 0 : i32
    %2 = arith.cmpi ne, %1, %c0_i32_0 : i32
    scf.if %2 {
      %cst_10 = arith.constant 0.000000e+00 : f32
      %12 = vector.broadcast %cst_10 : f32 to vector<16x32xf32>
      %c0_11 = arith.constant 0 : index
      %c0_12 = arith.constant 0 : index
      %13 = vector.load %arg7[%c0_11, %c0_12] : memref<16x32xf32, #tpu.memory_space<vmem>>, vector<16x32xf32>
      tpu.vector_store %arg7[%c0_11, %c0_12], %12 {strides = array<i32>} : memref<16x32xf32, #tpu.memory_space<vmem>>, vector<16x32xf32>,
    } else {
    }
    %c0 = arith.constant 0 : index
    %c0_1 = arith.constant 0 : index
    %3 = vector.load %arg7[%c0, %c0_1] : memref<16x32xf32, #tpu.memory_space<vmem>>, vector<16x32xf32>
    %c0_2 = arith.constant 0 : index
    %c0_3 = arith.constant 0 : index
    %4 = vector.load %arg3[%c0_2, %c0_3] : memref<16x32xbf16, #tpu.memory_space<vmem>>, vector<16x32xbf16>
    %c0_4 = arith.constant 0 : index
    %c0_5 = arith.constant 0 : index
    %5 = vector.load %arg4[%c0_4, %c0_5] : memref<32x32xbf16, #tpu.memory_space<vmem>>, vector<32x32xbf16>
    %cst = arith.constant dense<0.000000e+00> : vector<16x32xf32>
    %6 = tpu.matmul %4, %5, %cst {dimension_numbers = #tpu.dot_dimension_numbers<[1], [0], [0], [1], [0, 0, 1, 1], [], []>} : vector<16x32xbf16>, vector<32x32xbf16>, vector<16x32xf32> -> vector<16x32xf32>
    %7 = arith.addf %3, %6 : vector<16x32xf32>
    %c0_6 = arith.constant 0 : index
    %c0_7 = arith.constant 0 : index
    %8 = vector.load %arg7[%c0_6, %c0_7] : memref<16x32xf32, #tpu.memory_space<vmem>>, vector<16x32xf32>
    tpu.vector_store %arg7[%c0_6, %c0_7], %7 {strides = array<i32>} : memref<16x32xf32, #tpu.memory_space<vmem>>, vector<16x32xf32>,
    %c0_i32_8 = arith.constant 0 : i32
    %9 = arith.cmpi eq, %arg2, %c0_i32_8 : i32
    %10 = arith.extui %9 : i1 to i32
    %c0_i32_9 = arith.constant 0 : i32
    %11 = arith.cmpi ne, %10, %c0_i32_9 : i32
    scf.if %11 {
      %c0_10 = arith.constant 0 : index
      %c0_11 = arith.constant 0 : index
      %12 = vector.load %arg7[%c0_10, %c0_11] : memref<16x32xf32, #tpu.memory_space<vmem>>, vector<16x32xf32>
      %c0_12 = arith.constant 0 : index
      %c0_13 = arith.constant 0 : index
      %13 = vector.load %arg5[%c0_12, %c0_13] : memref<16x32xbf16, #tpu.memory_space<vmem>>, vector<16x32xbf16>
      %14 = arith.extf %13 : vector<16x32xbf16> to vector<16x32xf32>
      %15 = arith.addf %12, %14 : vector<16x32xf32>
      %16 = arith.truncf %15 : vector<16x32xf32> to vector<16x32xbf16>
      %c0_14 = arith.constant 0 : index
      %c0_15 = arith.constant 0 : index
      %17 = vector.load %arg6[%c0_14, %c0_15] : memref<16x32xbf16, #tpu.memory_space<vmem>>, vector<16x32xbf16>
      tpu.vector_store %arg6[%c0_14, %c0_15], %16 {strides = array<i32>} : memref<16x32xbf16, #tpu.memory_space<vmem>>, vector<16x32xbf16>,
    } else {
    }
    return
  }
  func.func @transform_0(%arg0: i32, %arg1: i32, %arg2: i32) -> (i32, i32) {
    %c0_i32 = arith.constant 0 : i32
    return %arg0, %arg2 : i32, i32
  }
  func.func @transform_1(%arg0: i32, %arg1: i32, %arg2: i32) -> (i32, i32) {
    %c0_i32 = arith.constant 0 : i32
    return %arg2, %arg1 : i32, i32
  }
  func.func @transform_2(%arg0: i32, %arg1: i32, %arg2: i32) -> (i32, i32) {
    %c0_i32 = arith.constant 0 : i32
    return %arg0, %arg1 : i32, i32
  }
  func.func @transform_3(%arg0: i32, %arg1: i32, %arg2: i32) -> (i32, i32) {
    %c0_i32 = arith.constant 0 : i32
    return %arg0, %arg1 : i32, i32
  }
}

module attributes {stable_mosaic.version = 11 : i64} {
  func.func @kernel(%arg0: i32, %arg1: i32, %arg2: memref<16x32xbf16, #tpu.memory_space<vmem>>, %arg3: memref<1x32xf32, #tpu.memory_space<vmem>>, %arg4: memref<32x64xbf16, #tpu.memory_space<vmem>>, %arg5: memref<32x64xbf16, #tpu.memory_space<vmem>>, %arg6: memref<16x64xbf16, #tpu.memory_space<vmem>>) attributes {dimension_semantics = [#tpu.dimension_semantics<parallel>, #tpu.dimension_semantics<parallel>], iteration_bounds = array<i64: 1, 1>, scalar_prefetch = 0 : i64, scratch_operands = 0 : i64, tpu.core_type = #tpu.core_type<tc>, window_params = [{transform_indices = @transform_0, window_bounds = array<i64: 16, 32>}, {pipeline_mode = #tpu.pipeline_mode<synchronous>, transform_indices = @transform_1, window_bounds = array<i64: 1, 32>}, {transform_indices = @transform_2, window_bounds = array<i64: 32, 64>}, {transform_indices = @transform_3, window_bounds = array<i64: 32, 64>}, {transform_indices = @transform_4, window_bounds = array<i64: 16, 64>}]} {
    %c0 = arith.constant 0 : index
    %c0_0 = arith.constant 0 : index
    %0 = vector.load %arg2[%c0, %c0_0] : memref<16x32xbf16, #tpu.memory_space<vmem>>, vector<16x32xbf16>
    %1 = arith.extf %0 : vector<16x32xbf16> to vector<16x32xf32>
    %c0_1 = arith.constant 0 : index
    %c0_2 = arith.constant 0 : index
    %2 = vector.load %arg3[%c0_1, %c0_2] : memref<1x32xf32, #tpu.memory_space<vmem>>, vector<1x32xf32>
    %3 = arith.mulf %1, %1 : vector<16x32xf32>
    %cst = arith.constant dense<0.000000e+00> : vector<16xf32>
    %4 = vector.multi_reduction <add>, %3, %cst [1] : vector<16x32xf32> to vector<16xf32>
    %5 = vector.shape_cast %4 : vector<16xf32> to vector<16x1xf32>
    %cst_3 = arith.constant 3.200000e+01 : f32
    %6 = vector.broadcast %cst_3 : f32 to vector<16x1xf32>
    %7 = arith.divf %5, %6 : vector<16x1xf32>
    %cst_4 = arith.constant 9.99999997E-7 : f32
    %8 = vector.broadcast %cst_4 : f32 to vector<16x1xf32>
    %9 = arith.addf %7, %8 : vector<16x1xf32>
    %10 = math.rsqrt %9 : vector<16x1xf32>
    %11 = vector.broadcast %10 : vector<16x1xf32> to vector<16x32xf32>
    %12 = arith.mulf %1, %11 : vector<16x32xf32>
    %13 = vector.broadcast %2 : vector<1x32xf32> to vector<16x32xf32>
    %14 = arith.mulf %12, %13 : vector<16x32xf32>
    %15 = arith.truncf %14 : vector<16x32xf32> to vector<16x32xbf16>
    %c0_5 = arith.constant 0 : index
    %c0_6 = arith.constant 0 : index
    %16 = vector.load %arg4[%c0_5, %c0_6] : memref<32x64xbf16, #tpu.memory_space<vmem>>, vector<32x64xbf16>
    %cst_7 = arith.constant dense<0.000000e+00> : vector<16x64xf32>
    %17 = tpu.matmul %15, %16, %cst_7 {dimension_numbers = #tpu.dot_dimension_numbers<[1], [0], [0], [1], [0, 0, 1, 1], [], []>} : vector<16x32xbf16>, vector<32x64xbf16>, vector<16x64xf32> -> vector<16x64xf32>
    %c0_8 = arith.constant 0 : index
    %c0_9 = arith.constant 0 : index
    %18 = vector.load %arg5[%c0_8, %c0_9] : memref<32x64xbf16, #tpu.memory_space<vmem>>, vector<32x64xbf16>
    %cst_10 = arith.constant dense<0.000000e+00> : vector<16x64xf32>
    %19 = tpu.matmul %15, %18, %cst_10 {dimension_numbers = #tpu.dot_dimension_numbers<[1], [0], [0], [1], [0, 0, 1, 1], [], []>} : vector<16x32xbf16>, vector<32x64xbf16>, vector<16x64xf32> -> vector<16x64xf32>
    %20 = arith.negf %17 : vector<16x64xf32>
    %21 = math.exp %20 : vector<16x64xf32>
    %cst_11 = arith.constant 1.000000e+00 : f32
    %22 = vector.broadcast %cst_11 : f32 to vector<16x64xf32>
    %23 = arith.addf %22, %21 : vector<16x64xf32>
    %24 = arith.divf %22, %23 : vector<16x64xf32>
    %25 = arith.mulf %17, %24 : vector<16x64xf32>
    %26 = arith.mulf %25, %19 : vector<16x64xf32>
    %27 = arith.truncf %26 : vector<16x64xf32> to vector<16x64xbf16>
    %c0_12 = arith.constant 0 : index
    %c0_13 = arith.constant 0 : index
    %28 = vector.load %arg6[%c0_12, %c0_13] : memref<16x64xbf16, #tpu.memory_space<vmem>>, vector<16x64xbf16>
    tpu.vector_store %arg6[%c0_12, %c0_13], %27 {strides = array<i32>} : memref<16x64xbf16, #tpu.memory_space<vmem>>, vector<16x64xbf16>,
    return
  }
  func.func @transform_0(%arg0: i32, %arg1: i32) -> (i32, i32) {
    %c0_i32 = arith.constant 0 : i32
    %c0_i32_0 = arith.constant 0 : i32
    return %arg0, %c0_i32 : i32, i32
  }
  func.func @transform_1(%arg0: i32, %arg1: i32) -> (i32, i32) {
    %c0_i32 = arith.constant 0 : i32
    %c0_i32_0 = arith.constant 0 : i32
    %c0_i32_1 = arith.constant 0 : i32
    return %c0_i32, %c0_i32_0 : i32, i32
  }
  func.func @transform_2(%arg0: i32, %arg1: i32) -> (i32, i32) {
    %c0_i32 = arith.constant 0 : i32
    %c0_i32_0 = arith.constant 0 : i32
    return %c0_i32, %arg1 : i32, i32
  }
  func.func @transform_3(%arg0: i32, %arg1: i32) -> (i32, i32) {
    %c0_i32 = arith.constant 0 : i32
    %c0_i32_0 = arith.constant 0 : i32
    return %c0_i32, %arg1 : i32, i32
  }
  func.func @transform_4(%arg0: i32, %arg1: i32) -> (i32, i32) {
    %c0_i32 = arith.constant 0 : i32
    return %arg0, %arg1 : i32, i32
  }
}

module attributes {stable_mosaic.version = 11 : i64} {
  func.func @kernel(%arg0: i32, %arg1: i32, %arg2: i32, %arg3: memref<16x64xbf16, #tpu.memory_space<vmem>>, %arg4: memref<64x32xbf16, #tpu.memory_space<vmem>>, %arg5: memref<16x32xbf16, #tpu.memory_space<vmem>>, %arg6: memref<16x32xbf16, #tpu.memory_space<vmem>>, %arg7: memref<16x32xf32, #tpu.memory_space<vmem>>) attributes {dimension_semantics = [#tpu.dimension_semantics<parallel>, #tpu.dimension_semantics<parallel>, #tpu.dimension_semantics<arbitrary>], iteration_bounds = array<i64: 1, 1, 1>, scalar_prefetch = 0 : i64, scratch_operands = 1 : i64, tpu.core_type = #tpu.core_type<tc>, window_params = [{transform_indices = @transform_0, window_bounds = array<i64: 16, 64>}, {transform_indices = @transform_1, window_bounds = array<i64: 64, 32>}, {transform_indices = @transform_2, window_bounds = array<i64: 16, 32>}, {transform_indices = @transform_3, window_bounds = array<i64: 16, 32>}]} {
    %c0_i32 = arith.constant 0 : i32
    %0 = arith.cmpi eq, %arg2, %c0_i32 : i32
    %1 = arith.extui %0 : i1 to i32
    %c0_i32_0 = arith.constant 0 : i32
    %2 = arith.cmpi ne, %1, %c0_i32_0 : i32
    scf.if %2 {
      %cst_10 = arith.constant 0.000000e+00 : f32
      %12 = vector.broadcast %cst_10 : f32 to vector<16x32xf32>
      %c0_11 = arith.constant 0 : index
      %c0_12 = arith.constant 0 : index
      %13 = vector.load %arg7[%c0_11, %c0_12] : memref<16x32xf32, #tpu.memory_space<vmem>>, vector<16x32xf32>
      tpu.vector_store %arg7[%c0_11, %c0_12], %12 {strides = array<i32>} : memref<16x32xf32, #tpu.memory_space<vmem>>, vector<16x32xf32>,
    } else {
    }
    %c0 = arith.constant 0 : index
    %c0_1 = arith.constant 0 : index
    %3 = vector.load %arg7[%c0, %c0_1] : memref<16x32xf32, #tpu.memory_space<vmem>>, vector<16x32xf32>
    %c0_2 = arith.constant 0 : index
    %c0_3 = arith.constant 0 : index
    %4 = vector.load %arg3[%c0_2, %c0_3] : memref<16x64xbf16, #tpu.memory_space<vmem>>, vector<16x64xbf16>
    %c0_4 = arith.constant 0 : index
    %c0_5 = arith.constant 0 : index
    %5 = vector.load %arg4[%c0_4, %c0_5] : memref<64x32xbf16, #tpu.memory_space<vmem>>, vector<64x32xbf16>
    %cst = arith.constant dense<0.000000e+00> : vector<16x32xf32>
    %6 = tpu.matmul %4, %5, %cst {dimension_numbers = #tpu.dot_dimension_numbers<[1], [0], [0], [1], [0, 0, 1, 1], [], []>} : vector<16x64xbf16>, vector<64x32xbf16>, vector<16x32xf32> -> vector<16x32xf32>
    %7 = arith.addf %3, %6 : vector<16x32xf32>
    %c0_6 = arith.constant 0 : index
    %c0_7 = arith.constant 0 : index
    %8 = vector.load %arg7[%c0_6, %c0_7] : memref<16x32xf32, #tpu.memory_space<vmem>>, vector<16x32xf32>
    tpu.vector_store %arg7[%c0_6, %c0_7], %7 {strides = array<i32>} : memref<16x32xf32, #tpu.memory_space<vmem>>, vector<16x32xf32>,
    %c0_i32_8 = arith.constant 0 : i32
    %9 = arith.cmpi eq, %arg2, %c0_i32_8 : i32
    %10 = arith.extui %9 : i1 to i32
    %c0_i32_9 = arith.constant 0 : i32
    %11 = arith.cmpi ne, %10, %c0_i32_9 : i32
    scf.if %11 {
      %c0_10 = arith.constant 0 : index
      %c0_11 = arith.constant 0 : index
      %12 = vector.load %arg7[%c0_10, %c0_11] : memref<16x32xf32, #tpu.memory_space<vmem>>, vector<16x32xf32>
      %c0_12 = arith.constant 0 : index
      %c0_13 = arith.constant 0 : index
      %13 = vector.load %arg5[%c0_12, %c0_13] : memref<16x32xbf16, #tpu.memory_space<vmem>>, vector<16x32xbf16>
      %14 = arith.extf %13 : vector<16x32xbf16> to vector<16x32xf32>
      %15 = arith.addf %12, %14 : vector<16x32xf32>
      %16 = arith.truncf %15 : vector<16x32xf32> to vector<16x32xbf16>
      %c0_14 = arith.constant 0 : index
      %c0_15 = arith.constant 0 : index
      %17 = vector.load %arg6[%c0_14, %c0_15] : memref<16x32xbf16, #tpu.memory_space<vmem>>, vector<16x32xbf16>
      tpu.vector_store %arg6[%c0_14, %c0_15], %16 {strides = array<i32>} : memref<16x32xbf16, #tpu.memory_space<vmem>>, vector<16x32xbf16>,
    } else {
    }
    return
  }
  func.func @transform_0(%arg0: i32, %arg1: i32, %arg2: i32) -> (i32, i32) {
    %c0_i32 = arith.constant 0 : i32
    return %arg0, %arg2 : i32, i32
  }
  func.func @transform_1(%arg0: i32, %arg1: i32, %arg2: i32) -> (i32, i32) {
    %c0_i32 = arith.constant 0 : i32
    return %arg2, %arg1 : i32, i32
  }
  func.func @transform_2(%arg0: i32, %arg1: i32, %arg2: i32) -> (i32, i32) {
    %c0_i32 = arith.constant 0 : i32
    return %arg0, %arg1 : i32, i32
  }
  func.func @transform_3(%arg0: i32, %arg1: i32, %arg2: i32) -> (i32, i32) {
    %c0_i32 = arith.constant 0 : i32
    return %arg0, %arg1 : i32, i32
  }
}

module attributes {stable_mosaic.version = 11 : i64} {
  func.func @kernel(%arg0: i32, %arg1: i32, %arg2: memref<16x32xbf16, #tpu.memory_space<vmem>>, %arg3: memref<16x32xbf16, #tpu.memory_space<vmem>>, %arg4: memref<1x32xf32, #tpu.memory_space<vmem>>, %arg5: memref<1x32xf32, #tpu.memory_space<vmem>>, %arg6: memref<64x32xbf16, #tpu.memory_space<vmem>>, %arg7: memref<1x32xf32, #tpu.memory_space<vmem>>, %arg8: memref<16x32xbf16, #tpu.memory_space<vmem>>) attributes {dimension_semantics = [#tpu.dimension_semantics<parallel>, #tpu.dimension_semantics<parallel>], iteration_bounds = array<i64: 1, 1>, scalar_prefetch = 0 : i64, scratch_operands = 0 : i64, tpu.core_type = #tpu.core_type<tc>, window_params = [{transform_indices = @transform_0, window_bounds = array<i64: 16, 32>}, {transform_indices = @transform_1, window_bounds = array<i64: 16, 32>}, {pipeline_mode = #tpu.pipeline_mode<synchronous>, transform_indices = @transform_2, window_bounds = array<i64: 1, 32>}, {pipeline_mode = #tpu.pipeline_mode<synchronous>, transform_indices = @transform_3, window_bounds = array<i64: 1, 32>}, {transform_indices = @transform_4, window_bounds = array<i64: 64, 32>}, {transform_indices = @transform_5, window_bounds = array<i64: 1, 32>}, {transform_indices = @transform_6, window_bounds = array<i64: 16, 32>}]} {
    %c0 = arith.constant 0 : index
    %c0_0 = arith.constant 0 : index
    %0 = vector.load %arg2[%c0, %c0_0] : memref<16x32xbf16, #tpu.memory_space<vmem>>, vector<16x32xbf16>
    %1 = arith.extf %0 : vector<16x32xbf16> to vector<16x32xf32>
    %c0_1 = arith.constant 0 : index
    %c0_2 = arith.constant 0 : index
    %2 = vector.load %arg4[%c0_1, %c0_2] : memref<1x32xf32, #tpu.memory_space<vmem>>, vector<1x32xf32>
    %3 = arith.mulf %1, %1 : vector<16x32xf32>
    %cst = arith.constant dense<0.000000e+00> : vector<16xf32>
    %4 = vector.multi_reduction <add>, %3, %cst [1] : vector<16x32xf32> to vector<16xf32>
    %5 = vector.shape_cast %4 : vector<16xf32> to vector<16x1xf32>
    %cst_3 = arith.constant 3.200000e+01 : f32
    %6 = vector.broadcast %cst_3 : f32 to vector<16x1xf32>
    %7 = arith.divf %5, %6 : vector<16x1xf32>
    %cst_4 = arith.constant 9.99999997E-7 : f32
    %8 = vector.broadcast %cst_4 : f32 to vector<16x1xf32>
    %9 = arith.addf %7, %8 : vector<16x1xf32>
    %10 = math.rsqrt %9 : vector<16x1xf32>
    %11 = vector.broadcast %10 : vector<16x1xf32> to vector<16x32xf32>
    %12 = arith.mulf %1, %11 : vector<16x32xf32>
    %13 = vector.broadcast %2 : vector<1x32xf32> to vector<16x32xf32>
    %14 = arith.mulf %12, %13 : vector<16x32xf32>
    %15 = arith.truncf %14 : vector<16x32xf32> to vector<16x32xbf16>
    %c0_5 = arith.constant 0 : index
    %c0_6 = arith.constant 0 : index
    %16 = vector.load %arg3[%c0_5, %c0_6] : memref<16x32xbf16, #tpu.memory_space<vmem>>, vector<16x32xbf16>
    %17 = arith.extf %16 : vector<16x32xbf16> to vector<16x32xf32>
    %c0_7 = arith.constant 0 : index
    %c0_8 = arith.constant 0 : index
    %18 = vector.load %arg5[%c0_7, %c0_8] : memref<1x32xf32, #tpu.memory_space<vmem>>, vector<1x32xf32>
    %19 = arith.mulf %17, %17 : vector<16x32xf32>
    %cst_9 = arith.constant dense<0.000000e+00> : vector<16xf32>
    %20 = vector.multi_reduction <add>, %19, %cst_9 [1] : vector<16x32xf32> to vector<16xf32>
    %21 = vector.shape_cast %20 : vector<16xf32> to vector<16x1xf32>
    %cst_10 = arith.constant 3.200000e+01 : f32
    %22 = vector.broadcast %cst_10 : f32 to vector<16x1xf32>
    %23 = arith.divf %21, %22 : vector<16x1xf32>
    %cst_11 = arith.constant 9.99999997E-7 : f32
    %24 = vector.broadcast %cst_11 : f32 to vector<16x1xf32>
    %25 = arith.addf %23, %24 : vector<16x1xf32>
    %26 = math.rsqrt %25 : vector<16x1xf32>
    %27 = vector.broadcast %26 : vector<16x1xf32> to vector<16x32xf32>
    %28 = arith.mulf %17, %27 : vector<16x32xf32>
    %29 = vector.broadcast %18 : vector<1x32xf32> to vector<16x32xf32>
    %30 = arith.mulf %28, %29 : vector<16x32xf32>
    %31 = arith.truncf %30 : vector<16x32xf32> to vector<16x32xbf16>
    %c0_12 = arith.constant 0 : index
    %c0_13 = arith.constant 0 : index
    %32 = vector.load %arg6[%c0_12, %c0_13] : memref<64x32xbf16, #tpu.memory_space<vmem>>, vector<64x32xbf16>
    %33 = vector.extract_strided_slice %32 {offsets = [0, 0], sizes = [32, 32], strides = [1, 1]} : vector<64x32xbf16> to vector<32x32xbf16>
    %cst_14 = arith.constant dense<0.000000e+00> : vector<16x32xf32>
    %34 = tpu.matmul %15, %33, %cst_14 {dimension_numbers = #tpu.dot_dimension_numbers<[1], [0], [0], [1], [0, 0, 1, 1], [], []>} : vector<16x32xbf16>, vector<32x32xbf16>, vector<16x32xf32> -> vector<16x32xf32>
    %35 = vector.extract_strided_slice %32 {offsets = [32, 0], sizes = [32, 32], strides = [1, 1]} : vector<64x32xbf16> to vector<32x32xbf16>
    %cst_15 = arith.constant dense<0.000000e+00> : vector<16x32xf32>
    %36 = tpu.matmul %31, %35, %cst_15 {dimension_numbers = #tpu.dot_dimension_numbers<[1], [0], [0], [1], [0, 0, 1, 1], [], []>} : vector<16x32xbf16>, vector<32x32xbf16>, vector<16x32xf32> -> vector<16x32xf32>
    %37 = arith.addf %34, %36 : vector<16x32xf32>
    %c0_16 = arith.constant 0 : index
    %c0_17 = arith.constant 0 : index
    %38 = vector.load %arg7[%c0_16, %c0_17] : memref<1x32xf32, #tpu.memory_space<vmem>>, vector<1x32xf32>
    %39 = vector.broadcast %38 : vector<1x32xf32> to vector<16x32xf32>
    %40 = arith.addf %37, %39 : vector<16x32xf32>
    %41 = arith.truncf %40 : vector<16x32xf32> to vector<16x32xbf16>
    %c0_18 = arith.constant 0 : index
    %c0_19 = arith.constant 0 : index
    %42 = vector.load %arg8[%c0_18, %c0_19] : memref<16x32xbf16, #tpu.memory_space<vmem>>, vector<16x32xbf16>
    tpu.vector_store %arg8[%c0_18, %c0_19], %41 {strides = array<i32>} : memref<16x32xbf16, #tpu.memory_space<vmem>>, vector<16x32xbf16>,
    return
  }
  func.func @transform_0(%arg0: i32, %arg1: i32) -> (i32, i32) {
    %c0_i32 = arith.constant 0 : i32
    %c0_i32_0 = arith.constant 0 : i32
    return %arg0, %c0_i32 : i32, i32
  }
  func.func @transform_1(%arg0: i32, %arg1: i32) -> (i32, i32) {
    %c0_i32 = arith.constant 0 : i32
    %c0_i32_0 = arith.constant 0 : i32
    return %arg0, %c0_i32 : i32, i32
  }
  func.func @transform_2(%arg0: i32, %arg1: i32) -> (i32, i32) {
    %c0_i32 = arith.constant 0 : i32
    %c0_i32_0 = arith.constant 0 : i32
    %c0_i32_1 = arith.constant 0 : i32
    return %c0_i32, %c0_i32_0 : i32, i32
  }
  func.func @transform_3(%arg0: i32, %arg1: i32) -> (i32, i32) {
    %c0_i32 = arith.constant 0 : i32
    %c0_i32_0 = arith.constant 0 : i32
    %c0_i32_1 = arith.constant 0 : i32
    return %c0_i32, %c0_i32_0 : i32, i32
  }
  func.func @transform_4(%arg0: i32, %arg1: i32) -> (i32, i32) {
    %c0_i32 = arith.constant 0 : i32
    %c0_i32_0 = arith.constant 0 : i32
    return %c0_i32, %arg1 : i32, i32
  }
  func.func @transform_5(%arg0: i32, %arg1: i32) -> (i32, i32) {
    %c0_i32 = arith.constant 0 : i32
    %c0_i32_0 = arith.constant 0 : i32
    return %c0_i32, %arg1 : i32, i32
  }
  func.func @transform_6(%arg0: i32, %arg1: i32) -> (i32, i32) {
    %c0_i32 = arith.constant 0 : i32
    return %arg0, %arg1 : i32, i32
  }
}

module attributes {stable_mosaic.version = 11 : i64} {
  func.func @kernel(%arg0: i32, %arg1: i32, %arg2: memref<16x32xbf16, #tpu.memory_space<vmem>>, %arg3: memref<32x128xbf16, #tpu.memory_space<vmem>>, %arg4: memref<16x1xi32, #tpu.memory_space<vmem>>, %arg5: memref<16x1xf32, #tpu.memory_space<vmem>>, %arg6: memref<16x1xf32, #tpu.memory_space<vmem>>, %arg7: memref<16x1xf32, #tpu.memory_space<vmem>>, %arg8: memref<16x1xf32, #tpu.memory_space<vmem>>) attributes {dimension_semantics = [#tpu.dimension_semantics<parallel>, #tpu.dimension_semantics<arbitrary>], iteration_bounds = array<i64: 1, 1>, scalar_prefetch = 0 : i64, scratch_operands = 3 : i64, tpu.core_type = #tpu.core_type<tc>, window_params = [{transform_indices = @transform_0, window_bounds = array<i64: 16, 32>}, {transform_indices = @transform_1, window_bounds = array<i64: 32, 128>}, {transform_indices = @transform_2, window_bounds = array<i64: 16, 1>}, {transform_indices = @transform_3, window_bounds = array<i64: 16, 1>}]} {
    %c0_i32 = arith.constant 0 : i32
    %0 = arith.cmpi eq, %arg1, %c0_i32 : i32
    %1 = arith.extui %0 : i1 to i32
    %c0_i32_0 = arith.constant 0 : i32
    %2 = arith.cmpi ne, %1, %c0_i32_0 : i32
    scf.if %2 {
      %cst_24 = arith.constant -1.000000e+30 : f32
      %41 = vector.broadcast %cst_24 : f32 to vector<16x1xf32>
      %c0_25 = arith.constant 0 : index
      %c0_26 = arith.constant 0 : index
      %42 = vector.load %arg6[%c0_25, %c0_26] : memref<16x1xf32, #tpu.memory_space<vmem>>, vector<16x1xf32>
      tpu.vector_store %arg6[%c0_25, %c0_26], %41 {strides = array<i32>} : memref<16x1xf32, #tpu.memory_space<vmem>>, vector<16x1xf32>,
      %cst_27 = arith.constant 0.000000e+00 : f32
      %43 = vector.broadcast %cst_27 : f32 to vector<16x1xf32>
      %c0_28 = arith.constant 0 : index
      %c0_29 = arith.constant 0 : index
      %44 = vector.load %arg7[%c0_28, %c0_29] : memref<16x1xf32, #tpu.memory_space<vmem>>, vector<16x1xf32>
      tpu.vector_store %arg7[%c0_28, %c0_29], %43 {strides = array<i32>} : memref<16x1xf32, #tpu.memory_space<vmem>>, vector<16x1xf32>,
      %cst_30 = arith.constant 0.000000e+00 : f32
      %45 = vector.broadcast %cst_30 : f32 to vector<16x1xf32>
      %c0_31 = arith.constant 0 : index
      %c0_32 = arith.constant 0 : index
      %46 = vector.load %arg8[%c0_31, %c0_32] : memref<16x1xf32, #tpu.memory_space<vmem>>, vector<16x1xf32>
      tpu.vector_store %arg8[%c0_31, %c0_32], %45 {strides = array<i32>} : memref<16x1xf32, #tpu.memory_space<vmem>>, vector<16x1xf32>,
    } else {
    }
    %c0 = arith.constant 0 : index
    %c0_1 = arith.constant 0 : index
    %3 = vector.load %arg2[%c0, %c0_1] : memref<16x32xbf16, #tpu.memory_space<vmem>>, vector<16x32xbf16>
    %4 = arith.extf %3 : vector<16x32xbf16> to vector<16x32xf32>
    %5 = arith.truncf %4 : vector<16x32xf32> to vector<16x32xbf16>
    %c0_2 = arith.constant 0 : index
    %c0_3 = arith.constant 0 : index
    %6 = vector.load %arg3[%c0_2, %c0_3] : memref<32x128xbf16, #tpu.memory_space<vmem>>, vector<32x128xbf16>
    %cst = arith.constant dense<0.000000e+00> : vector<16x128xf32>
    %7 = tpu.matmul %5, %6, %cst {dimension_numbers = #tpu.dot_dimension_numbers<[1], [0], [0], [1], [0, 0, 1, 1], [], []>} : vector<16x32xbf16>, vector<32x128xbf16>, vector<16x128xf32> -> vector<16x128xf32>
    %c0_4 = arith.constant 0 : index
    %c0_5 = arith.constant 0 : index
    %8 = vector.load %arg4[%c0_4, %c0_5] : memref<16x1xi32, #tpu.memory_space<vmem>>, vector<16x1xi32>
    %c128_i32 = arith.constant 128 : i32
    %9 = arith.muli %arg1, %c128_i32 : i32
    %10 = tpu.iota {dimensions = array<i32: 1>} : vector<16x128xi32>
    %11 = vector.broadcast %9 : i32 to vector<16x128xi32>
    %12 = arith.addi %11, %10 : vector<16x128xi32>
    %c0_6 = arith.constant 0 : index
    %c0_7 = arith.constant 0 : index
    %13 = vector.load %arg8[%c0_6, %c0_7] : memref<16x1xf32, #tpu.memory_space<vmem>>, vector<16x1xf32>
    %14 = vector.broadcast %8 : vector<16x1xi32> to vector<16x128xi32>
    %15 = arith.cmpi eq, %12, %14 : vector<16x128xi32>
    %cst_8 = arith.constant 0.000000e+00 : f32
    %16 = vector.broadcast %cst_8 : f32 to vector<16x128xf32>
    %17 = arith.select %15, %7, %16 : vector<16x128xi1>, vector<16x128xf32>
    %cst_9 = arith.constant dense<0.000000e+00> : vector<16xf32>
    %18 = vector.multi_reduction <add>, %17, %cst_9 [1] : vector<16x128xf32> to vector<16xf32>
    %19 = vector.shape_cast %18 : vector<16xf32> to vector<16x1xf32>
    %20 = arith.addf %13, %19 : vector<16x1xf32>
    %c0_10 = arith.constant 0 : index
    %c0_11 = arith.constant 0 : index
    %21 = vector.load %arg8[%c0_10, %c0_11] : memref<16x1xf32, #tpu.memory_space<vmem>>, vector<16x1xf32>
    tpu.vector_store %arg8[%c0_10, %c0_11], %20 {strides = array<i32>} : memref<16x1xf32, #tpu.memory_space<vmem>>, vector<16x1xf32>,
    %c0_12 = arith.constant 0 : index
    %c0_13 = arith.constant 0 : index
    %22 = vector.load %arg6[%c0_12, %c0_13] : memref<16x1xf32, #tpu.memory_space<vmem>>, vector<16x1xf32>
    %cst_14 = arith.constant dense<0xFF800000> : vector<16xf32>
    %23 = vector.multi_reduction <maximumf>, %7, %cst_14 [1] : vector<16x128xf32> to vector<16xf32>
    %24 = vector.shape_cast %23 : vector<16xf32> to vector<16x1xf32>
    %25 = arith.maximumf %22, %24 : vector<16x1xf32>
    %c0_15 = arith.constant 0 : index
    %c0_16 = arith.constant 0 : index
    %26 = vector.load %arg7[%c0_15, %c0_16] : memref<16x1xf32, #tpu.memory_space<vmem>>, vector<16x1xf32>
    %27 = arith.subf %22, %25 : vector<16x1xf32>
    %28 = math.exp %27 : vector<16x1xf32>
    %29 = arith.mulf %26, %28 : vector<16x1xf32>
    %30 = vector.broadcast %25 : vector<16x1xf32> to vector<16x128xf32>
    %31 = arith.subf %7, %30 : vector<16x128xf32>
    %32 = math.exp %31 : vector<16x128xf32>
    %cst_17 = arith.constant dense<0.000000e+00> : vector<16xf32>
    %33 = vector.multi_reduction <add>, %32, %cst_17 [1] : vector<16x128xf32> to vector<16xf32>
    %34 = vector.shape_cast %33 : vector<16xf32> to vector<16x1xf32>
    %35 = arith.addf %29, %34 : vector<16x1xf32>
    %c0_18 = arith.constant 0 : index
    %c0_19 = arith.constant 0 : index
    %36 = vector.load %arg7[%c0_18, %c0_19] : memref<16x1xf32, #tpu.memory_space<vmem>>, vector<16x1xf32>
    tpu.vector_store %arg7[%c0_18, %c0_19], %35 {strides = array<i32>} : memref<16x1xf32, #tpu.memory_space<vmem>>, vector<16x1xf32>,
    %c0_20 = arith.constant 0 : index
    %c0_21 = arith.constant 0 : index
    %37 = vector.load %arg6[%c0_20, %c0_21] : memref<16x1xf32, #tpu.memory_space<vmem>>, vector<16x1xf32>
    tpu.vector_store %arg6[%c0_20, %c0_21], %25 {strides = array<i32>} : memref<16x1xf32, #tpu.memory_space<vmem>>, vector<16x1xf32>,
    %c0_i32_22 = arith.constant 0 : i32
    %38 = arith.cmpi eq, %arg1, %c0_i32_22 : i32
    %39 = arith.extui %38 : i1 to i32
    %c0_i32_23 = arith.constant 0 : i32
    %40 = arith.cmpi ne, %39, %c0_i32_23 : i32
    scf.if %40 {
      %c0_24 = arith.constant 0 : index
      %c0_25 = arith.constant 0 : index
      %41 = vector.load %arg6[%c0_24, %c0_25] : memref<16x1xf32, #tpu.memory_space<vmem>>, vector<16x1xf32>
      %c0_26 = arith.constant 0 : index
      %c0_27 = arith.constant 0 : index
      %42 = vector.load %arg7[%c0_26, %c0_27] : memref<16x1xf32, #tpu.memory_space<vmem>>, vector<16x1xf32>
      %43 = math.log %42 : vector<16x1xf32>
      %44 = arith.addf %41, %43 : vector<16x1xf32>
      %c0_28 = arith.constant 0 : index
      %c0_29 = arith.constant 0 : index
      %45 = vector.load %arg8[%c0_28, %c0_29] : memref<16x1xf32, #tpu.memory_space<vmem>>, vector<16x1xf32>
      %46 = arith.subf %44, %45 : vector<16x1xf32>
      %c0_30 = arith.constant 0 : index
      %c0_31 = arith.constant 0 : index
      %47 = vector.load %arg5[%c0_30, %c0_31] : memref<16x1xf32, #tpu.memory_space<vmem>>, vector<16x1xf32>
      tpu.vector_store %arg5[%c0_30, %c0_31], %46 {strides = array<i32>} : memref<16x1xf32, #tpu.memory_space<vmem>>, vector<16x1xf32>,
    } else {
    }
    return
  }
  func.func @transform_0(%arg0: i32, %arg1: i32) -> (i32, i32) {
    %c0_i32 = arith.constant 0 : i32
    %c0_i32_0 = arith.constant 0 : i32
    return %arg0, %c0_i32 : i32, i32
  }
  func.func @transform_1(%arg0: i32, %arg1: i32) -> (i32, i32) {
    %c0_i32 = arith.constant 0 : i32
    %c0_i32_0 = arith.constant 0 : i32
    return %c0_i32, %arg1 : i32, i32
  }
  func.func @transform_2(%arg0: i32, %arg1: i32) -> (i32, i32) {
    %c0_i32 = arith.constant 0 : i32
    %c0_i32_0 = arith.constant 0 : i32
    return %arg0, %c0_i32 : i32, i32
  }
  func.func @transform_3(%arg0: i32, %arg1: i32) -> (i32, i32) {
    %c0_i32 = arith.constant 0 : i32
    %c0_i32_0 = arith.constant 0 : i32
    return %arg0, %c0_i32 : i32, i32
  }
}

module attributes {stable_mosaic.version = 11 : i64} {
  func.func @kernel(%arg0: i32, %arg1: i32, %arg2: memref<16x32xbf16, #tpu.memory_space<vmem>>, %arg3: memref<1x32xf32, #tpu.memory_space<vmem>>, %arg4: memref<32x128xbf16, #tpu.memory_space<vmem>>, %arg5: memref<16x1xi32, #tpu.memory_space<vmem>>, %arg6: memref<16x1xf32, #tpu.memory_space<vmem>>, %arg7: memref<16x1xf32, #tpu.memory_space<vmem>>, %arg8: memref<16x1xf32, #tpu.memory_space<vmem>>, %arg9: memref<16x1xf32, #tpu.memory_space<vmem>>) attributes {dimension_semantics = [#tpu.dimension_semantics<parallel>, #tpu.dimension_semantics<arbitrary>], iteration_bounds = array<i64: 1, 1>, scalar_prefetch = 0 : i64, scratch_operands = 3 : i64, tpu.core_type = #tpu.core_type<tc>, window_params = [{transform_indices = @transform_0, window_bounds = array<i64: 16, 32>}, {pipeline_mode = #tpu.pipeline_mode<synchronous>, transform_indices = @transform_1, window_bounds = array<i64: 1, 32>}, {transform_indices = @transform_2, window_bounds = array<i64: 32, 128>}, {transform_indices = @transform_3, window_bounds = array<i64: 16, 1>}, {transform_indices = @transform_4, window_bounds = array<i64: 16, 1>}]} {
    %c0_i32 = arith.constant 0 : i32
    %0 = arith.cmpi eq, %arg1, %c0_i32 : i32
    %1 = arith.extui %0 : i1 to i32
    %c0_i32_0 = arith.constant 0 : i32
    %2 = arith.cmpi ne, %1, %c0_i32_0 : i32
    scf.if %2 {
      %cst_29 = arith.constant -1.000000e+30 : f32
      %54 = vector.broadcast %cst_29 : f32 to vector<16x1xf32>
      %c0_30 = arith.constant 0 : index
      %c0_31 = arith.constant 0 : index
      %55 = vector.load %arg7[%c0_30, %c0_31] : memref<16x1xf32, #tpu.memory_space<vmem>>, vector<16x1xf32>
      tpu.vector_store %arg7[%c0_30, %c0_31], %54 {strides = array<i32>} : memref<16x1xf32, #tpu.memory_space<vmem>>, vector<16x1xf32>,
      %cst_32 = arith.constant 0.000000e+00 : f32
      %56 = vector.broadcast %cst_32 : f32 to vector<16x1xf32>
      %c0_33 = arith.constant 0 : index
      %c0_34 = arith.constant 0 : index
      %57 = vector.load %arg8[%c0_33, %c0_34] : memref<16x1xf32, #tpu.memory_space<vmem>>, vector<16x1xf32>
      tpu.vector_store %arg8[%c0_33, %c0_34], %56 {strides = array<i32>} : memref<16x1xf32, #tpu.memory_space<vmem>>, vector<16x1xf32>,
      %cst_35 = arith.constant 0.000000e+00 : f32
      %58 = vector.broadcast %cst_35 : f32 to vector<16x1xf32>
      %c0_36 = arith.constant 0 : index
      %c0_37 = arith.constant 0 : index
      %59 = vector.load %arg9[%c0_36, %c0_37] : memref<16x1xf32, #tpu.memory_space<vmem>>, vector<16x1xf32>
      tpu.vector_store %arg9[%c0_36, %c0_37], %58 {strides = array<i32>} : memref<16x1xf32, #tpu.memory_space<vmem>>, vector<16x1xf32>,
    } else {
    }
    %c0 = arith.constant 0 : index
    %c0_1 = arith.constant 0 : index
    %3 = vector.load %arg2[%c0, %c0_1] : memref<16x32xbf16, #tpu.memory_space<vmem>>, vector<16x32xbf16>
    %4 = arith.extf %3 : vector<16x32xbf16> to vector<16x32xf32>
    %c0_2 = arith.constant 0 : index
    %c0_3 = arith.constant 0 : index
    %5 = vector.load %arg3[%c0_2, %c0_3] : memref<1x32xf32, #tpu.memory_space<vmem>>, vector<1x32xf32>
    %6 = arith.mulf %4, %4 : vector<16x32xf32>
    %cst = arith.constant dense<0.000000e+00> : vector<16xf32>
    %7 = vector.multi_reduction <add>, %6, %cst [1] : vector<16x32xf32> to vector<16xf32>
    %8 = vector.shape_cast %7 : vector<16xf32> to vector<16x1xf32>
    %cst_4 = arith.constant 3.200000e+01 : f32
    %9 = vector.broadcast %cst_4 : f32 to vector<16x1xf32>
    %10 = arith.divf %8, %9 : vector<16x1xf32>
    %cst_5 = arith.constant 9.99999997E-7 : f32
    %11 = vector.broadcast %cst_5 : f32 to vector<16x1xf32>
    %12 = arith.addf %10, %11 : vector<16x1xf32>
    %13 = math.rsqrt %12 : vector<16x1xf32>
    %14 = vector.broadcast %13 : vector<16x1xf32> to vector<16x32xf32>
    %15 = arith.mulf %4, %14 : vector<16x32xf32>
    %16 = vector.broadcast %5 : vector<1x32xf32> to vector<16x32xf32>
    %17 = arith.mulf %15, %16 : vector<16x32xf32>
    %18 = arith.truncf %17 : vector<16x32xf32> to vector<16x32xbf16>
    %c0_6 = arith.constant 0 : index
    %c0_7 = arith.constant 0 : index
    %19 = vector.load %arg4[%c0_6, %c0_7] : memref<32x128xbf16, #tpu.memory_space<vmem>>, vector<32x128xbf16>
    %cst_8 = arith.constant dense<0.000000e+00> : vector<16x128xf32>
    %20 = tpu.matmul %18, %19, %cst_8 {dimension_numbers = #tpu.dot_dimension_numbers<[1], [0], [0], [1], [0, 0, 1, 1], [], []>} : vector<16x32xbf16>, vector<32x128xbf16>, vector<16x128xf32> -> vector<16x128xf32>
    %c0_9 = arith.constant 0 : index
    %c0_10 = arith.constant 0 : index
    %21 = vector.load %arg5[%c0_9, %c0_10] : memref<16x1xi32, #tpu.memory_space<vmem>>, vector<16x1xi32>
    %c128_i32 = arith.constant 128 : i32
    %22 = arith.muli %arg1, %c128_i32 : i32
    %23 = tpu.iota {dimensions = array<i32: 1>} : vector<16x128xi32>
    %24 = vector.broadcast %22 : i32 to vector<16x128xi32>
    %25 = arith.addi %24, %23 : vector<16x128xi32>
    %c0_11 = arith.constant 0 : index
    %c0_12 = arith.constant 0 : index
    %26 = vector.load %arg9[%c0_11, %c0_12] : memref<16x1xf32, #tpu.memory_space<vmem>>, vector<16x1xf32>
    %27 = vector.broadcast %21 : vector<16x1xi32> to vector<16x128xi32>
    %28 = arith.cmpi eq, %25, %27 : vector<16x128xi32>
    %cst_13 = arith.constant 0.000000e+00 : f32
    %29 = vector.broadcast %cst_13 : f32 to vector<16x128xf32>
    %30 = arith.select %28, %20, %29 : vector<16x128xi1>, vector<16x128xf32>
    %cst_14 = arith.constant dense<0.000000e+00> : vector<16xf32>
    %31 = vector.multi_reduction <add>, %30, %cst_14 [1] : vector<16x128xf32> to vector<16xf32>
    %32 = vector.shape_cast %31 : vector<16xf32> to vector<16x1xf32>
    %33 = arith.addf %26, %32 : vector<16x1xf32>
    %c0_15 = arith.constant 0 : index
    %c0_16 = arith.constant 0 : index
    %34 = vector.load %arg9[%c0_15, %c0_16] : memref<16x1xf32, #tpu.memory_space<vmem>>, vector<16x1xf32>
    tpu.vector_store %arg9[%c0_15, %c0_16], %33 {strides = array<i32>} : memref<16x1xf32, #tpu.memory_space<vmem>>, vector<16x1xf32>,
    %c0_17 = arith.constant 0 : index
    %c0_18 = arith.constant 0 : index
    %35 = vector.load %arg7[%c0_17, %c0_18] : memref<16x1xf32, #tpu.memory_space<vmem>>, vector<16x1xf32>
    %cst_19 = arith.constant dense<0xFF800000> : vector<16xf32>
    %36 = vector.multi_reduction <maximumf>, %20, %cst_19 [1] : vector<16x128xf32> to vector<16xf32>
    %37 = vector.shape_cast %36 : vector<16xf32> to vector<16x1xf32>
    %38 = arith.maximumf %35, %37 : vector<16x1xf32>
    %c0_20 = arith.constant 0 : index
    %c0_21 = arith.constant 0 : index
    %39 = vector.load %arg8[%c0_20, %c0_21] : memref<16x1xf32, #tpu.memory_space<vmem>>, vector<16x1xf32>
    %40 = arith.subf %35, %38 : vector<16x1xf32>
    %41 = math.exp %40 : vector<16x1xf32>
    %42 = arith.mulf %39, %41 : vector<16x1xf32>
    %43 = vector.broadcast %38 : vector<16x1xf32> to vector<16x128xf32>
    %44 = arith.subf %20, %43 : vector<16x128xf32>
    %45 = math.exp %44 : vector<16x128xf32>
    %cst_22 = arith.constant dense<0.000000e+00> : vector<16xf32>
    %46 = vector.multi_reduction <add>, %45, %cst_22 [1] : vector<16x128xf32> to vector<16xf32>
    %47 = vector.shape_cast %46 : vector<16xf32> to vector<16x1xf32>
    %48 = arith.addf %42, %47 : vector<16x1xf32>
    %c0_23 = arith.constant 0 : index
    %c0_24 = arith.constant 0 : index
    %49 = vector.load %arg8[%c0_23, %c0_24] : memref<16x1xf32, #tpu.memory_space<vmem>>, vector<16x1xf32>
    tpu.vector_store %arg8[%c0_23, %c0_24], %48 {strides = array<i32>} : memref<16x1xf32, #tpu.memory_space<vmem>>, vector<16x1xf32>,
    %c0_25 = arith.constant 0 : index
    %c0_26 = arith.constant 0 : index
    %50 = vector.load %arg7[%c0_25, %c0_26] : memref<16x1xf32, #tpu.memory_space<vmem>>, vector<16x1xf32>
    tpu.vector_store %arg7[%c0_25, %c0_26], %38 {strides = array<i32>} : memref<16x1xf32, #tpu.memory_space<vmem>>, vector<16x1xf32>,
    %c0_i32_27 = arith.constant 0 : i32
    %51 = arith.cmpi eq, %arg1, %c0_i32_27 : i32
    %52 = arith.extui %51 : i1 to i32
    %c0_i32_28 = arith.constant 0 : i32
    %53 = arith.cmpi ne, %52, %c0_i32_28 : i32
    scf.if %53 {
      %c0_29 = arith.constant 0 : index
      %c0_30 = arith.constant 0 : index
      %54 = vector.load %arg7[%c0_29, %c0_30] : memref<16x1xf32, #tpu.memory_space<vmem>>, vector<16x1xf32>
      %c0_31 = arith.constant 0 : index
      %c0_32 = arith.constant 0 : index
      %55 = vector.load %arg8[%c0_31, %c0_32] : memref<16x1xf32, #tpu.memory_space<vmem>>, vector<16x1xf32>
      %56 = math.log %55 : vector<16x1xf32>
      %57 = arith.addf %54, %56 : vector<16x1xf32>
      %c0_33 = arith.constant 0 : index
      %c0_34 = arith.constant 0 : index
      %58 = vector.load %arg9[%c0_33, %c0_34] : memref<16x1xf32, #tpu.memory_space<vmem>>, vector<16x1xf32>
      %59 = arith.subf %57, %58 : vector<16x1xf32>
      %c0_35 = arith.constant 0 : index
      %c0_36 = arith.constant 0 : index
      %60 = vector.load %arg6[%c0_35, %c0_36] : memref<16x1xf32, #tpu.memory_space<vmem>>, vector<16x1xf32>
      tpu.vector_store %arg6[%c0_35, %c0_36], %59 {strides = array<i32>} : memref<16x1xf32, #tpu.memory_space<vmem>>, vector<16x1xf32>,
    } else {
    }
    return
  }
  func.func @transform_0(%arg0: i32, %arg1: i32) -> (i32, i32) {
    %c0_i32 = arith.constant 0 : i32
    %c0_i32_0 = arith.constant 0 : i32
    return %arg0, %c0_i32 : i32, i32
  }
  func.func @transform_1(%arg0: i32, %arg1: i32) -> (i32, i32) {
    %c0_i32 = arith.constant 0 : i32
    %c0_i32_0 = arith.constant 0 : i32
    %c0_i32_1 = arith.constant 0 : i32
    return %c0_i32, %c0_i32_0 : i32, i32
  }
  func.func @transform_2(%arg0: i32, %arg1: i32) -> (i32, i32) {
    %c0_i32 = arith.constant 0 : i32
    %c0_i32_0 = arith.constant 0 : i32
    return %c0_i32, %arg1 : i32, i32
  }
  func.func @transform_3(%arg0: i32, %arg1: i32) -> (i32, i32) {
    %c0_i32 = arith.constant 0 : i32
    %c0_i32_0 = arith.constant 0 : i32
    return %arg0, %c0_i32 : i32, i32
  }
  func.func @transform_4(%arg0: i32, %arg1: i32) -> (i32, i32) {
    %c0_i32 = arith.constant 0 : i32
    %c0_i32_0 = arith.constant 0 : i32
    return %arg0, %c0_i32 : i32, i32
  }
}

</mosaic_0001>

<llo_original>
// kernel: _lambda_.20
$region0: #{_lambda_.20}
  #allocation0 [shape = 'u32[]', space=smem, size = 0x4, offset = 0x4, fixed_abs, tag = 'smem constant byte address 0x4 - core index']
  #allocation1 [shape = 'u32[144,128]{1,0:T(1,128)}', space=vmem, size = 0x12000, scoped, tag = 'internal scratch']
  %s0 = inlined_call_operand.vmem [shape: bf16[16,32], index: 0, kind: input, shape index: {}]
  %s1 = inlined_call_operand.vmem [shape: f32[1,32], index: 1, kind: input, shape index: {}]
  %s2 = inlined_call_operand.vmem [shape: bf16[32,96], index: 2, kind: input, shape index: {}]
  %s3 = inlined_call_operand.vmem [shape: bf16[16,96], index: 3, kind: output, shape index: {}]
  %s4 = sld [smem:[#allocation0]]
  $region22: #{_lambda_.20} parent=0
    _
  %s6 = ssub.s32 1, %s4
  %s7 = scalar_select 0, %s6, %s4
  // Predicated region
  $region2: #{_lambda_.20} parent=0 // pred_check
    _
  $region3: #{_lambda_.20} parent=0 // pred_check_branch
    %9 = sbr.rel (0) target = $region5
  $region4: #{_lambda_.20} parent=0 // pred_region
    _
  $region5: #{_lambda_.20} parent=0 // pred_fallthru
    _
  // Predicated region
  $region6: #{_lambda_.20} parent=0 // pred_check
    _
  $region7: #{_lambda_.20} parent=0 // pred_check_branch
    %11 = sbr.rel (0) target = $region9
  $region8: #{_lambda_.20} parent=0 // pred_region
    _
  $region9: #{_lambda_.20} parent=0 // pred_fallthru
    _
  // Predicated region
  $region10: #{_lambda_.20} parent=0 // pred_check
    _
  $region11: #{_lambda_.20} parent=0 // pred_check_branch
    %13 = sbr.rel (0) target = $region13
  $region12: #{_lambda_.20} parent=0 // pred_region
    _
  $region13: #{_lambda_.20} parent=0 // pred_fallthru
    _
  %v15 = vld [vmem:[%s0] sm:$0xf]
  %v16 = vld [vmem:[%s0 + $0x4] sm:$0xf]
  %v17 = vunpack.c.l.bf16 %v15
  %v18 = vunpack.c.l.bf16 %v16
  %v19 = vld [vmem:[%s1] sm:$0x1]
  %v20 = vmul.f32 %v17, %v17
  %v21 = vmul.f32 %v18, %v18
  %vm22 = vcmask 261120
  %v23 = vsel %vm22, %v20, 0.0
  %24 = vadd.xlane.f32.xlu0 %v23
  %v25 = vpop.xlane.xlu0 %24
  %v26 = vsel %vm22, %v21, 0.0
  %27 = vadd.xlane.f32.xlu0 %v26
  %v28 = vpop.xlane.xlu0 %27
  %v29 = vrcp.pop 32.0
  %v30 = vmul.f32 %v25, %v29
  %v31 = vmul.f32 %v28, %v29
  %v32 = vadd.f32 %v30, 1e-06
  %v33 = vadd.f32 %v31, 1e-06
  %v34 = vrsqrt.pop %v32
  %v35 = vrsqrt.pop %v33
  %v36 = vmul.f32 %v17, %v34
  %v37 = vmul.f32 %v18, %v35
  %v39 = vlaneseq
  %v40 = vshrl.u32 %v39, 7
  %v41 = vsub.s32 0, %v40
  %v42 = vrot.slane %v19, %v41
  %v44 = vmul.f32 %v36, %v42
  %v45 = vmul.f32 %v37, %v42
  %v46 = vpack.c.bf16 %v45, %v44
  %v47 = vld [vmem:[%s2] sm:$0xf]
  %v48 = vld [vmem:[%s2 + $0x4] sm:$0xf]
  %v49 = vld [vmem:[%s2 + $0x8] sm:$0xf]
  %v50 = vld [vmem:[%s2 + $0xc] sm:$0xf]
  %v55 = vunpack.c.l.b16 %v47
  %v56 = vunpack.c.l.b16 %v48
  %v57 = vunpack.c.l.b16 %v49
  %v58 = vunpack.c.l.b16 %v50
  %v59 = vpack.c.b16 %v56, %v55
  %v60 = vpack.c.b16 %v58, %v57
  %v64 = vsel %vm22, %v46, 0
  %66 = vmatprep.subr.bf16.mxu0 0
  %67 = vmatpush1.bf16.msra.mxu0 %v59
  %68 = vmatprep.subr.bf16.mxu0 0
  %69 = vmatpush1.bf16.msra.mxu0 %v60
  %70 = vmatprep.subr.bf16.mxu0 0
  %71 = vmatpush1.bf16.msra.mxu0 0
  %72 = vmatprep.subr.bf16.mxu0 0
  %73 = vmatpush1.bf16.msra.mxu0 0
  %74 = vmatprep.subr.bf16.mxu0 0
  %75 = vmatpush1.bf16.msra.mxu0 0
  %76 = vmatprep.subr.bf16.mxu0 0
  %77 = vmatpush1.bf16.msra.mxu0 0
  %78 = vmatprep.subr.bf16.mxu0 0
  %79 = vmatpush1.bf16.msra.mxu0 0
  %80 = vmatprep.subr.bf16.mxu0 0
  %81 = vmatpush1.bf16.msra.mxu0 0
  %82 = vmatprep.subr.bf16.mxu0 0
  %83 = vmatpush1.bf16.msra.mxu0 0
  %84 = vmatprep.subr.bf16.mxu0 0
  %85 = vmatpush1.bf16.msra.mxu0 0
  %86 = vmatprep.subr.bf16.mxu0 0
  %87 = vmatpush1.bf16.msra.mxu0 0
  %88 = vmatprep.subr.bf16.mxu0 0
  %89 = vmatpush1.bf16.msra.mxu0 0
  %90 = vmatprep.subr.bf16.mxu0 0
  %91 = vmatpush1.bf16.msra.mxu0 0
  %92 = vmatprep.subr.bf16.mxu0 0
  %93 = vmatpush1.bf16.msra.mxu0 0
  %94 = vmatprep.subr.bf16.mxu0 0
  %95 = vmatpush1.bf16.msra.mxu0 0
  %96 = vmatprep.subr.bf16.mxu0 0
  %97 = vmatpush1.bf16.msra.mxu0 0
  %98 = vmatprep.mubr.bf16.mxu0 0
  %99 = vmatmul.mubr.bf16.gmra.mrb[0].mxu0 %v64
  %v100 = vpop.f32.mrb[0].mxu0
  %v101 = vadd.f32 0.0, %v100
  %v102 = vpop.f32.mrb[0].mxu0
  %v103 = vpop.f32.mrb[0].mxu0
  %v104 = vadd.f32 0.0, %v103
  %v105 = vpop.f32.mrb[0].mxu0
  %106 = vdwg.mxu0
  %v107 = vpack.c.bf16 %v104, %v101
  %v109 = vunpack.c.l.b16 %v107
  %v110 = vunpack.c.h.b16 %v107
  %v111 = vpack.c.b16 %v109, %v109
  %v112 = vpack.c.b16 %v110, %v110
  %vm115 = vcmask 781312
  %116 = vst.msk [vmem:[%s3] sm:$0xf] %vm115, %v111
  %117 = vst.msk [vmem:[%s3 + $0x4] sm:$0xf] %vm115, %v112
  // Predicated region
  $region14: #{_lambda_.20} parent=0 // pred_check
    _
  $region15: #{_lambda_.20} parent=0 // pred_check_branch
    %119 = sbr.rel (0) target = $region17
  $region16: #{_lambda_.20} parent=0 // pred_region
    _
  $region17: #{_lambda_.20} parent=0 // pred_fallthru
    _
  // Predicated region
  $region18: #{_lambda_.20} parent=0 // pred_check
    _
  $region19: #{_lambda_.20} parent=0 // pred_check_branch
    %121 = sbr.rel (0) target = $region21
  $region20: #{_lambda_.20} parent=0 // pred_region
    _
  $region21: #{_lambda_.20} parent=0 // pred_fallthru
    _

// kernel: _lambda_.22
$region0: #{_lambda_.22}
  #allocation0 [shape = 'u32[]', space=smem, size = 0x4, offset = 0x4, fixed_abs, tag = 'smem constant byte address 0x4 - core index']
  #allocation1 [shape = 'u32[144,128]{1,0:T(1,128)}', space=vmem, size = 0x12000, scoped, tag = 'internal scratch']
  #allocation2 [shape = 'f32[16,32]{1,0:T(8,128)}', space=vmem, size = 0x2000, scoped, tag = 'scratch operand']
  %s0 = inlined_call_operand.vmem [shape: bf16[16,32], index: 0, kind: input, shape index: {}]
  %s1 = inlined_call_operand.vmem [shape: bf16[32,32], index: 1, kind: input, shape index: {}]
  %s2 = inlined_call_operand.vmem [shape: bf16[16,32], index: 2, kind: input, shape index: {}]
  %s3 = inlined_call_operand.vmem [shape: bf16[16,32], index: 3, kind: output, shape index: {}]
  %s4 = sld [smem:[#allocation0]]
  $region30: #{_lambda_.22} parent=0
    _
  %s6 = ssub.s32 1, %s4
  %s7 = scalar_select 0, %s6, %s4
  // Predicated region
  $region2: #{_lambda_.22} parent=0 // pred_check
    _
  $region3: #{_lambda_.22} parent=0 // pred_check_branch
    %9 = sbr.rel (0) target = $region5
  $region4: #{_lambda_.22} parent=0 // pred_region
    _
  $region5: #{_lambda_.22} parent=0 // pred_fallthru
    _
  // Predicated region
  $region6: #{_lambda_.22} parent=0 // pred_check
    _
  $region7: #{_lambda_.22} parent=0 // pred_check_branch
    %11 = sbr.rel (0) target = $region9
  $region8: #{_lambda_.22} parent=0 // pred_region
    _
  $region9: #{_lambda_.22} parent=0 // pred_fallthru
    _
  // Predicated region
  $region10: #{_lambda_.22} parent=0 // pred_check
    _
  $region11: #{_lambda_.22} parent=0 // pred_check_branch
    %13 = sbr.rel (0) target = $region13
  $region12: #{_lambda_.22} parent=0 // pred_region
    _
  $region13: #{_lambda_.22} parent=0 // pred_fallthru
    _
  %p15 = scmp.eq.s32.totalorder 0, 0
  // Predicated region
  $region14: #{_lambda_.22} parent=0 // pred_check
    %p16 = pneg %p15
  $region15: #{_lambda_.22} parent=0 // pred_check_branch
    %18 = sbr.rel (%p16) target = $region17
  $region16: #{_lambda_.22} parent=0 // pred_region
    %vm19 = vcmask 261120
    %20 = vst.msk [vmem:[#allocation2] sm:$0xff] %vm19, 0.0
    %21 = vst.msk [vmem:[#allocation2 + $0x8] sm:$0xff] %vm19, 0.0
  $region17: #{_lambda_.22} parent=0 // pred_fallthru
    _
  %v22 = vld [vmem:[#allocation2] sm:$0xff]
  %v23 = vld [vmem:[#allocation2 + $0x8] sm:$0xff]
  %v24 = vld [vmem:[%s0] sm:$0xf]
  %v25 = vld [vmem:[%s0 + $0x4] sm:$0xf]
  %v26 = vld [vmem:[%s1] sm:$0xf]
  %v27 = vld [vmem:[%s1 + $0x4] sm:$0xf]
  %v28 = vld [vmem:[%s1 + $0x8] sm:$0xf]
  %v29 = vld [vmem:[%s1 + $0xc] sm:$0xf]
  %v32 = vunpack.c.l.b16 %v24
  %v33 = vunpack.c.l.b16 %v25
  %v34 = vpack.c.b16 %v33, %v32
  %v39 = vunpack.c.l.b16 %v26
  %v40 = vunpack.c.l.b16 %v27
  %v41 = vunpack.c.l.b16 %v28
  %v42 = vunpack.c.l.b16 %v29
  %v43 = vpack.c.b16 %v40, %v39
  %v44 = vpack.c.b16 %v42, %v41
  %vm47 = vcmask 261120
  %v49 = vsel %vm47, %v34, 0
  %51 = vmatprep.subr.bf16.mxu0 0
  %52 = vmatpush1.bf16.msra.mxu0 %v43
  %53 = vmatprep.subr.bf16.mxu0 0
  %54 = vmatpush1.bf16.msra.mxu0 %v44
  %55 = vmatprep.subr.bf16.mxu0 0
  %56 = vmatpush1.bf16.msra.mxu0 0
  %57 = vmatprep.subr.bf16.mxu0 0
  %58 = vmatpush1.bf16.msra.mxu0 0
  %59 = vmatprep.subr.bf16.mxu0 0
  %60 = vmatpush1.bf16.msra.mxu0 0
  %61 = vmatprep.subr.bf16.mxu0 0
  %62 = vmatpush1.bf16.msra.mxu0 0
  %63 = vmatprep.subr.bf16.mxu0 0
  %64 = vmatpush1.bf16.msra.mxu0 0
  %65 = vmatprep.subr.bf16.mxu0 0
  %66 = vmatpush1.bf16.msra.mxu0 0
  %67 = vmatprep.subr.bf16.mxu0 0
  %68 = vmatpush1.bf16.msra.mxu0 0
  %69 = vmatprep.subr.bf16.mxu0 0
  %70 = vmatpush1.bf16.msra.mxu0 0
  %71 = vmatprep.subr.bf16.mxu0 0
  %72 = vmatpush1.bf16.msra.mxu0 0
  %73 = vmatprep.subr.bf16.mxu0 0
  %74 = vmatpush1.bf16.msra.mxu0 0
  %75 = vmatprep.subr.bf16.mxu0 0
  %76 = vmatpush1.bf16.msra.mxu0 0
  %77 = vmatprep.subr.bf16.mxu0 0
  %78 = vmatpush1.bf16.msra.mxu0 0
  %79 = vmatprep.subr.bf16.mxu0 0
  %80 = vmatpush1.bf16.msra.mxu0 0
  %81 = vmatprep.subr.bf16.mxu0 0
  %82 = vmatpush1.bf16.msra.mxu0 0
  %83 = vmatprep.mubr.bf16.mxu0 0
  %84 = vmatmul.mubr.bf16.gmra.mrb[0].mxu0 %v49
  %v85 = vpop.f32.mrb[0].mxu0
  %v86 = vadd.f32 0.0, %v85
  %v87 = vpop.f32.mrb[0].mxu0
  %v88 = vpop.f32.mrb[0].mxu0
  %v89 = vadd.f32 0.0, %v88
  %v90 = vpop.f32.mrb[0].mxu0
  %91 = vdwg.mxu0
  %v92 = vadd.f32 %v22, %v86
  %v93 = vadd.f32 %v23, %v89
  %94 = vst.msk [vmem:[#allocation2] sm:$0xff] %vm47, %v92
  %95 = vst.msk [vmem:[#allocation2 + $0x8] sm:$0xff] %vm47, %v93
  // Predicated region
  $region18: #{_lambda_.22} parent=0 // pred_check
    %p96 = pneg %p15
  $region19: #{_lambda_.22} parent=0 // pred_check_branch
    %98 = sbr.rel (%p96) target = $region21
  $region20: #{_lambda_.22} parent=0 // pred_region
    %v99 = vld [vmem:[#allocation2] sm:$0xff]
    %v100 = vld [vmem:[#allocation2 + $0x8] sm:$0xff]
    %v101 = vld [vmem:[%s2] sm:$0xf]
    %v102 = vld [vmem:[%s2 + $0x4] sm:$0xf]
    %v103 = vunpack.c.l.bf16 %v101
    %v104 = vunpack.c.l.bf16 %v102
    %v105 = vadd.f32 %v99, %v103
    %v106 = vadd.f32 %v100, %v104
    %v107 = vpack.c.bf16 %v106, %v105
    %v109 = vunpack.c.l.b16 %v107
    %v110 = vunpack.c.h.b16 %v107
    %v111 = vpack.c.b16 %v109, %v109
    %v112 = vpack.c.b16 %v110, %v110
    %vm115 = vcmask 257024
    %116 = vst.msk [vmem:[%s3] sm:$0xf] %vm115, %v111
    %117 = vst.msk [vmem:[%s3 + $0x4] sm:$0xf] %vm115, %v112
  $region21: #{_lambda_.22} parent=0 // pred_fallthru
    _
  // Predicated region
  $region22: #{_lambda_.22} parent=0 // pred_check
    _
  $region23: #{_lambda_.22} parent=0 // pred_check_branch
    %119 = sbr.rel (0) target = $region25
  $region24: #{_lambda_.22} parent=0 // pred_region
    _
  $region25: #{_lambda_.22} parent=0 // pred_fallthru
    _
  // Predicated region
  $region26: #{_lambda_.22} parent=0 // pred_check
    _
  $region27: #{_lambda_.22} parent=0 // pred_check_branch
    %121 = sbr.rel (0) target = $region29
  $region28: #{_lambda_.22} parent=0 // pred_region
    _
  $region29: #{_lambda_.22} parent=0 // pred_fallthru
    _

// kernel: _lambda_.21
$region0: #{_lambda_.21}
  #allocation0 [shape = 'u32[]', space=smem, size = 0x4, offset = 0x4, fixed_abs, tag = 'smem constant byte address 0x4 - core index']
  #allocation1 [shape = 'u32[144,128]{1,0:T(1,128)}', space=vmem, size = 0x12000, scoped, tag = 'internal scratch']
  #allocation2 [shape = 'f32[8,1]{1,0:T(8,128)}', space=vmem, size = 0x1000, scoped, tag = 'scratch operand']
  #allocation3 [shape = 'f32[8,1]{1,0:T(8,128)}', space=vmem, size = 0x1000, scoped, tag = 'scratch operand']
  #allocation4 [shape = 'f32[8,8]{1,0:T(8,128)}', space=vmem, size = 0x1000, scoped, tag = 'scratch operand']
  %s0 = inlined_call_operand.vmem [shape: bf16[8,8,8], index: 0, kind: input, shape index: {}]
  %s1 = inlined_call_operand.vmem [shape: bf16[8,8,8], index: 1, kind: input, shape index: {}]
  %s2 = inlined_call_operand.vmem [shape: bf16[8,8,8], index: 2, kind: input, shape index: {}]
  %s3 = inlined_call_operand.vmem [shape: f32[8,8], index: 3, kind: input, shape index: {}, may-alias: {3,5}]
  %s4 = inlined_call_operand.vmem [shape: f32[8,8], index: 4, kind: input, shape index: {}, may-alias: {4,6}]
  %s5 = inlined_call_operand.vmem [shape: f32[8,8], index: 5, kind: input, shape index: {}, may-alias: {3,5}]
  %s6 = inlined_call_operand.vmem [shape: f32[8,8], index: 6, kind: input, shape index: {}, may-alias: {4,6}]
  %s7 = inlined_call_operand.vmem [shape: bf16[8,8,8], index: 7, kind: output, shape index: {}]
  %s8 = sld [smem:[#allocation0]]
  $region73: #{_lambda_.21} parent=0
    _
  %s10 = ssub.s32 1, %s8
  %s11 = scalar_select 0, %s10, %s8
  loop: start=0, step=1, limit=10
  $region2: #{_lambda_.21} parent=0 // loop_pre_header
    _
  $region3: #{_lambda_.21} parent=0 // loop_header
    %s13 = sphi 0, %s17
    %p14 = scmp.ge.s32.totalorder %s13, 10
    %s20 = sphi 0, %s39
    %s21 = sphi 0, %s35
    %s22 = sphi 0, %s31
    %s23 = sphi 0, %s20
    %s24 = sphi 0, %s21
    %s25 = sphi 0, %s22
    %s26 = sphi 0, %s23
    %s27 = sphi 0, %s24
    %s28 = sphi 0, %s25
    %s44 = sphi 0, %s46
    %s47 = sphi 0, %s44
    %s48 = sphi 0, %s47
    %s64 = sphi 0, %s48
    %s72 = sphi 0, %s74
    %s75 = sphi 0, %s72
    %s76 = sphi 0, %s75
    %s92 = sphi 0, %s76
    %s100 = sphi 0, %s102
    %s103 = sphi 0, %s100
    %s104 = sphi 0, %s103
    %s120 = sphi 0, %s104
    %s126 = sphi 0, %s128
    %s129 = sphi 0, %s126
    %s130 = sphi 0, %s129
    %s146 = sphi 0, %s130
    %s152 = sphi 0, %s154
    %s155 = sphi 0, %s152
    %s156 = sphi 0, %s155
    %s172 = sphi 0, %s156
    %s178 = sphi 0, %s180
    %s181 = sphi 0, %s178
    %s182 = sphi 0, %s181
    %s198 = sphi 0, %s182
    %s204 = sphi 0, %s206
    %s207 = sphi 0, %s204
    %s208 = sphi 0, %s207
    %s224 = sphi 0, %s208
    %s232 = sphi 0, %s234
    %s235 = sphi 0, %s232
    %s236 = sphi 0, %s235
    %s252 = sphi 0, %s236
  $region4: #{_lambda_.21} parent=0 // loop_header_branch
    %16 = sbr.rel (%p14) target = $region8
  $region5: #{_lambda_.21} parent=0 // loop_body
    %s18 = ssub.s32 %s13, 1
    %s19 = ssub.s32 %s13, 2
    %s29 = sadd.s32 1, %s22
    %p30 = scmp.ge.s32.totalorder %s29, 1
    %s31 = scalar_select %p30, 0, %s29
    %s32 = sadd.s32 1, %s21
    %s33 = scalar_select %p30, %s32, %s21
    %p34 = scmp.ge.s32.totalorder %s33, 1
    %s35 = scalar_select %p34, 0, %s33
    %s36 = sadd.s32 1, %s20
    %s37 = scalar_select %p34, %s36, %s20
    %p38 = scmp.ge.s32.totalorder %s37, 8
    %s39 = scalar_select %p38, 0, %s37
    %s40 = ssub.s32 %s20, %s39
    %s41 = ssub.s32 %s21, %s35
    %s42 = sor.u32 %s40, %s41
    %p43 = scmp.eq.s32.totalorder %s42, 0
    %s45 = sadd.s32 %s44, 1
    %s46 = scalar_select %p43, %s44, %s45
    %p49 = pneg %p43
    %p50 = scmp.eq.s32.totalorder %s13, 7
    %p51 = por %p49, %p50
    %p52 = scmp.ne.s32.totalorder %s44, %s47
    %p53 = scmp.eq.s32.totalorder %s13, 0
    %p54 = por %p52, %p53
    %p55 = scmp.ne.s32.totalorder %s44, %s47
    %p56 = scmp.eq.s32.totalorder %s18, 7
    %p57 = por %p55, %p56
    %p58 = scmp.ne.s32.totalorder %s47, %s48
    %p59 = scmp.eq.s32.totalorder %s18, 0
    %p60 = por %p58, %p59
    %p61 = scmp.ne.s32.totalorder %s47, %s48
    %p62 = scmp.eq.s32.totalorder %s19, 7
    %p63 = por %p61, %p62
    %p65 = scmp.ne.s32.totalorder %s48, %s64
    %p66 = scmp.eq.s32.totalorder %s19, 0
    %p67 = por %p65, %p66
    %s68 = ssub.s32 %s20, %s39
    %s69 = ssub.s32 %s22, %s31
    %s70 = sor.u32 %s68, %s69
    %p71 = scmp.eq.s32.totalorder %s70, 0
    %s73 = sadd.s32 %s72, 1
    %s74 = scalar_select %p71, %s72, %s73
    %p77 = pneg %p71
    %p78 = scmp.eq.s32.totalorder %s13, 7
    %p79 = por %p77, %p78
    %p80 = scmp.ne.s32.totalorder %s72, %s75
    %p81 = scmp.eq.s32.totalorder %s13, 0
    %p82 = por %p80, %p81
    %p83 = scmp.ne.s32.totalorder %s72, %s75
    %p84 = scmp.eq.s32.totalorder %s18, 7
    %p85 = por %p83, %p84
    %p86 = scmp.ne.s32.totalorder %s75, %s76
    %p87 = scmp.eq.s32.totalorder %s18, 0
    %p88 = por %p86, %p87
    %p89 = scmp.ne.s32.totalorder %s75, %s76
    %p90 = scmp.eq.s32.totalorder %s19, 7
    %p91 = por %p89, %p90
    %p93 = scmp.ne.s32.totalorder %s76, %s92
    %p94 = scmp.eq.s32.totalorder %s19, 0
    %p95 = por %p93, %p94
    %s96 = ssub.s32 %s20, %s39
    %s97 = ssub.s32 %s22, %s31
    %s98 = sor.u32 %s96, %s97
    %p99 = scmp.eq.s32.totalorder %s98, 0
    %s101 = sadd.s32 %s100, 1
    %s102 = scalar_select %p99, %s100, %s101
    %p105 = pneg %p99
    %p106 = scmp.eq.s32.totalorder %s13, 7
    %p107 = por %p105, %p106
    %p108 = scmp.ne.s32.totalorder %s100, %s103
    %p109 = scmp.eq.s32.totalorder %s13, 0
    %p110 = por %p108, %p109
    %p111 = scmp.ne.s32.totalorder %s100, %s103
    %p112 = scmp.eq.s32.totalorder %s18, 7
    %p113 = por %p111, %p112
    %p114 = scmp.ne.s32.totalorder %s103, %s104
    %p115 = scmp.eq.s32.totalorder %s18, 0
    %p116 = por %p114, %p115
    %p117 = scmp.ne.s32.totalorder %s103, %s104
    %p118 = scmp.eq.s32.totalorder %s19, 7
    %p119 = por %p117, %p118
    %p121 = scmp.ne.s32.totalorder %s104, %s120
    %p122 = scmp.eq.s32.totalorder %s19, 0
    %p123 = por %p121, %p122
    %s124 = ssub.s32 %s21, %s35
    %p125 = scmp.eq.s32.totalorder %s124, 0
    %s127 = sadd.s32 %s126, 1
    %s128 = scalar_select %p125, %s126, %s127
    %p131 = pneg %p125
    %p132 = scmp.eq.s32.totalorder %s13, 7
    %p133 = por %p131, %p132
    %p134 = scmp.ne.s32.totalorder %s126, %s129
    %p135 = scmp.eq.s32.totalorder %s13, 0
    %p136 = por %p134, %p135
    %p137 = scmp.ne.s32.totalorder %s126, %s129
    %p138 = scmp.eq.s32.totalorder %s18, 7
    %p139 = por %p137, %p138
    %p140 = scmp.ne.s32.totalorder %s129, %s130
    %p141 = scmp.eq.s32.totalorder %s18, 0
    %p142 = por %p140, %p141
    %p143 = scmp.ne.s32.totalorder %s129, %s130
    %p144 = scmp.eq.s32.totalorder %s19, 7
    %p145 = por %p143, %p144
    %p147 = scmp.ne.s32.totalorder %s130, %s146
    %p148 = scmp.eq.s32.totalorder %s19, 0
    %p149 = por %p147, %p148
    %s150 = ssub.s32 %s21, %s35
    %p151 = scmp.eq.s32.totalorder %s150, 0
    %s153 = sadd.s32 %s152, 1
    %s154 = scalar_select %p151, %s152, %s153
    %p157 = pneg %p151
    %p158 = scmp.eq.s32.totalorder %s13, 7
    %p159 = por %p157, %p158
    %p160 = scmp.ne.s32.totalorder %s152, %s155
    %p161 = scmp.eq.s32.totalorder %s13, 0
    %p162 = por %p160, %p161
    %p163 = scmp.ne.s32.totalorder %s152, %s155
    %p164 = scmp.eq.s32.totalorder %s18, 7
    %p165 = por %p163, %p164
    %p166 = scmp.ne.s32.totalorder %s155, %s156
    %p167 = scmp.eq.s32.totalorder %s18, 0
    %p168 = por %p166, %p167
    %p169 = scmp.ne.s32.totalorder %s155, %s156
    %p170 = scmp.eq.s32.totalorder %s19, 7
    %p171 = por %p169, %p170
    %p173 = scmp.ne.s32.totalorder %s156, %s172
    %p174 = scmp.eq.s32.totalorder %s19, 0
    %p175 = por %p173, %p174
    %s176 = ssub.s32 %s22, %s31
    %p177 = scmp.eq.s32.totalorder %s176, 0
    %s179 = sadd.s32 %s178, 1
    %s180 = scalar_select %p177, %s178, %s179
    %p183 = pneg %p177
    %p184 = scmp.eq.s32.totalorder %s13, 7
    %p185 = por %p183, %p184
    %p186 = scmp.ne.s32.totalorder %s178, %s181
    %p187 = scmp.eq.s32.totalorder %s13, 0
    %p188 = por %p186, %p187
    %p189 = scmp.ne.s32.totalorder %s178, %s181
    %p190 = scmp.eq.s32.totalorder %s18, 7
    %p191 = por %p189, %p190
    %p192 = scmp.ne.s32.totalorder %s181, %s182
    %p193 = scmp.eq.s32.totalorder %s18, 0
    %p194 = por %p192, %p193
    %p195 = scmp.ne.s32.totalorder %s181, %s182
    %p196 = scmp.eq.s32.totalorder %s19, 7
    %p197 = por %p195, %p196
    %p199 = scmp.ne.s32.totalorder %s182, %s198
    %p200 = scmp.eq.s32.totalorder %s19, 0
    %p201 = por %p199, %p200
    %s202 = ssub.s32 %s22, %s31
    %p203 = scmp.eq.s32.totalorder %s202, 0
    %s205 = sadd.s32 %s204, 1
    %s206 = scalar_select %p203, %s204, %s205
    %p209 = pneg %p203
    %p210 = scmp.eq.s32.totalorder %s13, 7
    %p211 = por %p209, %p210
    %p212 = scmp.ne.s32.totalorder %s204, %s207
    %p213 = scmp.eq.s32.totalorder %s13, 0
    %p214 = por %p212, %p213
    %p215 = scmp.ne.s32.totalorder %s204, %s207
    %p216 = scmp.eq.s32.totalorder %s18, 7
    %p217 = por %p215, %p216
    %p218 = scmp.ne.s32.totalorder %s207, %s208
    %p219 = scmp.eq.s32.totalorder %s18, 0
    %p220 = por %p218, %p219
    %p221 = scmp.ne.s32.totalorder %s207, %s208
    %p222 = scmp.eq.s32.totalorder %s19, 7
    %p223 = por %p221, %p222
    %p225 = scmp.ne.s32.totalorder %s208, %s224
    %p226 = scmp.eq.s32.totalorder %s19, 0
    %p227 = por %p225, %p226
    %s228 = ssub.s32 %s20, %s39
    %s229 = ssub.s32 %s21, %s35
    %s230 = sor.u32 %s228, %s229
    %p231 = scmp.eq.s32.totalorder %s230, 0
    %s233 = sadd.s32 %s232, 1
    %s234 = scalar_select %p231, %s232, %s233
    %p237 = pneg %p231
    %p238 = scmp.eq.s32.totalorder %s13, 7
    %p239 = por %p237, %p238
    %p240 = scmp.ne.s32.totalorder %s232, %s235
    %p241 = scmp.eq.s32.totalorder %s13, 0
    %p242 = por %p240, %p241
    %p243 = scmp.ne.s32.totalorder %s232, %s235
    %p244 = scmp.eq.s32.totalorder %s18, 7
    %p245 = por %p243, %p244
    %p246 = scmp.ne.s32.totalorder %s235, %s236
    %p247 = scmp.eq.s32.totalorder %s18, 0
    %p248 = por %p246, %p247
    %p249 = scmp.ne.s32.totalorder %s235, %s236
    %p250 = scmp.eq.s32.totalorder %s19, 7
    %p251 = por %p249, %p250
    %p253 = scmp.ne.s32.totalorder %s236, %s252
    %p254 = scmp.eq.s32.totalorder %s19, 0
    %p255 = por %p253, %p254
    %p256 = scmp.le.s32.totalorder 1, %s13
    %p257 = scmp.lt.s32.totalorder %s13, 9
    %p258 = pnand %p256, %p257
    %p259 = pneg %p258
    // Predicated region
    $region9: #{_lambda_.21} parent=5 // pred_check
      _
    $region10: #{_lambda_.21} parent=5 // pred_check_branch
      %261 = sbr.rel (%p258) target = $region12
    $region11: #{_lambda_.21} parent=5 // pred_region
      %s262 = ssub.s32 %s13, 1
      // Predicated region
      $region13: #{_lambda_.21} parent=11 // pred_check
        %p263 = pneg %p142
      $region14: #{_lambda_.21} parent=11 // pred_check_branch
        %265 = sbr.rel (%p263) target = $region16
      $region15: #{_lambda_.21} parent=11 // pred_region
        %p266 = scmp.lt.s32.totalorder %s24, 0
        %s267 = scalar_select %p266, %s24, 0
        %s268 = smul.addr %s267, 8
        %s269 = scalar_lea.vmem %s3, %s268
      $region16: #{_lambda_.21} parent=11 // pred_fallthru
        _
      // Predicated region
      $region17: #{_lambda_.21} parent=11 // pred_check
        %p270 = pneg %p168
      $region18: #{_lambda_.21} parent=11 // pred_check_branch
        %272 = sbr.rel (%p270) target = $region20
      $region19: #{_lambda_.21} parent=11 // pred_region
        %p273 = scmp.lt.s32.totalorder %s24, 0
        %s274 = scalar_select %p273, %s24, 0
        %s275 = smul.addr %s274, 8
        %s276 = scalar_lea.vmem %s4, %s275
      $region20: #{_lambda_.21} parent=11 // pred_fallthru
        _
      // Predicated region
      $region21: #{_lambda_.21} parent=11 // pred_check
        %p277 = pneg %p194
      $region22: #{_lambda_.21} parent=11 // pred_check_branch
        %279 = sbr.rel (%p277) target = $region24
      $region23: #{_lambda_.21} parent=11 // pred_region
        %p280 = scmp.lt.s32.totalorder %s25, 0
        %s281 = scalar_select %p280, %s25, 0
        %s282 = smul.addr %s281, 8
        %s283 = scalar_lea.vmem %s5, %s282
      $region24: #{_lambda_.21} parent=11 // pred_fallthru
        _
      // Predicated region
      $region25: #{_lambda_.21} parent=11 // pred_check
        %p284 = pneg %p220
      $region26: #{_lambda_.21} parent=11 // pred_check_branch
        %286 = sbr.rel (%p284) target = $region28
      $region27: #{_lambda_.21} parent=11 // pred_region
        %p287 = scmp.lt.s32.totalorder %s25, 0
        %s288 = scalar_select %p287, %s25, 0
        %s289 = smul.addr %s288, 8
        %s290 = scalar_lea.vmem %s6, %s289
      $region28: #{_lambda_.21} parent=11 // pred_fallthru
        _
    $region12: #{_lambda_.21} parent=5 // pred_fallthru
      _
    %p291 = scmp.lt.s32.totalorder %s13, 8
    // Predicated region
    $region29: #{_lambda_.21} parent=5 // pred_check
      %p292 = pneg %p291
    $region30: #{_lambda_.21} parent=5 // pred_check_branch
      %294 = sbr.rel (%p292) target = $region32
    $region31: #{_lambda_.21} parent=5 // pred_region
      // Predicated region
      $region33: #{_lambda_.21} parent=31 // pred_check
        %p295 = pneg %p54
      $region34: #{_lambda_.21} parent=31 // pred_check_branch
        %297 = sbr.rel (%p295) target = $region36
      $region35: #{_lambda_.21} parent=31 // pred_region
        %p298 = scmp.lt.s32.totalorder %s20, 7
        %s299 = scalar_select %p298, %s20, 7
        %p300 = scmp.lt.s32.totalorder %s21, 0
        %s301 = scalar_select %p300, %s21, 0
        %s302 = sadd.s32 %s301, %s299
        %s303 = smul.addr %s302, 4
        %s304 = scalar_lea.vmem %s0, %s303
      $region36: #{_lambda_.21} parent=31 // pred_fallthru
        _
      // Predicated region
      $region37: #{_lambda_.21} parent=31 // pred_check
        %p305 = pneg %p82
      $region38: #{_lambda_.21} parent=31 // pred_check_branch
        %307 = sbr.rel (%p305) target = $region40
      $region39: #{_lambda_.21} parent=31 // pred_region
        %p308 = scmp.lt.s32.totalorder %s20, 7
        %s309 = scalar_select %p308, %s20, 7
        %p310 = scmp.lt.s32.totalorder %s22, 0
        %s311 = scalar_select %p310, %s22, 0
        %s312 = sadd.s32 %s311, %s309
        %s313 = smul.addr %s312, 4
        %s314 = scalar_lea.vmem %s1, %s313
      $region40: #{_lambda_.21} parent=31 // pred_fallthru
        _
      // Predicated region
      $region41: #{_lambda_.21} parent=31 // pred_check
        %p315 = pneg %p110
      $region42: #{_lambda_.21} parent=31 // pred_check_branch
        %317 = sbr.rel (%p315) target = $region44
      $region43: #{_lambda_.21} parent=31 // pred_region
        %p318 = scmp.lt.s32.totalorder %s20, 7
        %s319 = scalar_select %p318, %s20, 7
        %p320 = scmp.lt.s32.totalorder %s22, 0
        %s321 = scalar_select %p320, %s22, 0
        %s322 = sadd.s32 %s321, %s319
        %s323 = smul.addr %s322, 4
        %s324 = scalar_lea.vmem %s2, %s323
      $region44: #{_lambda_.21} parent=31 // pred_fallthru
        _
    $region32: #{_lambda_.21} parent=5 // pred_fallthru
      _
    %p325 = scmp.le.s32.totalorder 1, %s13
    %p326 = scmp.lt.s32.totalorder %s13, 9
    %p327 = pnand %p325, %p326
    %p328 = pneg %p327
    // Predicated region
    $region45: #{_lambda_.21} parent=5 // pred_check
      _
    $region46: #{_lambda_.21} parent=5 // pred_check_branch
      %330 = sbr.rel (%p327) target = $region48
    $region47: #{_lambda_.21} parent=5 // pred_region
      %s331 = ssub.s32 %s13, 1
      %p332 = scmp.lt.s32.totalorder %s23, 7
      %s333 = scalar_select %p332, %s23, 7
      %p334 = scmp.lt.s32.totalorder %s24, 0
      %s335 = scalar_select %p334, %s24, 0
      %s336 = sadd.s32 %s335, %s333
      %s337 = smul.addr %s336, 4
      %s338 = scalar_lea.vmem %s0, %s337
      %p339 = pneg %p60
      %p340 = pneg %p57
      %p341 = scmp.lt.s32.totalorder %s23, 7
      %s342 = scalar_select %p341, %s23, 7
      %p343 = scmp.lt.s32.totalorder %s25, 0
      %s344 = scalar_select %p343, %s25, 0
      %s345 = sadd.s32 %s344, %s342
      %s346 = smul.addr %s345, 4
      %s347 = scalar_lea.vmem %s1, %s346
      %p348 = pneg %p88
      %p349 = pneg %p85
      %p350 = scmp.lt.s32.totalorder %s23, 7
      %s351 = scalar_select %p350, %s23, 7
      %p352 = scmp.lt.s32.totalorder %s25, 0
      %s353 = scalar_select %p352, %s25, 0
      %s354 = sadd.s32 %s353, %s351
      %s355 = smul.addr %s354, 4
      %s356 = scalar_lea.vmem %s2, %s355
      %p357 = pneg %p116
      %p358 = pneg %p113
      %p359 = scmp.lt.s32.totalorder %s24, 0
      %s360 = scalar_select %p359, %s24, 0
      %s361 = smul.addr %s360, 8
      %s362 = scalar_lea.vmem %s3, %s361
      %p363 = pneg %p142
      %p364 = pneg %p139
      %p365 = scmp.lt.s32.totalorder %s24, 0
      %s366 = scalar_select %p365, %s24, 0
      %s367 = smul.addr %s366, 8
      %s368 = scalar_lea.vmem %s4, %s367
      %p369 = pneg %p168
      %p370 = pneg %p165
      %p371 = scmp.lt.s32.totalorder %s25, 0
      %s372 = scalar_select %p371, %s25, 0
      %s373 = smul.addr %s372, 8
      %s374 = scalar_lea.vmem %s5, %s373
      %p375 = pneg %p194
      %p376 = pneg %p191
      %p377 = scmp.lt.s32.totalorder %s25, 0
      %s378 = scalar_select %p377, %s25, 0
      %s379 = smul.addr %s378, 8
      %s380 = scalar_lea.vmem %s6, %s379
      %p381 = pneg %p220
      %p382 = pneg %p217
      %p383 = pneg %p248
      %p384 = pneg %p245
      %p385 = scmp.lt.s32.totalorder %s23, 7
      %s386 = scalar_select %p385, %s23, 7
      %p387 = scmp.lt.s32.totalorder %s24, 0
      %s388 = scalar_select %p387, %s24, 0
      %s389 = sadd.s32 %s388, %s386
      %s390 = smul.addr %s389, 4
      %s391 = scalar_lea.vmem %s7, %s390
      %p392 = scmp.lt.s32.totalorder %s23, 7
      %s393 = scalar_select %p392, %s23, 7
      %p394 = scmp.lt.s32.totalorder %s24, 0
      %s395 = scalar_select %p394, %s24, 0
      %s396 = sadd.s32 %s395, %s393
      %s397 = smul.addr %s396, 4
      %s398 = scalar_lea.vmem %s0, %s397
      %p399 = scmp.lt.s32.totalorder %s23, 7
      %s400 = scalar_select %p399, %s23, 7
      %p401 = scmp.lt.s32.totalorder %s25, 0
      %s402 = scalar_select %p401, %s25, 0
      %s403 = sadd.s32 %s402, %s400
      %s404 = smul.addr %s403, 4
      %s405 = scalar_lea.vmem %s1, %s404
      %p406 = scmp.lt.s32.totalorder %s23, 7
      %s407 = scalar_select %p406, %s23, 7
      %p408 = scmp.lt.s32.totalorder %s25, 0
      %s409 = scalar_select %p408, %s25, 0
      %s410 = sadd.s32 %s409, %s407
      %s411 = smul.addr %s410, 4
      %s412 = scalar_lea.vmem %s2, %s411
      %p413 = scmp.lt.s32.totalorder %s24, 0
      %s414 = scalar_select %p413, %s24, 0
      %s415 = smul.addr %s414, 8
      %s416 = scalar_lea.vmem %s3, %s415
      %p417 = scmp.lt.s32.totalorder %s24, 0
      %s418 = scalar_select %p417, %s24, 0
      %s419 = smul.addr %s418, 8
      %s420 = scalar_lea.vmem %s4, %s419
      %p421 = scmp.lt.s32.totalorder %s25, 0
      %s422 = scalar_select %p421, %s25, 0
      %s423 = smul.addr %s422, 8
      %s424 = scalar_lea.vmem %s5, %s423
      %p425 = scmp.lt.s32.totalorder %s25, 0
      %s426 = scalar_select %p425, %s25, 0
      %s427 = smul.addr %s426, 8
      %s428 = scalar_lea.vmem %s6, %s427
      %p429 = scmp.lt.s32.totalorder %s23, 7
      %s430 = scalar_select %p429, %s23, 7
      %p431 = scmp.lt.s32.totalorder %s24, 0
      %s432 = scalar_select %p431, %s24, 0
      %s433 = sadd.s32 %s432, %s430
      %s434 = smul.addr %s433, 4
      %s435 = scalar_lea.vmem %s7, %s434
      %s437 = smul.u32 %s24, 8
      %s438 = smul.u32 %s25, 8
      %p439 = scmp.eq.s32.totalorder %s25, 0
      // Predicated region
      $region49: #{_lambda_.21} parent=47 // pred_check
        %p440 = pneg %p439
      $region50: #{_lambda_.21} parent=47 // pred_check_branch
        %442 = sbr.rel (%p440) target = $region52
      $region51: #{_lambda_.21} parent=47 // pred_region
        %vm443 = vcmask 7168
        %444 = vst.msk [vmem:[#allocation2] sm:$0xff] %vm443, -1e+30
        %445 = vst.msk [vmem:[#allocation3] sm:$0xff] %vm443, 0.0
        %vm446 = vcmask 64512
        %447 = vst.msk [vmem:[#allocation4] sm:$0xff] %vm446, 0.0
      $region52: #{_lambda_.21} parent=47 // pred_fallthru
        _
      %s448 = sadd.s32 %s437, 7
      %p449 = scmp.le.s32.totalorder %s438, %s448
      // Predicated region
      $region53: #{_lambda_.21} parent=47 // pred_check
        %p450 = pneg %p449
      $region54: #{_lambda_.21} parent=47 // pred_check_branch
        %452 = sbr.rel (%p450) target = $region56
      $region55: #{_lambda_.21} parent=47 // pred_region
        %v453 = vld [vmem:[%s398] sm:$0xf]
        %v454 = vunpack.c.l.bf16 %v453
        %v455 = vld [vmem:[%s416] sm:$0xff]
        %v456 = vld [vmem:[%s420] sm:$0xff]
        %458 = vrot.lane.b32.xlu0 %v454, 124
        %v459 = vpop.permute.xlu0 %458
        %461 = vrot.lane.b32.xlu0 %v454, 4
        %v462 = vpop.permute.xlu0 %461
        %vm464 = vcmask 31744
        %v465 = vsel %vm464, %v459, %v462
        %v466 = vmul.f32 %v454, %v455
        %v467 = vmul.f32 %v465, %v456
        %v468 = vadd.f32 %v466, %v467
        %v469 = vld [vmem:[%s405] sm:$0xf]
        %v470 = vunpack.c.l.bf16 %v469
        %v471 = vld [vmem:[%s424] sm:$0xff]
        %v472 = vld [vmem:[%s428] sm:$0xff]
        %474 = vrot.lane.b32.xlu0 %v470, 124
        %v475 = vpop.permute.xlu0 %474
        %477 = vrot.lane.b32.xlu0 %v470, 4
        %v478 = vpop.permute.xlu0 %477
        %v480 = vsel %vm464, %v475, %v478
        %v481 = vmul.f32 %v470, %v471
        %v482 = vmul.f32 %v480, %v472
        %v483 = vadd.f32 %v481, %v482
        %v484 = vpack.c.bf16 %v468, %v468
        %v485 = vpack.c.bf16 %v483, %v483
        %vm486 = vcmask 64512
        %v488 = vsel %vm486, %v484, 0
        %v491 = vsel %vm486, %v485, 0
        %493 = vmatprep.subr.bf16.mxu0 0
        %494 = vmatpush1.bf16.xpose.msra.mxu0 %v491
        %495 = vmatprep.subr.bf16.mxu0 0
        %496 = vmatpush1.bf16.xpose.msra.mxu0 0
        %497 = vmatprep.subr.bf16.mxu0 0
        %498 = vmatpush1.bf16.xpose.msra.mxu0 0
        %499 = vmatprep.subr.bf16.mxu0 0
        %500 = vmatpush1.bf16.xpose.msra.mxu0 0
        %501 = vmatprep.subr.bf16.mxu0 0
        %502 = vmatpush1.bf16.xpose.msra.mxu0 0
        %503 = vmatprep.subr.bf16.mxu0 0
        %504 = vmatpush1.bf16.xpose.msra.mxu0 0
        %505 = vmatprep.subr.bf16.mxu0 0
        %506 = vmatpush1.bf16.xpose.msra.mxu0 0
        %507 = vmatprep.subr.bf16.mxu0 0
        %508 = vmatpush1.bf16.xpose.msra.mxu0 0
        %509 = vmatprep.subr.bf16.mxu0 0
        %510 = vmatpush1.bf16.xpose.msra.mxu0 0
        %511 = vmatprep.subr.bf16.mxu0 0
        %512 = vmatpush1.bf16.xpose.msra.mxu0 0
        %513 = vmatprep.subr.bf16.mxu0 0
        %514 = vmatpush1.bf16.xpose.msra.mxu0 0
        %515 = vmatprep.subr.bf16.mxu0 0
        %516 = vmatpush1.bf16.xpose.msra.mxu0 0
        %517 = vmatprep.subr.bf16.mxu0 0
        %518 = vmatpush1.bf16.xpose.msra.mxu0 0
        %519 = vmatprep.subr.bf16.mxu0 0
        %520 = vmatpush1.bf16.xpose.msra.mxu0 0
        %521 = vmatprep.subr.bf16.mxu0 0
        %522 = vmatpush1.bf16.xpose.msra.mxu0 0
        %523 = vmatprep.subr.bf16.mxu0 0
        %524 = vmatpush1.bf16.xpose.msra.mxu0 0
        %525 = vmatprep.mubr.bf16.mxu0 0
        %526 = vmatmul.mubr.bf16.gmra.mrb[0].mxu0 %v488
        %v527 = vpop.f32.mrb[0].mxu0
        %v528 = vadd.f32 0.0, %v527
        %v529 = vpop.f32.mrb[0].mxu0
        %v530 = vpop.f32.mrb[0].mxu0
        %v531 = vpop.f32.mrb[0].mxu0
        %532 = vdwg.mxu0
        %v533 = vmul.f32 %v528, 0.35355338
        %v534 = vlaneseq
        %v535 = vshrl.u32 %v534, 7
        %v536 = vstv %s437
        %v537 = vadd.s32 %v536, %v535
        %v538 = vlaneseq
        %v539 = vand.u32 %v538, 127
        %v540 = vstv %s438
        %v541 = vadd.s32 %v540, %v539
        %vm542 = vcmp.ge.s32.totalorder %v537, %v541
        %v543 = vsel %vm542, %v533, -1e+30
        %v544 = vld [vmem:[#allocation2] sm:$0xff]
        %v545 = vsel %vm486, %v543, -inf
        %546 = vmax.xlane.f32.xlu0 %v545
        %v547 = vpop.xlane.xlu0 %546
        %v548 = vmax.f32 %v544, %v547
        %v549 = vsub.f32 %v544, %v548
        %v550 = vmul.f32 %v549, 1.442695
        %v551 = vpow.pop %v550
        %553 = vset.pattern.permute.xlu0 0
        %554 = vperm.xlu0 %553, %v548
        %v555 = vpop.permute.xlu0 %554
        %v557 = vsub.f32 %v543, %v555
        %v558 = vmul.f32 %v557, 1.442695
        %v559 = vpow.pop %v558
        %v560 = vsel %vm542, %v559, 0.0
        %v561 = vld [vmem:[#allocation3] sm:$0xff]
        %v562 = vmul.f32 %v551, %v561
        %v563 = vsel %vm486, %v560, 0.0
        %564 = vadd.xlane.f32.xlu0 %v563
        %v565 = vpop.xlane.xlu0 %564
        %v566 = vadd.f32 %v562, %v565
        %vm567 = vcmask 7168
        %568 = vst.msk [vmem:[#allocation3] sm:$0xff] %vm567, %v566
        %v569 = vld [vmem:[#allocation4] sm:$0xff]
        %571 = vset.pattern.permute.xlu0 0
        %572 = vperm.xlu0 %571, %v551
        %v573 = vpop.permute.xlu0 %572
        %v575 = vmul.f32 %v573, %v569
        %v576 = vpack.c.bf16 %v560, %v560
        %v577 = vld [vmem:[%s412] sm:$0xf]
        %v579 = vsel %vm486, %v576, 0
        %vm581 = vcmask 1043456
        %v583 = vsel %vm581, %v577, 0
        %585 = vmatprep.subr.bf16.mxu0 0
        %586 = vmatpush1.bf16.msra.mxu0 %v583
        %587 = vmatprep.subr.bf16.mxu0 0
        %588 = vmatpush1.bf16.msra.mxu0 0
        %589 = vmatprep.subr.bf16.mxu0 0
        %590 = vmatpush1.bf16.msra.mxu0 0
        %591 = vmatprep.subr.bf16.mxu0 0
        %592 = vmatpush1.bf16.msra.mxu0 0
        %593 = vmatprep.subr.bf16.mxu0 0
        %594 = vmatpush1.bf16.msra.mxu0 0
        %595 = vmatprep.subr.bf16.mxu0 0
        %596 = vmatpush1.bf16.msra.mxu0 0
        %597 = vmatprep.subr.bf16.mxu0 0
        %598 = vmatpush1.bf16.msra.mxu0 0
        %599 = vmatprep.subr.bf16.mxu0 0
        %600 = vmatpush1.bf16.msra.mxu0 0
        %601 = vmatprep.subr.bf16.mxu0 0
        %602 = vmatpush1.bf16.msra.mxu0 0
        %603 = vmatprep.subr.bf16.mxu0 0
        %604 = vmatpush1.bf16.msra.mxu0 0
        %605 = vmatprep.subr.bf16.mxu0 0
        %606 = vmatpush1.bf16.msra.mxu0 0
        %607 = vmatprep.subr.bf16.mxu0 0
        %608 = vmatpush1.bf16.msra.mxu0 0
        %609 = vmatprep.subr.bf16.mxu0 0
        %610 = vmatpush1.bf16.msra.mxu0 0
        %611 = vmatprep.subr.bf16.mxu0 0
        %612 = vmatpush1.bf16.msra.mxu0 0
        %613 = vmatprep.subr.bf16.mxu0 0
        %614 = vmatpush1.bf16.msra.mxu0 0
        %615 = vmatprep.subr.bf16.mxu0 0
        %616 = vmatpush1.bf16.msra.mxu0 0
        %617 = vmatprep.mubr.bf16.mxu0 0
        %618 = vmatmul.mubr.bf16.gmra.mrb[0].mxu0 %v579
        %v619 = vpop.f32.mrb[0].mxu0
        %v620 = vadd.f32 0.0, %v619
        %v621 = vpop.f32.mrb[0].mxu0
        %v622 = vpop.f32.mrb[0].mxu0
        %v623 = vpop.f32.mrb[0].mxu0
        %624 = vdwg.mxu0
        %v625 = vadd.f32 %v575, %v620
        %626 = vst.msk [vmem:[#allocation4] sm:$0xff] %vm486, %v625
        %627 = vst.msk [vmem:[#allocation2] sm:$0xff] %vm567, %v548
      $region56: #{_lambda_.21} parent=47 // pred_fallthru
        _
      // Predicated region
      $region57: #{_lambda_.21} parent=47 // pred_check
        %p628 = pneg %p439
      $region58: #{_lambda_.21} parent=47 // pred_check_branch
        %630 = sbr.rel (%p628) target = $region60
      $region59: #{_lambda_.21} parent=47 // pred_region
        %v631 = vld [vmem:[#allocation4] sm:$0xff]
        %v632 = vld [vmem:[#allocation3] sm:$0xff]
        %v633 = vrcp.pop %v632
        %635 = vset.pattern.permute.xlu0 0
        %636 = vperm.xlu0 %635, %v633
        %v637 = vpop.permute.xlu0 %636
        %v639 = vmul.f32 %v631, %v637
        %v640 = vpack.c.bf16 %v639, %v639
        %vm641 = vcmask 60416
        %642 = vst.msk [vmem:[%s435] sm:$0xf] %vm641, %v640
      $region60: #{_lambda_.21} parent=47 // pred_fallthru
        _
      %p643 = scmp.lt.s32.totalorder %s23, 7
      %s644 = scalar_select %p643, %s23, 7
      %p645 = scmp.lt.s32.totalorder %s24, 0
      %s646 = scalar_select %p645, %s24, 0
      %s647 = sadd.s32 %s646, %s644
      %s648 = smul.addr %s647, 4
      %s649 = scalar_lea.vmem %s7, %s648
      // Predicated region
      $region61: #{_lambda_.21} parent=47 // pred_check
        %p650 = pneg %p245
      $region62: #{_lambda_.21} parent=47 // pred_check_branch
        %652 = sbr.rel (%p650) target = $region64
      $region63: #{_lambda_.21} parent=47 // pred_region
        _
      $region64: #{_lambda_.21} parent=47 // pred_fallthru
        _
    $region48: #{_lambda_.21} parent=5 // pred_fallthru
      _
    %p653 = scmp.le.s32.totalorder 2, %s13
    // Predicated region
    $region65: #{_lambda_.21} parent=5 // pred_check
      %p654 = pneg %p653
    $region66: #{_lambda_.21} parent=5 // pred_check_branch
      %656 = sbr.rel (%p654) target = $region68
    $region67: #{_lambda_.21} parent=5 // pred_region
      %s657 = ssub.s32 %s13, 2
      // Predicated region
      $region69: #{_lambda_.21} parent=67 // pred_check
        %p658 = pneg %p251
      $region70: #{_lambda_.21} parent=67 // pred_check_branch
        %660 = sbr.rel (%p658) target = $region72
      $region71: #{_lambda_.21} parent=67 // pred_region
        %p661 = scmp.lt.s32.totalorder %s26, 7
        %s662 = scalar_select %p661, %s26, 7
        %p663 = scmp.lt.s32.totalorder %s27, 0
        %s664 = scalar_select %p663, %s27, 0
        %s665 = sadd.s32 %s664, %s662
        %s666 = smul.addr %s665, 4
        %s667 = scalar_lea.vmem %s7, %s666
      $region72: #{_lambda_.21} parent=67 // pred_fallthru
        _
    $region68: #{_lambda_.21} parent=5 // pred_fallthru
      _
  $region6: #{_lambda_.21} parent=0 // loop_footer
    %s17 = sadd.s32 1, %s13
  $region7: #{_lambda_.21} parent=0 // loop_footer_branch
    %12 = sbr.rel target = $region3
  $region8: #{_lambda_.21} parent=0 // loop_exit
    _

// kernel: _lambda_.23
$region0: #{_lambda_.23}
  #allocation0 [shape = 'u32[]', space=smem, size = 0x4, offset = 0x4, fixed_abs, tag = 'smem constant byte address 0x4 - core index']
  #allocation1 [shape = 'u32[144,128]{1,0:T(1,128)}', space=vmem, size = 0x12000, scoped, tag = 'internal scratch']
  %s0 = inlined_call_operand.vmem [shape: bf16[16,32], index: 0, kind: input, shape index: {}]
  %s1 = inlined_call_operand.vmem [shape: f32[1,32], index: 1, kind: input, shape index: {}]
  %s2 = inlined_call_operand.vmem [shape: bf16[32,64], index: 2, kind: input, shape index: {}]
  %s3 = inlined_call_operand.vmem [shape: bf16[32,64], index: 3, kind: input, shape index: {}]
  %s4 = inlined_call_operand.vmem [shape: bf16[16,64], index: 4, kind: output, shape index: {}]
  %s5 = sld [smem:[#allocation0]]
  $region26: #{_lambda_.23} parent=0
    _
  %s7 = ssub.s32 1, %s5
  %s8 = scalar_select 0, %s7, %s5
  // Predicated region
  $region2: #{_lambda_.23} parent=0 // pred_check
    _
  $region3: #{_lambda_.23} parent=0 // pred_check_branch
    %10 = sbr.rel (0) target = $region5
  $region4: #{_lambda_.23} parent=0 // pred_region
    _
  $region5: #{_lambda_.23} parent=0 // pred_fallthru
    _
  // Predicated region
  $region6: #{_lambda_.23} parent=0 // pred_check
    _
  $region7: #{_lambda_.23} parent=0 // pred_check_branch
    %12 = sbr.rel (0) target = $region9
  $region8: #{_lambda_.23} parent=0 // pred_region
    _
  $region9: #{_lambda_.23} parent=0 // pred_fallthru
    _
  // Predicated region
  $region10: #{_lambda_.23} parent=0 // pred_check
    _
  $region11: #{_lambda_.23} parent=0 // pred_check_branch
    %14 = sbr.rel (0) target = $region13
  $region12: #{_lambda_.23} parent=0 // pred_region
    _
  $region13: #{_lambda_.23} parent=0 // pred_fallthru
    _
  // Predicated region
  $region14: #{_lambda_.23} parent=0 // pred_check
    _
  $region15: #{_lambda_.23} parent=0 // pred_check_branch
    %16 = sbr.rel (0) target = $region17
  $region16: #{_lambda_.23} parent=0 // pred_region
    _
  $region17: #{_lambda_.23} parent=0 // pred_fallthru
    _
  %v18 = vld [vmem:[%s0] sm:$0xf]
  %v19 = vld [vmem:[%s0 + $0x4] sm:$0xf]
  %v20 = vunpack.c.l.bf16 %v18
  %v21 = vunpack.c.l.bf16 %v19
  %v22 = vld [vmem:[%s1] sm:$0x1]
  %v23 = vmul.f32 %v20, %v20
  %v24 = vmul.f32 %v21, %v21
  %vm25 = vcmask 261120
  %v26 = vsel %vm25, %v23, 0.0
  %27 = vadd.xlane.f32.xlu0 %v26
  %v28 = vpop.xlane.xlu0 %27
  %v29 = vsel %vm25, %v24, 0.0
  %30 = vadd.xlane.f32.xlu0 %v29
  %v31 = vpop.xlane.xlu0 %30
  %v32 = vrcp.pop 32.0
  %v33 = vmul.f32 %v28, %v32
  %v34 = vmul.f32 %v31, %v32
  %v35 = vadd.f32 %v33, 1e-06
  %v36 = vadd.f32 %v34, 1e-06
  %v37 = vrsqrt.pop %v35
  %v38 = vrsqrt.pop %v36
  %v39 = vmul.f32 %v20, %v37
  %v40 = vmul.f32 %v21, %v38
  %v42 = vlaneseq
  %v43 = vshrl.u32 %v42, 7
  %v44 = vsub.s32 0, %v43
  %v45 = vrot.slane %v22, %v44
  %v47 = vmul.f32 %v39, %v45
  %v48 = vmul.f32 %v40, %v45
  %v49 = vpack.c.bf16 %v48, %v47
  %v50 = vld [vmem:[%s2] sm:$0xf]
  %v51 = vld [vmem:[%s2 + $0x4] sm:$0xf]
  %v52 = vld [vmem:[%s2 + $0x8] sm:$0xf]
  %v53 = vld [vmem:[%s2 + $0xc] sm:$0xf]
  %v58 = vunpack.c.l.b16 %v50
  %v59 = vunpack.c.l.b16 %v51
  %v60 = vunpack.c.l.b16 %v52
  %v61 = vunpack.c.l.b16 %v53
  %v62 = vpack.c.b16 %v59, %v58
  %v63 = vpack.c.b16 %v61, %v60
  %v67 = vsel %vm25, %v49, 0
  %69 = vmatprep.subr.bf16.mxu0 0
  %70 = vmatpush1.bf16.msra.mxu0 %v62
  %71 = vmatprep.subr.bf16.mxu0 0
  %72 = vmatpush1.bf16.msra.mxu0 %v63
  %73 = vmatprep.subr.bf16.mxu0 0
  %74 = vmatpush1.bf16.msra.mxu0 0
  %75 = vmatprep.subr.bf16.mxu0 0
  %76 = vmatpush1.bf16.msra.mxu0 0
  %77 = vmatprep.subr.bf16.mxu0 0
  %78 = vmatpush1.bf16.msra.mxu0 0
  %79 = vmatprep.subr.bf16.mxu0 0
  %80 = vmatpush1.bf16.msra.mxu0 0
  %81 = vmatprep.subr.bf16.mxu0 0
  %82 = vmatpush1.bf16.msra.mxu0 0
  %83 = vmatprep.subr.bf16.mxu0 0
  %84 = vmatpush1.bf16.msra.mxu0 0
  %85 = vmatprep.subr.bf16.mxu0 0
  %86 = vmatpush1.bf16.msra.mxu0 0
  %87 = vmatprep.subr.bf16.mxu0 0
  %88 = vmatpush1.bf16.msra.mxu0 0
  %89 = vmatprep.subr.bf16.mxu0 0
  %90 = vmatpush1.bf16.msra.mxu0 0
  %91 = vmatprep.subr.bf16.mxu0 0
  %92 = vmatpush1.bf16.msra.mxu0 0
  %93 = vmatprep.subr.bf16.mxu0 0
  %94 = vmatpush1.bf16.msra.mxu0 0
  %95 = vmatprep.subr.bf16.mxu0 0
  %96 = vmatpush1.bf16.msra.mxu0 0
  %97 = vmatprep.subr.bf16.mxu0 0
  %98 = vmatpush1.bf16.msra.mxu0 0
  %99 = vmatprep.subr.bf16.mxu0 0
  %100 = vmatpush1.bf16.msra.mxu0 0
  %101 = vmatprep.mubr.bf16.mxu0 0
  %102 = vmatmul.mubr.bf16.gmra.mrb[0].mxu0 %v67
  %v103 = vpop.f32.mrb[0].mxu0
  %v104 = vadd.f32 0.0, %v103
  %v105 = vpop.f32.mrb[0].mxu0
  %v106 = vpop.f32.mrb[0].mxu0
  %v107 = vadd.f32 0.0, %v106
  %v108 = vpop.f32.mrb[0].mxu0
  %109 = vdwg.mxu0
  %v110 = vld [vmem:[%s3] sm:$0xf]
  %v111 = vld [vmem:[%s3 + $0x4] sm:$0xf]
  %v112 = vld [vmem:[%s3 + $0x8] sm:$0xf]
  %v113 = vld [vmem:[%s3 + $0xc] sm:$0xf]
  %v118 = vunpack.c.l.b16 %v110
  %v119 = vunpack.c.l.b16 %v111
  %v120 = vunpack.c.l.b16 %v112
  %v121 = vunpack.c.l.b16 %v113
  %v122 = vpack.c.b16 %v119, %v118
  %v123 = vpack.c.b16 %v121, %v120
  %126 = vmatprep.subr.bf16.mxu0 0
  %127 = vmatpush1.bf16.msra.mxu0 %v122
  %128 = vmatprep.subr.bf16.mxu0 0
  %129 = vmatpush1.bf16.msra.mxu0 %v123
  %130 = vmatprep.subr.bf16.mxu0 0
  %131 = vmatpush1.bf16.msra.mxu0 0
  %132 = vmatprep.subr.bf16.mxu0 0
  %133 = vmatpush1.bf16.msra.mxu0 0
  %134 = vmatprep.subr.bf16.mxu0 0
  %135 = vmatpush1.bf16.msra.mxu0 0
  %136 = vmatprep.subr.bf16.mxu0 0
  %137 = vmatpush1.bf16.msra.mxu0 0
  %138 = vmatprep.subr.bf16.mxu0 0
  %139 = vmatpush1.bf16.msra.mxu0 0
  %140 = vmatprep.subr.bf16.mxu0 0
  %141 = vmatpush1.bf16.msra.mxu0 0
  %142 = vmatprep.subr.bf16.mxu0 0
  %143 = vmatpush1.bf16.msra.mxu0 0
  %144 = vmatprep.subr.bf16.mxu0 0
  %145 = vmatpush1.bf16.msra.mxu0 0
  %146 = vmatprep.subr.bf16.mxu0 0
  %147 = vmatpush1.bf16.msra.mxu0 0
  %148 = vmatprep.subr.bf16.mxu0 0
  %149 = vmatpush1.bf16.msra.mxu0 0
  %150 = vmatprep.subr.bf16.mxu0 0
  %151 = vmatpush1.bf16.msra.mxu0 0
  %152 = vmatprep.subr.bf16.mxu0 0
  %153 = vmatpush1.bf16.msra.mxu0 0
  %154 = vmatprep.subr.bf16.mxu0 0
  %155 = vmatpush1.bf16.msra.mxu0 0
  %156 = vmatprep.subr.bf16.mxu0 0
  %157 = vmatpush1.bf16.msra.mxu0 0
  %158 = vmatprep.mubr.bf16.mxu0 0
  %159 = vmatmul.mubr.bf16.gmra.mrb[0].mxu0 %v67
  %v160 = vpop.f32.mrb[0].mxu0
  %v161 = vadd.f32 0.0, %v160
  %v162 = vpop.f32.mrb[0].mxu0
  %v163 = vpop.f32.mrb[0].mxu0
  %v164 = vadd.f32 0.0, %v163
  %v165 = vpop.f32.mrb[0].mxu0
  %166 = vdwg.mxu0
  %v167 = vxor.u32 %v104, 2147483648
  %v168 = vxor.u32 %v107, 2147483648
  %v169 = vmul.f32 %v167, 1.442695
  %v170 = vpow.pop %v169
  %v171 = vmul.f32 %v168, 1.442695
  %v172 = vpow.pop %v171
  %v173 = vadd.f32 %v170, 1.0
  %v174 = vadd.f32 %v172, 1.0
  %v175 = vrcp.pop %v173
  %v176 = vmul.f32 1.0, %v175
  %v177 = vrcp.pop %v174
  %v178 = vmul.f32 1.0, %v177
  %v179 = vmul.f32 %v104, %v176
  %v180 = vmul.f32 %v107, %v178
  %v181 = vmul.f32 %v179, %v161
  %v182 = vmul.f32 %v180, %v164
  %v183 = vpack.c.bf16 %v182, %v181
  %v185 = vunpack.c.l.b16 %v183
  %v186 = vunpack.c.h.b16 %v183
  %v187 = vpack.c.b16 %v185, %v185
  %v188 = vpack.c.b16 %v186, %v186
  %vm191 = vcmask 519168
  %192 = vst.msk [vmem:[%s4] sm:$0xf] %vm191, %v187
  %193 = vst.msk [vmem:[%s4 + $0x4] sm:$0xf] %vm191, %v188
  // Predicated region
  $region18: #{_lambda_.23} parent=0 // pred_check
    _
  $region19: #{_lambda_.23} parent=0 // pred_check_branch
    %195 = sbr.rel (0) target = $region21
  $region20: #{_lambda_.23} parent=0 // pred_region
    _
  $region21: #{_lambda_.23} parent=0 // pred_fallthru
    _
  // Predicated region
  $region22: #{_lambda_.23} parent=0 // pred_check
    _
  $region23: #{_lambda_.23} parent=0 // pred_check_branch
    %197 = sbr.rel (0) target = $region25
  $region24: #{_lambda_.23} parent=0 // pred_region
    _
  $region25: #{_lambda_.23} parent=0 // pred_fallthru
    _

// kernel: _lambda_.24
$region0: #{_lambda_.24}
  #allocation0 [shape = 'u32[]', space=smem, size = 0x4, offset = 0x4, fixed_abs, tag = 'smem constant byte address 0x4 - core index']
  #allocation1 [shape = 'u32[144,128]{1,0:T(1,128)}', space=vmem, size = 0x12000, scoped, tag = 'internal scratch']
  #allocation2 [shape = 'f32[16,32]{1,0:T(8,128)}', space=vmem, size = 0x2000, scoped, tag = 'scratch operand']
  %s0 = inlined_call_operand.vmem [shape: bf16[16,64], index: 0, kind: input, shape index: {}]
  %s1 = inlined_call_operand.vmem [shape: bf16[64,32], index: 1, kind: input, shape index: {}]
  %s2 = inlined_call_operand.vmem [shape: bf16[16,32], index: 2, kind: input, shape index: {}]
  %s3 = inlined_call_operand.vmem [shape: bf16[16,32], index: 3, kind: output, shape index: {}]
  %s4 = sld [smem:[#allocation0]]
  $region30: #{_lambda_.24} parent=0
    _
  %s6 = ssub.s32 1, %s4
  %s7 = scalar_select 0, %s6, %s4
  // Predicated region
  $region2: #{_lambda_.24} parent=0 // pred_check
    _
  $region3: #{_lambda_.24} parent=0 // pred_check_branch
    %9 = sbr.rel (0) target = $region5
  $region4: #{_lambda_.24} parent=0 // pred_region
    _
  $region5: #{_lambda_.24} parent=0 // pred_fallthru
    _
  // Predicated region
  $region6: #{_lambda_.24} parent=0 // pred_check
    _
  $region7: #{_lambda_.24} parent=0 // pred_check_branch
    %11 = sbr.rel (0) target = $region9
  $region8: #{_lambda_.24} parent=0 // pred_region
    _
  $region9: #{_lambda_.24} parent=0 // pred_fallthru
    _
  // Predicated region
  $region10: #{_lambda_.24} parent=0 // pred_check
    _
  $region11: #{_lambda_.24} parent=0 // pred_check_branch
    %13 = sbr.rel (0) target = $region13
  $region12: #{_lambda_.24} parent=0 // pred_region
    _
  $region13: #{_lambda_.24} parent=0 // pred_fallthru
    _
  %p15 = scmp.eq.s32.totalorder 0, 0
  // Predicated region
  $region14: #{_lambda_.24} parent=0 // pred_check
    %p16 = pneg %p15
  $region15: #{_lambda_.24} parent=0 // pred_check_branch
    %18 = sbr.rel (%p16) target = $region17
  $region16: #{_lambda_.24} parent=0 // pred_region
    %vm19 = vcmask 261120
    %20 = vst.msk [vmem:[#allocation2] sm:$0xff] %vm19, 0.0
    %21 = vst.msk [vmem:[#allocation2 + $0x8] sm:$0xff] %vm19, 0.0
  $region17: #{_lambda_.24} parent=0 // pred_fallthru
    _
  %v22 = vld [vmem:[#allocation2] sm:$0xff]
  %v23 = vld [vmem:[#allocation2 + $0x8] sm:$0xff]
  %v24 = vld [vmem:[%s0] sm:$0xf]
  %v25 = vld [vmem:[%s0 + $0x4] sm:$0xf]
  %v26 = vld [vmem:[%s1] sm:$0xf]
  %v27 = vld [vmem:[%s1 + $0x4] sm:$0xf]
  %v28 = vld [vmem:[%s1 + $0x8] sm:$0xf]
  %v29 = vld [vmem:[%s1 + $0xc] sm:$0xf]
  %v30 = vld [vmem:[%s1 + $0x10] sm:$0xf]
  %v31 = vld [vmem:[%s1 + $0x14] sm:$0xf]
  %v32 = vld [vmem:[%s1 + $0x18] sm:$0xf]
  %v33 = vld [vmem:[%s1 + $0x1c] sm:$0xf]
  %v36 = vunpack.c.l.b16 %v24
  %v37 = vunpack.c.l.b16 %v25
  %v38 = vpack.c.b16 %v37, %v36
  %v47 = vunpack.c.l.b16 %v26
  %v48 = vunpack.c.l.b16 %v27
  %v49 = vunpack.c.l.b16 %v28
  %v50 = vunpack.c.l.b16 %v29
  %v51 = vunpack.c.l.b16 %v30
  %v52 = vunpack.c.l.b16 %v31
  %v53 = vunpack.c.l.b16 %v32
  %v54 = vunpack.c.l.b16 %v33
  %v55 = vpack.c.b16 %v48, %v47
  %v56 = vpack.c.b16 %v50, %v49
  %v57 = vpack.c.b16 %v52, %v51
  %v58 = vpack.c.b16 %v54, %v53
  %vm63 = vcmask 523264
  %v65 = vsel %vm63, %v38, 0
  %67 = vmatprep.subr.bf16.mxu0 0
  %68 = vmatpush1.bf16.msra.mxu0 %v55
  %69 = vmatprep.subr.bf16.mxu0 0
  %70 = vmatpush1.bf16.msra.mxu0 %v56
  %71 = vmatprep.subr.bf16.mxu0 0
  %72 = vmatpush1.bf16.msra.mxu0 %v57
  %73 = vmatprep.subr.bf16.mxu0 0
  %74 = vmatpush1.bf16.msra.mxu0 %v58
  %75 = vmatprep.subr.bf16.mxu0 0
  %76 = vmatpush1.bf16.msra.mxu0 0
  %77 = vmatprep.subr.bf16.mxu0 0
  %78 = vmatpush1.bf16.msra.mxu0 0
  %79 = vmatprep.subr.bf16.mxu0 0
  %80 = vmatpush1.bf16.msra.mxu0 0
  %81 = vmatprep.subr.bf16.mxu0 0
  %82 = vmatpush1.bf16.msra.mxu0 0
  %83 = vmatprep.subr.bf16.mxu0 0
  %84 = vmatpush1.bf16.msra.mxu0 0
  %85 = vmatprep.subr.bf16.mxu0 0
  %86 = vmatpush1.bf16.msra.mxu0 0
  %87 = vmatprep.subr.bf16.mxu0 0
  %88 = vmatpush1.bf16.msra.mxu0 0
  %89 = vmatprep.subr.bf16.mxu0 0
  %90 = vmatpush1.bf16.msra.mxu0 0
  %91 = vmatprep.subr.bf16.mxu0 0
  %92 = vmatpush1.bf16.msra.mxu0 0
  %93 = vmatprep.subr.bf16.mxu0 0
  %94 = vmatpush1.bf16.msra.mxu0 0
  %95 = vmatprep.subr.bf16.mxu0 0
  %96 = vmatpush1.bf16.msra.mxu0 0
  %97 = vmatprep.subr.bf16.mxu0 0
  %98 = vmatpush1.bf16.msra.mxu0 0
  %99 = vmatprep.mubr.bf16.mxu0 0
  %100 = vmatmul.mubr.bf16.gmra.mrb[0].mxu0 %v65
  %v101 = vpop.f32.mrb[0].mxu0
  %v102 = vadd.f32 0.0, %v101
  %v103 = vpop.f32.mrb[0].mxu0
  %v104 = vpop.f32.mrb[0].mxu0
  %v105 = vadd.f32 0.0, %v104
  %v106 = vpop.f32.mrb[0].mxu0
  %107 = vdwg.mxu0
  %v108 = vadd.f32 %v22, %v102
  %v109 = vadd.f32 %v23, %v105
  %vm110 = vcmask 261120
  %111 = vst.msk [vmem:[#allocation2] sm:$0xff] %vm110, %v108
  %112 = vst.msk [vmem:[#allocation2 + $0x8] sm:$0xff] %vm110, %v109
  // Predicated region
  $region18: #{_lambda_.24} parent=0 // pred_check
    %p113 = pneg %p15
  $region19: #{_lambda_.24} parent=0 // pred_check_branch
    %115 = sbr.rel (%p113) target = $region21
  $region20: #{_lambda_.24} parent=0 // pred_region
    %v116 = vld [vmem:[#allocation2] sm:$0xff]
    %v117 = vld [vmem:[#allocation2 + $0x8] sm:$0xff]
    %v118 = vld [vmem:[%s2] sm:$0xf]
    %v119 = vld [vmem:[%s2 + $0x4] sm:$0xf]
    %v120 = vunpack.c.l.bf16 %v118
    %v121 = vunpack.c.l.bf16 %v119
    %v122 = vadd.f32 %v116, %v120
    %v123 = vadd.f32 %v117, %v121
    %v124 = vpack.c.bf16 %v123, %v122
    %v126 = vunpack.c.l.b16 %v124
    %v127 = vunpack.c.h.b16 %v124
    %v128 = vpack.c.b16 %v126, %v126
    %v129 = vpack.c.b16 %v127, %v127
    %vm132 = vcmask 257024
    %133 = vst.msk [vmem:[%s3] sm:$0xf] %vm132, %v128
    %134 = vst.msk [vmem:[%s3 + $0x4] sm:$0xf] %vm132, %v129
  $region21: #{_lambda_.24} parent=0 // pred_fallthru
    _
  // Predicated region
  $region22: #{_lambda_.24} parent=0 // pred_check
    _
  $region23: #{_lambda_.24} parent=0 // pred_check_branch
    %136 = sbr.rel (0) target = $region25
  $region24: #{_lambda_.24} parent=0 // pred_region
    _
  $region25: #{_lambda_.24} parent=0 // pred_fallthru
    _
  // Predicated region
  $region26: #{_lambda_.24} parent=0 // pred_check
    _
  $region27: #{_lambda_.24} parent=0 // pred_check_branch
    %138 = sbr.rel (0) target = $region29
  $region28: #{_lambda_.24} parent=0 // pred_region
    _
  $region29: #{_lambda_.24} parent=0 // pred_fallthru
    _

// kernel: squeeze.1
$region0: #{squeeze.1}
  %s0 = inlined_call_operand.vmem [shape: s32[1,2,8], index: 0, kind: input, shape index: {}]
  %s1 = inlined_call_operand.vmem [shape: s32[16,1], index: 1, kind: output, shape index: {}]
  $region1: #{squeeze.1} parent=0
    #allocation0 [shape = 'u8[4096]{0}', space=vmem, size = 0x1000, scoped, tag = 'scoped mem for input reshape']
    %s3 = sshllo.u32 0, 2
    %v4 = vld [vmem:[%s0] sm:%s3]
    %5 = vst [vmem:[#allocation0] sm:%s3] %v4
    %v6 = vld [vmem:[#allocation0] sm:$0x3]
    %vm7 = vcmask 7168
    %8 = vst.msk [vmem:[%s1] ss:$8 sm:$0x3] %vm7, %v6
    %v9 = vld [vmem:[#allocation0] sm:$0x3]
    %10 = vrot.lane.b32.xlu0 %v9, 127
    %v11 = vpop.permute.xlu0 %10
    %vm12 = vcmask 7168
    %s13 = scalar_lea.vmem %s1, 1
    %14 = vst.msk [vmem:[%s13] ss:$8 sm:$0x3] %vm12, %v11
    %v15 = vld [vmem:[#allocation0] sm:$0x3]
    %16 = vrot.lane.b32.xlu0 %v15, 126
    %v17 = vpop.permute.xlu0 %16
    %vm18 = vcmask 7168
    %s19 = scalar_lea.vmem %s1, 2
    %20 = vst.msk [vmem:[%s19] ss:$8 sm:$0x3] %vm18, %v17
    %v21 = vld [vmem:[#allocation0] sm:$0x3]
    %22 = vrot.lane.b32.xlu0 %v21, 125
    %v23 = vpop.permute.xlu0 %22
    %vm24 = vcmask 7168
    %s25 = scalar_lea.vmem %s1, 3
    %26 = vst.msk [vmem:[%s25] ss:$8 sm:$0x3] %vm24, %v23
    %v27 = vld [vmem:[#allocation0] sm:$0x3]
    %28 = vrot.lane.b32.xlu0 %v27, 124
    %v29 = vpop.permute.xlu0 %28
    %vm30 = vcmask 7168
    %s31 = scalar_lea.vmem %s1, 4
    %32 = vst.msk [vmem:[%s31] ss:$8 sm:$0x3] %vm30, %v29
    %v33 = vld [vmem:[#allocation0] sm:$0x3]
    %34 = vrot.lane.b32.xlu0 %v33, 123
    %v35 = vpop.permute.xlu0 %34
    %vm36 = vcmask 7168
    %s37 = scalar_lea.vmem %s1, 5
    %38 = vst.msk [vmem:[%s37] ss:$8 sm:$0x3] %vm36, %v35
    %v39 = vld [vmem:[#allocation0] sm:$0x3]
    %40 = vrot.lane.b32.xlu0 %v39, 122
    %v41 = vpop.permute.xlu0 %40
    %vm42 = vcmask 7168
    %s43 = scalar_lea.vmem %s1, 6
    %44 = vst.msk [vmem:[%s43] ss:$8 sm:$0x3] %vm42, %v41
    %v45 = vld [vmem:[#allocation0] sm:$0x3]
    %46 = vrot.lane.b32.xlu0 %v45, 121
    %v47 = vpop.permute.xlu0 %46
    %vm48 = vcmask 7168
    %s49 = scalar_lea.vmem %s1, 7
    %50 = vst.msk [vmem:[%s49] ss:$8 sm:$0x3] %vm48, %v47

// kernel: _lambda_.31
$region0: #{_lambda_.31}
  #allocation0 [shape = 'u32[]', space=smem, size = 0x4, offset = 0x4, fixed_abs, tag = 'smem constant byte address 0x4 - core index']
  #allocation1 [shape = 'u32[144,128]{1,0:T(1,128)}', space=vmem, size = 0x12000, scoped, tag = 'internal scratch']
  %s0 = inlined_call_operand.vmem [shape: bf16[16,32], index: 0, kind: input, shape index: {}]
  %s1 = inlined_call_operand.vmem [shape: bf16[16,32], index: 1, kind: input, shape index: {}]
  %s2 = inlined_call_operand.vmem [shape: f32[1,32], index: 2, kind: input, shape index: {}]
  %s3 = inlined_call_operand.vmem [shape: f32[1,32], index: 3, kind: input, shape index: {}]
  %s4 = inlined_call_operand.vmem [shape: bf16[64,32], index: 4, kind: input, shape index: {}]
  %s5 = inlined_call_operand.vmem [shape: f32[1,32], index: 5, kind: input, shape index: {}]
  %s6 = inlined_call_operand.vmem [shape: bf16[16,32], index: 6, kind: output, shape index: {}]
  %s7 = sld [smem:[#allocation0]]
  $region34: #{_lambda_.31} parent=0
    _
  %s9 = ssub.s32 1, %s7
  %s10 = scalar_select 0, %s9, %s7
  // Predicated region
  $region2: #{_lambda_.31} parent=0 // pred_check
    _
  $region3: #{_lambda_.31} parent=0 // pred_check_branch
    %12 = sbr.rel (0) target = $region5
  $region4: #{_lambda_.31} parent=0 // pred_region
    _
  $region5: #{_lambda_.31} parent=0 // pred_fallthru
    _
  // Predicated region
  $region6: #{_lambda_.31} parent=0 // pred_check
    _
  $region7: #{_lambda_.31} parent=0 // pred_check_branch
    %14 = sbr.rel (0) target = $region9
  $region8: #{_lambda_.31} parent=0 // pred_region
    _
  $region9: #{_lambda_.31} parent=0 // pred_fallthru
    _
  // Predicated region
  $region10: #{_lambda_.31} parent=0 // pred_check
    _
  $region11: #{_lambda_.31} parent=0 // pred_check_branch
    %16 = sbr.rel (0) target = $region13
  $region12: #{_lambda_.31} parent=0 // pred_region
    _
  $region13: #{_lambda_.31} parent=0 // pred_fallthru
    _
  // Predicated region
  $region14: #{_lambda_.31} parent=0 // pred_check
    _
  $region15: #{_lambda_.31} parent=0 // pred_check_branch
    %18 = sbr.rel (0) target = $region17
  $region16: #{_lambda_.31} parent=0 // pred_region
    _
  $region17: #{_lambda_.31} parent=0 // pred_fallthru
    _
  // Predicated region
  $region18: #{_lambda_.31} parent=0 // pred_check
    _
  $region19: #{_lambda_.31} parent=0 // pred_check_branch
    %20 = sbr.rel (0) target = $region21
  $region20: #{_lambda_.31} parent=0 // pred_region
    _
  $region21: #{_lambda_.31} parent=0 // pred_fallthru
    _
  // Predicated region
  $region22: #{_lambda_.31} parent=0 // pred_check
    _
  $region23: #{_lambda_.31} parent=0 // pred_check_branch
    %22 = sbr.rel (0) target = $region25
  $region24: #{_lambda_.31} parent=0 // pred_region
    _
  $region25: #{_lambda_.31} parent=0 // pred_fallthru
    _
  %v24 = vld [vmem:[%s0] sm:$0xf]
  %v25 = vld [vmem:[%s0 + $0x4] sm:$0xf]
  %v26 = vunpack.c.l.bf16 %v24
  %v27 = vunpack.c.l.bf16 %v25
  %v28 = vld [vmem:[%s2] sm:$0x1]
  %v29 = vmul.f32 %v26, %v26
  %v30 = vmul.f32 %v27, %v27
  %vm31 = vcmask 261120
  %v32 = vsel %vm31, %v29, 0.0
  %33 = vadd.xlane.f32.xlu0 %v32
  %v34 = vpop.xlane.xlu0 %33
  %v35 = vsel %vm31, %v30, 0.0
  %36 = vadd.xlane.f32.xlu0 %v35
  %v37 = vpop.xlane.xlu0 %36
  %v38 = vrcp.pop 32.0
  %v39 = vmul.f32 %v34, %v38
  %v40 = vmul.f32 %v37, %v38
  %v41 = vadd.f32 %v39, 1e-06
  %v42 = vadd.f32 %v40, 1e-06
  %v43 = vrsqrt.pop %v41
  %v44 = vrsqrt.pop %v42
  %v45 = vmul.f32 %v26, %v43
  %v46 = vmul.f32 %v27, %v44
  %v48 = vlaneseq
  %v49 = vshrl.u32 %v48, 7
  %v50 = vsub.s32 0, %v49
  %v51 = vrot.slane %v28, %v50
  %v53 = vmul.f32 %v45, %v51
  %v54 = vmul.f32 %v46, %v51
  %v55 = vpack.c.bf16 %v54, %v53
  %v56 = vld [vmem:[%s1] sm:$0xf]
  %v57 = vld [vmem:[%s1 + $0x4] sm:$0xf]
  %v58 = vunpack.c.l.bf16 %v56
  %v59 = vunpack.c.l.bf16 %v57
  %v60 = vld [vmem:[%s3] sm:$0x1]
  %v61 = vmul.f32 %v58, %v58
  %v62 = vmul.f32 %v59, %v59
  %v63 = vsel %vm31, %v61, 0.0
  %64 = vadd.xlane.f32.xlu0 %v63
  %v65 = vpop.xlane.xlu0 %64
  %v66 = vsel %vm31, %v62, 0.0
  %67 = vadd.xlane.f32.xlu0 %v66
  %v68 = vpop.xlane.xlu0 %67
  %v69 = vmul.f32 %v65, %v38
  %v70 = vmul.f32 %v68, %v38
  %v71 = vadd.f32 %v69, 1e-06
  %v72 = vadd.f32 %v70, 1e-06
  %v73 = vrsqrt.pop %v71
  %v74 = vrsqrt.pop %v72
  %v75 = vmul.f32 %v58, %v73
  %v76 = vmul.f32 %v59, %v74
  %v78 = vlaneseq
  %v79 = vshrl.u32 %v78, 7
  %v80 = vsub.s32 0, %v79
  %v81 = vrot.slane %v60, %v80
  %v83 = vmul.f32 %v75, %v81
  %v84 = vmul.f32 %v76, %v81
  %v85 = vpack.c.bf16 %v84, %v83
  %v86 = vld [vmem:[%s4] sm:$0xf]
  %v87 = vld [vmem:[%s4 + $0x4] sm:$0xf]
  %v88 = vld [vmem:[%s4 + $0x8] sm:$0xf]
  %v89 = vld [vmem:[%s4 + $0xc] sm:$0xf]
  %v90 = vld [vmem:[%s4 + $0x10] sm:$0xf]
  %v91 = vld [vmem:[%s4 + $0x14] sm:$0xf]
  %v92 = vld [vmem:[%s4 + $0x18] sm:$0xf]
  %v93 = vld [vmem:[%s4 + $0x1c] sm:$0xf]
  %v98 = vunpack.c.l.b16 %v90
  %v99 = vunpack.c.l.b16 %v91
  %v100 = vunpack.c.l.b16 %v92
  %v101 = vunpack.c.l.b16 %v93
  %v102 = vpack.c.b16 %v99, %v98
  %v103 = vpack.c.b16 %v101, %v100
  %v107 = vsel %vm31, %v85, 0
  %109 = vmatprep.subr.bf16.mxu0 0
  %110 = vmatpush1.bf16.msra.mxu0 %v102
  %111 = vmatprep.subr.bf16.mxu0 0
  %112 = vmatpush1.bf16.msra.mxu0 %v103
  %113 = vmatprep.subr.bf16.mxu0 0
  %114 = vmatpush1.bf16.msra.mxu0 0
  %115 = vmatprep.subr.bf16.mxu0 0
  %116 = vmatpush1.bf16.msra.mxu0 0
  %117 = vmatprep.subr.bf16.mxu0 0
  %118 = vmatpush1.bf16.msra.mxu0 0
  %119 = vmatprep.subr.bf16.mxu0 0
  %120 = vmatpush1.bf16.msra.mxu0 0
  %121 = vmatprep.subr.bf16.mxu0 0
  %122 = vmatpush1.bf16.msra.mxu0 0
  %123 = vmatprep.subr.bf16.mxu0 0
  %124 = vmatpush1.bf16.msra.mxu0 0
  %125 = vmatprep.subr.bf16.mxu0 0
  %126 = vmatpush1.bf16.msra.mxu0 0
  %127 = vmatprep.subr.bf16.mxu0 0
  %128 = vmatpush1.bf16.msra.mxu0 0
  %129 = vmatprep.subr.bf16.mxu0 0
  %130 = vmatpush1.bf16.msra.mxu0 0
  %131 = vmatprep.subr.bf16.mxu0 0
  %132 = vmatpush1.bf16.msra.mxu0 0
  %133 = vmatprep.subr.bf16.mxu0 0
  %134 = vmatpush1.bf16.msra.mxu0 0
  %135 = vmatprep.subr.bf16.mxu0 0
  %136 = vmatpush1.bf16.msra.mxu0 0
  %137 = vmatprep.subr.bf16.mxu0 0
  %138 = vmatpush1.bf16.msra.mxu0 0
  %139 = vmatprep.subr.bf16.mxu0 0
  %140 = vmatpush1.bf16.msra.mxu0 0
  %141 = vmatprep.mubr.bf16.mxu0 0
  %142 = vmatmul.mubr.bf16.gmra.mrb[0].mxu0 %v107
  %v143 = vpop.f32.mrb[0].mxu0
  %v144 = vadd.f32 0.0, %v143
  %v145 = vpop.f32.mrb[0].mxu0
  %v146 = vpop.f32.mrb[0].mxu0
  %v147 = vadd.f32 0.0, %v146
  %v148 = vpop.f32.mrb[0].mxu0
  %149 = vdwg.mxu0
  %v154 = vunpack.c.l.b16 %v86
  %v155 = vunpack.c.l.b16 %v87
  %v156 = vunpack.c.l.b16 %v88
  %v157 = vunpack.c.l.b16 %v89
  %v158 = vpack.c.b16 %v155, %v154
  %v159 = vpack.c.b16 %v157, %v156
  %v163 = vsel %vm31, %v55, 0
  %165 = vmatprep.subr.bf16.mxu0 0
  %166 = vmatpush1.bf16.msra.mxu0 %v158
  %167 = vmatprep.subr.bf16.mxu0 0
  %168 = vmatpush1.bf16.msra.mxu0 %v159
  %169 = vmatprep.subr.bf16.mxu0 0
  %170 = vmatpush1.bf16.msra.mxu0 0
  %171 = vmatprep.subr.bf16.mxu0 0
  %172 = vmatpush1.bf16.msra.mxu0 0
  %173 = vmatprep.subr.bf16.mxu0 0
  %174 = vmatpush1.bf16.msra.mxu0 0
  %175 = vmatprep.subr.bf16.mxu0 0
  %176 = vmatpush1.bf16.msra.mxu0 0
  %177 = vmatprep.subr.bf16.mxu0 0
  %178 = vmatpush1.bf16.msra.mxu0 0
  %179 = vmatprep.subr.bf16.mxu0 0
  %180 = vmatpush1.bf16.msra.mxu0 0
  %181 = vmatprep.subr.bf16.mxu0 0
  %182 = vmatpush1.bf16.msra.mxu0 0
  %183 = vmatprep.subr.bf16.mxu0 0
  %184 = vmatpush1.bf16.msra.mxu0 0
  %185 = vmatprep.subr.bf16.mxu0 0
  %186 = vmatpush1.bf16.msra.mxu0 0
  %187 = vmatprep.subr.bf16.mxu0 0
  %188 = vmatpush1.bf16.msra.mxu0 0
  %189 = vmatprep.subr.bf16.mxu0 0
  %190 = vmatpush1.bf16.msra.mxu0 0
  %191 = vmatprep.subr.bf16.mxu0 0
  %192 = vmatpush1.bf16.msra.mxu0 0
  %193 = vmatprep.subr.bf16.mxu0 0
  %194 = vmatpush1.bf16.msra.mxu0 0
  %195 = vmatprep.subr.bf16.mxu0 0
  %196 = vmatpush1.bf16.msra.mxu0 0
  %197 = vmatprep.mubr.bf16.mxu0 0
  %198 = vmatmul.mubr.bf16.gmra.mrb[0].mxu0 %v163
  %v199 = vpop.f32.mrb[0].mxu0
  %v200 = vadd.f32 %v144, %v199
  %v201 = vpop.f32.mrb[0].mxu0
  %v202 = vpop.f32.mrb[0].mxu0
  %v203 = vadd.f32 %v147, %v202
  %v204 = vpop.f32.mrb[0].mxu0
  %205 = vdwg.mxu0
  %v206 = vld [vmem:[%s5] sm:$0x1]
  %v208 = vlaneseq
  %v209 = vshrl.u32 %v208, 7
  %v210 = vsub.s32 0, %v209
  %v211 = vrot.slane %v206, %v210
  %v213 = vadd.f32 %v200, %v211
  %v214 = vadd.f32 %v203, %v211
  %v215 = vpack.c.bf16 %v214, %v213
  %v217 = vunpack.c.l.b16 %v215
  %v218 = vunpack.c.h.b16 %v215
  %v219 = vpack.c.b16 %v217, %v217
  %v220 = vpack.c.b16 %v218, %v218
  %vm223 = vcmask 257024
  %224 = vst.msk [vmem:[%s6] sm:$0xf] %vm223, %v219
  %225 = vst.msk [vmem:[%s6 + $0x4] sm:$0xf] %vm223, %v220
  // Predicated region
  $region26: #{_lambda_.31} parent=0 // pred_check
    _
  $region27: #{_lambda_.31} parent=0 // pred_check_branch
    %227 = sbr.rel (0) target = $region29
  $region28: #{_lambda_.31} parent=0 // pred_region
    _
  $region29: #{_lambda_.31} parent=0 // pred_fallthru
    _
  // Predicated region
  $region30: #{_lambda_.31} parent=0 // pred_check
    _
  $region31: #{_lambda_.31} parent=0 // pred_check_branch
    %229 = sbr.rel (0) target = $region33
  $region32: #{_lambda_.31} parent=0 // pred_region
    _
  $region33: #{_lambda_.31} parent=0 // pred_fallthru
    _

// kernel: _lambda_.39
$region0: #{_lambda_.39}
  #allocation0 [shape = 'u32[]', space=smem, size = 0x4, offset = 0x4, fixed_abs, tag = 'smem constant byte address 0x4 - core index']
  #allocation1 [shape = 'u32[144,128]{1,0:T(1,128)}', space=vmem, size = 0x12000, scoped, tag = 'internal scratch']
  #allocation2 [shape = 'f32[16,1]{1,0:T(8,128)}', space=vmem, size = 0x2000, scoped, tag = 'scratch operand']
  #allocation3 [shape = 'f32[16,1]{1,0:T(8,128)}', space=vmem, size = 0x2000, scoped, tag = 'scratch operand']
  #allocation4 [shape = 'f32[16,1]{1,0:T(8,128)}', space=vmem, size = 0x2000, scoped, tag = 'scratch operand']
  %s0 = inlined_call_operand.vmem [shape: bf16[16,32], index: 0, kind: input, shape index: {}]
  %s1 = inlined_call_operand.vmem [shape: bf16[32,128], index: 1, kind: input, shape index: {}]
  %s2 = inlined_call_operand.vmem [shape: s32[16,1], index: 2, kind: input, shape index: {}]
  %s3 = inlined_call_operand.vmem [shape: f32[16,1], index: 3, kind: output, shape index: {}]
  %s4 = sld [smem:[#allocation0]]
  $region30: #{_lambda_.39} parent=0
    _
  %s6 = ssub.s32 1, %s4
  %s7 = scalar_select 0, %s6, %s4
  // Predicated region
  $region2: #{_lambda_.39} parent=0 // pred_check
    _
  $region3: #{_lambda_.39} parent=0 // pred_check_branch
    %9 = sbr.rel (0) target = $region5
  $region4: #{_lambda_.39} parent=0 // pred_region
    _
  $region5: #{_lambda_.39} parent=0 // pred_fallthru
    _
  // Predicated region
  $region6: #{_lambda_.39} parent=0 // pred_check
    _
  $region7: #{_lambda_.39} parent=0 // pred_check_branch
    %11 = sbr.rel (0) target = $region9
  $region8: #{_lambda_.39} parent=0 // pred_region
    _
  $region9: #{_lambda_.39} parent=0 // pred_fallthru
    _
  // Predicated region
  $region10: #{_lambda_.39} parent=0 // pred_check
    _
  $region11: #{_lambda_.39} parent=0 // pred_check_branch
    %13 = sbr.rel (0) target = $region13
  $region12: #{_lambda_.39} parent=0 // pred_region
    _
  $region13: #{_lambda_.39} parent=0 // pred_fallthru
    _
  %p15 = scmp.eq.s32.totalorder 0, 0
  // Predicated region
  $region14: #{_lambda_.39} parent=0 // pred_check
    %p16 = pneg %p15
  $region15: #{_lambda_.39} parent=0 // pred_check_branch
    %18 = sbr.rel (%p16) target = $region17
  $region16: #{_lambda_.39} parent=0 // pred_region
    %vm19 = vcmask 7168
    %20 = vst.msk [vmem:[#allocation2] sm:$0xff] %vm19, -1e+30
    %21 = vst.msk [vmem:[#allocation2 + $0x8] sm:$0xff] %vm19, -1e+30
    %22 = vst.msk [vmem:[#allocation3] sm:$0xff] %vm19, 0.0
    %23 = vst.msk [vmem:[#allocation3 + $0x8] sm:$0xff] %vm19, 0.0
    %24 = vst.msk [vmem:[#allocation4] sm:$0xff] %vm19, 0.0
    %25 = vst.msk [vmem:[#allocation4 + $0x8] sm:$0xff] %vm19, 0.0
  $region17: #{_lambda_.39} parent=0 // pred_fallthru
    _
  %v26 = vld [vmem:[%s0] sm:$0xf]
  %v27 = vld [vmem:[%s0 + $0x4] sm:$0xf]
  %v28 = vld [vmem:[%s1] sm:$0xf]
  %v29 = vld [vmem:[%s1 + $0x4] sm:$0xf]
  %v30 = vld [vmem:[%s1 + $0x8] sm:$0xf]
  %v31 = vld [vmem:[%s1 + $0xc] sm:$0xf]
  %v34 = vunpack.c.l.b16 %v26
  %v35 = vunpack.c.l.b16 %v27
  %v36 = vpack.c.b16 %v35, %v34
  %v41 = vunpack.c.l.b16 %v28
  %v42 = vunpack.c.l.b16 %v29
  %v43 = vunpack.c.l.b16 %v30
  %v44 = vunpack.c.l.b16 %v31
  %v45 = vpack.c.b16 %v42, %v41
  %v46 = vpack.c.b16 %v44, %v43
  %vm49 = vcmask 261120
  %v51 = vsel %vm49, %v36, 0
  %53 = vmatprep.subr.bf16.mxu0 0
  %54 = vmatpush1.bf16.msra.mxu0 %v45
  %55 = vmatprep.subr.bf16.mxu0 0
  %56 = vmatpush1.bf16.msra.mxu0 %v46
  %57 = vmatprep.subr.bf16.mxu0 0
  %58 = vmatpush1.bf16.msra.mxu0 0
  %59 = vmatprep.subr.bf16.mxu0 0
  %60 = vmatpush1.bf16.msra.mxu0 0
  %61 = vmatprep.subr.bf16.mxu0 0
  %62 = vmatpush1.bf16.msra.mxu0 0
  %63 = vmatprep.subr.bf16.mxu0 0
  %64 = vmatpush1.bf16.msra.mxu0 0
  %65 = vmatprep.subr.bf16.mxu0 0
  %66 = vmatpush1.bf16.msra.mxu0 0
  %67 = vmatprep.subr.bf16.mxu0 0
  %68 = vmatpush1.bf16.msra.mxu0 0
  %69 = vmatprep.subr.bf16.mxu0 0
  %70 = vmatpush1.bf16.msra.mxu0 0
  %71 = vmatprep.subr.bf16.mxu0 0
  %72 = vmatpush1.bf16.msra.mxu0 0
  %73 = vmatprep.subr.bf16.mxu0 0
  %74 = vmatpush1.bf16.msra.mxu0 0
  %75 = vmatprep.subr.bf16.mxu0 0
  %76 = vmatpush1.bf16.msra.mxu0 0
  %77 = vmatprep.subr.bf16.mxu0 0
  %78 = vmatpush1.bf16.msra.mxu0 0
  %79 = vmatprep.subr.bf16.mxu0 0
  %80 = vmatpush1.bf16.msra.mxu0 0
  %81 = vmatprep.subr.bf16.mxu0 0
  %82 = vmatpush1.bf16.msra.mxu0 0
  %83 = vmatprep.subr.bf16.mxu0 0
  %84 = vmatpush1.bf16.msra.mxu0 0
  %85 = vmatprep.mubr.bf16.mxu0 0
  %86 = vmatmul.mubr.bf16.gmra.mrb[0].mxu0 %v51
  %v87 = vpop.f32.mrb[0].mxu0
  %v88 = vadd.f32 0.0, %v87
  %v89 = vpop.f32.mrb[0].mxu0
  %v90 = vpop.f32.mrb[0].mxu0
  %v91 = vadd.f32 0.0, %v90
  %v92 = vpop.f32.mrb[0].mxu0
  %93 = vdwg.mxu0
  %v94 = vld [vmem:[%s2] sm:$0xff]
  %v95 = vld [vmem:[%s2 + $0x8] sm:$0xff]
  %s96 = smul.u32 0, 128
  %v97 = vlaneseq
  %v98 = vand.u32 %v97, 127
  %v99 = vstv %s96
  %v100 = vadd.s32 %v99, %v98
  %v101 = vld [vmem:[#allocation4] sm:$0xff]
  %v102 = vld [vmem:[#allocation4 + $0x8] sm:$0xff]
  %103 = vset.pattern.permute.xlu0 0
  %104 = vperm.xlu0 %103, %v94
  %v105 = vpop.permute.xlu0 %104
  %106 = vset.pattern.permute.xlu0 0
  %107 = vperm.xlu0 %106, %v95
  %v108 = vpop.permute.xlu0 %107
  %vm109 = vcmp.eq.s32.totalorder %v100, %v105
  %vm110 = vcmp.eq.s32.totalorder %v100, %v108
  %v111 = vsel %vm109, %v88, 0.0
  %v112 = vsel %vm110, %v91, 0.0
  %113 = vadd.xlane.f32.xlu0 %v111
  %v114 = vpop.xlane.xlu0 %113
  %115 = vadd.xlane.f32.xlu0 %v112
  %v116 = vpop.xlane.xlu0 %115
  %v117 = vadd.f32 %v101, %v114
  %v118 = vadd.f32 %v102, %v116
  %vm119 = vcmask 7168
  %120 = vst.msk [vmem:[#allocation4] sm:$0xff] %vm119, %v117
  %121 = vst.msk [vmem:[#allocation4 + $0x8] sm:$0xff] %vm119, %v118
  %v122 = vld [vmem:[#allocation2] sm:$0xff]
  %v123 = vld [vmem:[#allocation2 + $0x8] sm:$0xff]
  %124 = vmax.xlane.f32.xlu0 %v88
  %v125 = vpop.xlane.xlu0 %124
  %126 = vmax.xlane.f32.xlu0 %v91
  %v127 = vpop.xlane.xlu0 %126
  %v128 = vmax.f32 %v122, %v125
  %v129 = vmax.f32 %v123, %v127
  %v130 = vld [vmem:[#allocation3] sm:$0xff]
  %v131 = vld [vmem:[#allocation3 + $0x8] sm:$0xff]
  %v132 = vsub.f32 %v122, %v128
  %v133 = vsub.f32 %v123, %v129
  %v134 = vmul.f32 %v132, 1.442695
  %v135 = vpow.pop %v134
  %v136 = vmul.f32 %v133, 1.442695
  %v137 = vpow.pop %v136
  %v138 = vmul.f32 %v130, %v135
  %v139 = vmul.f32 %v131, %v137
  %141 = vset.pattern.permute.xlu0 0
  %142 = vperm.xlu0 %141, %v128
  %v143 = vpop.permute.xlu0 %142
  %146 = vset.pattern.permute.xlu0 0
  %147 = vperm.xlu0 %146, %v129
  %v148 = vpop.permute.xlu0 %147
  %v150 = vsub.f32 %v88, %v143
  %v151 = vsub.f32 %v91, %v148
  %v152 = vmul.f32 %v150, 1.442695
  %v153 = vpow.pop %v152
  %v154 = vmul.f32 %v151, 1.442695
  %v155 = vpow.pop %v154
  %156 = vadd.xlane.f32.xlu0 %v153
  %v157 = vpop.xlane.xlu0 %156
  %158 = vadd.xlane.f32.xlu0 %v155
  %v159 = vpop.xlane.xlu0 %158
  %v160 = vadd.f32 %v138, %v157
  %v161 = vadd.f32 %v139, %v159
  %162 = vst.msk [vmem:[#allocation3] sm:$0xff] %vm119, %v160
  %163 = vst.msk [vmem:[#allocation3 + $0x8] sm:$0xff] %vm119, %v161
  %164 = vst.msk [vmem:[#allocation2] sm:$0xff] %vm119, %v128
  %165 = vst.msk [vmem:[#allocation2 + $0x8] sm:$0xff] %vm119, %v129
  // Predicated region
  $region18: #{_lambda_.39} parent=0 // pred_check
    %p166 = pneg %p15
  $region19: #{_lambda_.39} parent=0 // pred_check_branch
    %168 = sbr.rel (%p166) target = $region21
  $region20: #{_lambda_.39} parent=0 // pred_region
    %v169 = vld [vmem:[#allocation2] sm:$0xff]
    %v170 = vld [vmem:[#allocation2 + $0x8] sm:$0xff]
    %v171 = vld [vmem:[#allocation3] sm:$0xff]
    %v172 = vld [vmem:[#allocation3 + $0x8] sm:$0xff]
    %v173 = vlog2.pop %v171
    %v174 = vmul.f32 %v173, 0.6931472
    %v175 = vlog2.pop %v172
    %v176 = vmul.f32 %v175, 0.6931472
    %v177 = vadd.f32 %v169, %v174
    %v178 = vadd.f32 %v170, %v176
    %v179 = vld [vmem:[#allocation4] sm:$0xff]
    %v180 = vld [vmem:[#allocation4 + $0x8] sm:$0xff]
    %v181 = vsub.f32 %v177, %v179
    %v182 = vsub.f32 %v178, %v180
    %183 = vst.msk [vmem:[%s3] sm:$0xff] %vm119, %v181
    %184 = vst.msk [vmem:[%s3 + $0x8] sm:$0xff] %vm119, %v182
  $region21: #{_lambda_.39} parent=0 // pred_fallthru
    _
  // Predicated region
  $region22: #{_lambda_.39} parent=0 // pred_check
    _
  $region23: #{_lambda_.39} parent=0 // pred_check_branch
    %186 = sbr.rel (0) target = $region25
  $region24: #{_lambda_.39} parent=0 // pred_region
    _
  $region25: #{_lambda_.39} parent=0 // pred_fallthru
    _
  // Predicated region
  $region26: #{_lambda_.39} parent=0 // pred_check
    _
  $region27: #{_lambda_.39} parent=0 // pred_check_branch
    %188 = sbr.rel (0) target = $region29
  $region28: #{_lambda_.39} parent=0 // pred_region
    _
  $region29: #{_lambda_.39} parent=0 // pred_fallthru
    _

// kernel: _lambda_.30
$region0: #{_lambda_.30}
  #allocation0 [shape = 'u32[]', space=smem, size = 0x4, offset = 0x4, fixed_abs, tag = 'smem constant byte address 0x4 - core index']
  #allocation1 [shape = 'u32[144,128]{1,0:T(1,128)}', space=vmem, size = 0x12000, scoped, tag = 'internal scratch']
  #allocation2 [shape = 'f32[16,1]{1,0:T(8,128)}', space=vmem, size = 0x2000, scoped, tag = 'scratch operand']
  #allocation3 [shape = 'f32[16,1]{1,0:T(8,128)}', space=vmem, size = 0x2000, scoped, tag = 'scratch operand']
  #allocation4 [shape = 'f32[16,1]{1,0:T(8,128)}', space=vmem, size = 0x2000, scoped, tag = 'scratch operand']
  %s0 = inlined_call_operand.vmem [shape: bf16[16,32], index: 0, kind: input, shape index: {}]
  %s1 = inlined_call_operand.vmem [shape: f32[1,32], index: 1, kind: input, shape index: {}]
  %s2 = inlined_call_operand.vmem [shape: bf16[32,128], index: 2, kind: input, shape index: {}]
  %s3 = inlined_call_operand.vmem [shape: s32[16,1], index: 3, kind: input, shape index: {}]
  %s4 = inlined_call_operand.vmem [shape: f32[16,1], index: 4, kind: output, shape index: {}]
  %s5 = sld [smem:[#allocation0]]
  $region34: #{_lambda_.30} parent=0
    _
  %s7 = ssub.s32 1, %s5
  %s8 = scalar_select 0, %s7, %s5
  // Predicated region
  $region2: #{_lambda_.30} parent=0 // pred_check
    _
  $region3: #{_lambda_.30} parent=0 // pred_check_branch
    %10 = sbr.rel (0) target = $region5
  $region4: #{_lambda_.30} parent=0 // pred_region
    _
  $region5: #{_lambda_.30} parent=0 // pred_fallthru
    _
  // Predicated region
  $region6: #{_lambda_.30} parent=0 // pred_check
    _
  $region7: #{_lambda_.30} parent=0 // pred_check_branch
    %12 = sbr.rel (0) target = $region9
  $region8: #{_lambda_.30} parent=0 // pred_region
    _
  $region9: #{_lambda_.30} parent=0 // pred_fallthru
    _
  // Predicated region
  $region10: #{_lambda_.30} parent=0 // pred_check
    _
  $region11: #{_lambda_.30} parent=0 // pred_check_branch
    %14 = sbr.rel (0) target = $region13
  $region12: #{_lambda_.30} parent=0 // pred_region
    _
  $region13: #{_lambda_.30} parent=0 // pred_fallthru
    _
  // Predicated region
  $region14: #{_lambda_.30} parent=0 // pred_check
    _
  $region15: #{_lambda_.30} parent=0 // pred_check_branch
    %16 = sbr.rel (0) target = $region17
  $region16: #{_lambda_.30} parent=0 // pred_region
    _
  $region17: #{_lambda_.30} parent=0 // pred_fallthru
    _
  %p18 = scmp.eq.s32.totalorder 0, 0
  // Predicated region
  $region18: #{_lambda_.30} parent=0 // pred_check
    %p19 = pneg %p18
  $region19: #{_lambda_.30} parent=0 // pred_check_branch
    %21 = sbr.rel (%p19) target = $region21
  $region20: #{_lambda_.30} parent=0 // pred_region
    %vm22 = vcmask 7168
    %23 = vst.msk [vmem:[#allocation2] sm:$0xff] %vm22, -1e+30
    %24 = vst.msk [vmem:[#allocation2 + $0x8] sm:$0xff] %vm22, -1e+30
    %25 = vst.msk [vmem:[#allocation3] sm:$0xff] %vm22, 0.0
    %26 = vst.msk [vmem:[#allocation3 + $0x8] sm:$0xff] %vm22, 0.0
    %27 = vst.msk [vmem:[#allocation4] sm:$0xff] %vm22, 0.0
    %28 = vst.msk [vmem:[#allocation4 + $0x8] sm:$0xff] %vm22, 0.0
  $region21: #{_lambda_.30} parent=0 // pred_fallthru
    _
  %v29 = vld [vmem:[%s0] sm:$0xf]
  %v30 = vld [vmem:[%s0 + $0x4] sm:$0xf]
  %v31 = vunpack.c.l.bf16 %v29
  %v32 = vunpack.c.l.bf16 %v30
  %v33 = vld [vmem:[%s1] sm:$0x1]
  %v34 = vmul.f32 %v31, %v31
  %v35 = vmul.f32 %v32, %v32
  %vm36 = vcmask 261120
  %v37 = vsel %vm36, %v34, 0.0
  %38 = vadd.xlane.f32.xlu0 %v37
  %v39 = vpop.xlane.xlu0 %38
  %v40 = vsel %vm36, %v35, 0.0
  %41 = vadd.xlane.f32.xlu0 %v40
  %v42 = vpop.xlane.xlu0 %41
  %v43 = vrcp.pop 32.0
  %v44 = vmul.f32 %v39, %v43
  %v45 = vmul.f32 %v42, %v43
  %v46 = vadd.f32 %v44, 1e-06
  %v47 = vadd.f32 %v45, 1e-06
  %v48 = vrsqrt.pop %v46
  %v49 = vrsqrt.pop %v47
  %v50 = vmul.f32 %v31, %v48
  %v51 = vmul.f32 %v32, %v49
  %v53 = vlaneseq
  %v54 = vshrl.u32 %v53, 7
  %v55 = vsub.s32 0, %v54
  %v56 = vrot.slane %v33, %v55
  %v58 = vmul.f32 %v50, %v56
  %v59 = vmul.f32 %v51, %v56
  %v60 = vpack.c.bf16 %v59, %v58
  %v61 = vld [vmem:[%s2] sm:$0xf]
  %v62 = vld [vmem:[%s2 + $0x4] sm:$0xf]
  %v63 = vld [vmem:[%s2 + $0x8] sm:$0xf]
  %v64 = vld [vmem:[%s2 + $0xc] sm:$0xf]
  %v69 = vunpack.c.l.b16 %v61
  %v70 = vunpack.c.l.b16 %v62
  %v71 = vunpack.c.l.b16 %v63
  %v72 = vunpack.c.l.b16 %v64
  %v73 = vpack.c.b16 %v70, %v69
  %v74 = vpack.c.b16 %v72, %v71
  %v78 = vsel %vm36, %v60, 0
  %80 = vmatprep.subr.bf16.mxu0 0
  %81 = vmatpush1.bf16.msra.mxu0 %v73
  %82 = vmatprep.subr.bf16.mxu0 0
  %83 = vmatpush1.bf16.msra.mxu0 %v74
  %84 = vmatprep.subr.bf16.mxu0 0
  %85 = vmatpush1.bf16.msra.mxu0 0
  %86 = vmatprep.subr.bf16.mxu0 0
  %87 = vmatpush1.bf16.msra.mxu0 0
  %88 = vmatprep.subr.bf16.mxu0 0
  %89 = vmatpush1.bf16.msra.mxu0 0
  %90 = vmatprep.subr.bf16.mxu0 0
  %91 = vmatpush1.bf16.msra.mxu0 0
  %92 = vmatprep.subr.bf16.mxu0 0
  %93 = vmatpush1.bf16.msra.mxu0 0
  %94 = vmatprep.subr.bf16.mxu0 0
  %95 = vmatpush1.bf16.msra.mxu0 0
  %96 = vmatprep.subr.bf16.mxu0 0
  %97 = vmatpush1.bf16.msra.mxu0 0
  %98 = vmatprep.subr.bf16.mxu0 0
  %99 = vmatpush1.bf16.msra.mxu0 0
  %100 = vmatprep.subr.bf16.mxu0 0
  %101 = vmatpush1.bf16.msra.mxu0 0
  %102 = vmatprep.subr.bf16.mxu0 0
  %103 = vmatpush1.bf16.msra.mxu0 0
  %104 = vmatprep.subr.bf16.mxu0 0
  %105 = vmatpush1.bf16.msra.mxu0 0
  %106 = vmatprep.subr.bf16.mxu0 0
  %107 = vmatpush1.bf16.msra.mxu0 0
  %108 = vmatprep.subr.bf16.mxu0 0
  %109 = vmatpush1.bf16.msra.mxu0 0
  %110 = vmatprep.subr.bf16.mxu0 0
  %111 = vmatpush1.bf16.msra.mxu0 0
  %112 = vmatprep.mubr.bf16.mxu0 0
  %113 = vmatmul.mubr.bf16.gmra.mrb[0].mxu0 %v78
  %v114 = vpop.f32.mrb[0].mxu0
  %v115 = vadd.f32 0.0, %v114
  %v116 = vpop.f32.mrb[0].mxu0
  %v117 = vpop.f32.mrb[0].mxu0
  %v118 = vadd.f32 0.0, %v117
  %v119 = vpop.f32.mrb[0].mxu0
  %120 = vdwg.mxu0
  %v121 = vld [vmem:[%s3] sm:$0xff]
  %v122 = vld [vmem:[%s3 + $0x8] sm:$0xff]
  %s123 = smul.u32 0, 128
  %v124 = vlaneseq
  %v125 = vand.u32 %v124, 127
  %v126 = vstv %s123
  %v127 = vadd.s32 %v126, %v125
  %v128 = vld [vmem:[#allocation4] sm:$0xff]
  %v129 = vld [vmem:[#allocation4 + $0x8] sm:$0xff]
  %130 = vset.pattern.permute.xlu0 0
  %131 = vperm.xlu0 %130, %v121
  %v132 = vpop.permute.xlu0 %131
  %133 = vset.pattern.permute.xlu0 0
  %134 = vperm.xlu0 %133, %v122
  %v135 = vpop.permute.xlu0 %134
  %vm136 = vcmp.eq.s32.totalorder %v127, %v132
  %vm137 = vcmp.eq.s32.totalorder %v127, %v135
  %v138 = vsel %vm136, %v115, 0.0
  %v139 = vsel %vm137, %v118, 0.0
  %140 = vadd.xlane.f32.xlu0 %v138
  %v141 = vpop.xlane.xlu0 %140
  %142 = vadd.xlane.f32.xlu0 %v139
  %v143 = vpop.xlane.xlu0 %142
  %v144 = vadd.f32 %v128, %v141
  %v145 = vadd.f32 %v129, %v143
  %vm146 = vcmask 7168
  %147 = vst.msk [vmem:[#allocation4] sm:$0xff] %vm146, %v144
  %148 = vst.msk [vmem:[#allocation4 + $0x8] sm:$0xff] %vm146, %v145
  %v149 = vld [vmem:[#allocation2] sm:$0xff]
  %v150 = vld [vmem:[#allocation2 + $0x8] sm:$0xff]
  %151 = vmax.xlane.f32.xlu0 %v115
  %v152 = vpop.xlane.xlu0 %151
  %153 = vmax.xlane.f32.xlu0 %v118
  %v154 = vpop.xlane.xlu0 %153
  %v155 = vmax.f32 %v149, %v152
  %v156 = vmax.f32 %v150, %v154
  %v157 = vld [vmem:[#allocation3] sm:$0xff]
  %v158 = vld [vmem:[#allocation3 + $0x8] sm:$0xff]
  %v159 = vsub.f32 %v149, %v155
  %v160 = vsub.f32 %v150, %v156
  %v161 = vmul.f32 %v159, 1.442695
  %v162 = vpow.pop %v161
  %v163 = vmul.f32 %v160, 1.442695
  %v164 = vpow.pop %v163
  %v165 = vmul.f32 %v157, %v162
  %v166 = vmul.f32 %v158, %v164
  %168 = vset.pattern.permute.xlu0 0
  %169 = vperm.xlu0 %168, %v155
  %v170 = vpop.permute.xlu0 %169
  %173 = vset.pattern.permute.xlu0 0
  %174 = vperm.xlu0 %173, %v156
  %v175 = vpop.permute.xlu0 %174
  %v177 = vsub.f32 %v115, %v170
  %v178 = vsub.f32 %v118, %v175
  %v179 = vmul.f32 %v177, 1.442695
  %v180 = vpow.pop %v179
  %v181 = vmul.f32 %v178, 1.442695
  %v182 = vpow.pop %v181
  %183 = vadd.xlane.f32.xlu0 %v180
  %v184 = vpop.xlane.xlu0 %183
  %185 = vadd.xlane.f32.xlu0 %v182
  %v186 = vpop.xlane.xlu0 %185
  %v187 = vadd.f32 %v165, %v184
  %v188 = vadd.f32 %v166, %v186
  %189 = vst.msk [vmem:[#allocation3] sm:$0xff] %vm146, %v187
  %190 = vst.msk [vmem:[#allocation3 + $0x8] sm:$0xff] %vm146, %v188
  %191 = vst.msk [vmem:[#allocation2] sm:$0xff] %vm146, %v155
  %192 = vst.msk [vmem:[#allocation2 + $0x8] sm:$0xff] %vm146, %v156
  // Predicated region
  $region22: #{_lambda_.30} parent=0 // pred_check
    %p193 = pneg %p18
  $region23: #{_lambda_.30} parent=0 // pred_check_branch
    %195 = sbr.rel (%p193) target = $region25
  $region24: #{_lambda_.30} parent=0 // pred_region
    %v196 = vld [vmem:[#allocation2] sm:$0xff]
    %v197 = vld [vmem:[#allocation2 + $0x8] sm:$0xff]
    %v198 = vld [vmem:[#allocation3] sm:$0xff]
    %v199 = vld [vmem:[#allocation3 + $0x8] sm:$0xff]
    %v200 = vlog2.pop %v198
    %v201 = vmul.f32 %v200, 0.6931472
    %v202 = vlog2.pop %v199
    %v203 = vmul.f32 %v202, 0.6931472
    %v204 = vadd.f32 %v196, %v201
    %v205 = vadd.f32 %v197, %v203
    %v206 = vld [vmem:[#allocation4] sm:$0xff]
    %v207 = vld [vmem:[#allocation4 + $0x8] sm:$0xff]
    %v208 = vsub.f32 %v204, %v206
    %v209 = vsub.f32 %v205, %v207
    %210 = vst.msk [vmem:[%s4] sm:$0xff] %vm146, %v208
    %211 = vst.msk [vmem:[%s4 + $0x8] sm:$0xff] %vm146, %v209
  $region25: #{_lambda_.30} parent=0 // pred_fallthru
    _
  // Predicated region
  $region26: #{_lambda_.30} parent=0 // pred_check
    _
  $region27: #{_lambda_.30} parent=0 // pred_check_branch
    %213 = sbr.rel (0) target = $region29
  $region28: #{_lambda_.30} parent=0 // pred_region
    _
  $region29: #{_lambda_.30} parent=0 // pred_fallthru
    _
  // Predicated region
  $region30: #{_lambda_.30} parent=0 // pred_check
    _
  $region31: #{_lambda_.30} parent=0 // pred_check_branch
    %215 = sbr.rel (0) target = $region33
  $region32: #{_lambda_.30} parent=0 // pred_region
    _
  $region33: #{_lambda_.30} parent=0 // pred_fallthru
    _

</llo_original>
